<compile_context>
chip_gen: v7x
topology: tpu7x:2x2x1
jax: 0.10.0
libtpu: 0.0.40
codegen_flags: <defaults>
</compile_context>

<pallas_src>
import jax
import jax.numpy as jnp
from jax.experimental import pallas as pl
from jax.experimental.pallas import tpu as pltpu
import numpy as np

LANES = 128


# ----------------------------------------------------------------------------
# Parameter init (mirrors torch orthogonal_ init, gain=sqrt(2) / 1, zero bias)
# ----------------------------------------------------------------------------
def _orthogonal(key, rows, cols, gain):
    big, small = max(rows, cols), min(rows, cols)
    a = np.asarray(jax.random.normal(key, (big, small), jnp.float32))
    q, r = np.linalg.qr(a)
    q = q * np.sign(np.diag(r))[None, :]
    if rows < cols:
        q = q.T
    return jnp.asarray(gain * q[:rows, :cols], dtype=jnp.float32)


def init_params(key, num_inputs, hidden_size):
    ks = jax.random.split(key, 5)
    g = float(np.sqrt(2.0))  # nn.init.calculate_gain('relu')
    w1 = _orthogonal(ks[0], 32, num_inputs * 8 * 8, g).reshape(32, num_inputs, 8, 8)
    w2 = _orthogonal(ks[1], 64, 32 * 4 * 4, g).reshape(64, 32, 4, 4)
    w3 = _orthogonal(ks[2], 32, 64 * 3 * 3, g).reshape(32, 64, 3, 3)
    wf = _orthogonal(ks[3], hidden_size, 32 * 7 * 7, g)       # (H, 1568)
    wc = _orthogonal(ks[4], 1, hidden_size, 1.0)              # (1, H), gain 1
    return dict(
        w1=w1, b1=jnp.zeros((32,), jnp.float32),
        w2=w2, b2=jnp.zeros((64,), jnp.float32),
        w3=w3, b3=jnp.zeros((32,), jnp.float32),
        wf=wf, bf=jnp.zeros((hidden_size,), jnp.float32),
        wc=wc, bc=jnp.zeros((1,), jnp.float32),
    )


def _pad_cols(a, n=LANES):
    pad = (-a.shape[-1]) % n
    if pad:
        a = jnp.pad(a, [(0, 0)] * (a.ndim - 1) + [(0, pad)])
    return a


def prepare_kernel_params(params):
    """Reshape / transpose / lane-pad torch-layout params for the kernels."""
    w1m = params["w1"].reshape(32, -1).T / 255.0   # fold `inputs / 255.0` into conv1
    w2m = params["w2"].reshape(64, -1).T
    w3m = params["w3"].reshape(32, -1).T
    return dict(
        w1=_pad_cols(w1m), b1=_pad_cols(params["b1"][None, :]),
        w2=_pad_cols(w2m), b2=_pad_cols(params["b2"][None, :]),
        w3=_pad_cols(w3m), b3=_pad_cols(params["b3"][None, :]),
        wf=params["wf"].T, bf=params["bf"][None, :],                   # (1568,H),(1,H)
        wc=_pad_cols(params["wc"].T), bc=_pad_cols(params["bc"][None, :]),  # (H,128),(1,128)
    )


# ----------------------------------------------------------------------------
# Pallas kernels
# ----------------------------------------------------------------------------
def _mm_bias_relu_kernel(x_ref, w_ref, b_ref, o_ref):
    acc = jnp.dot(x_ref[...], w_ref[...], preferred_element_type=jnp.float32)
    o_ref[...] = jnp.maximum(acc + b_ref[...], 0.0).astype(o_ref.dtype)


def _fc_critic_kernel(x_ref, wf_ref, bf_ref, wc_ref, bc_ref, hid_ref, crit_ref):
    h = jnp.dot(x_ref[...], wf_ref[...], preferred_element_type=jnp.float32) + bf_ref[...]
    h = jnp.maximum(h, 0.0)
    hid_ref[...] = h.astype(hid_ref.dtype)
    crit = jnp.dot(h, wc_ref[...], preferred_element_type=jnp.float32) + bc_ref[...]
    crit_ref[...] = crit.astype(crit_ref.dtype)   # lane-dense (B,128) slab; col 0 is real


def _conv_as_matmul(patches, w_pad, b_pad, row_tile=None):
    """relu(patches @ w_pad + b_pad) with a row-tiled, weight-resident grid."""
    R, K = patches.shape
    Np = w_pad.shape[1]
    if row_tile is None or R % row_tile != 0 or row_tile % 8 != 0:
        row_tile = R                               # single full-extent block
    grid = (R // row_tile,)
    cost = pl.CostEstimate(
        flops=2 * R * K * Np, transcendentals=0,
        bytes_accessed=4 * (R * K + K * Np + Np + R * Np))
    return pl.pallas_call(
        _mm_bias_relu_kernel,
        grid=grid,
        in_specs=[
            pl.BlockSpec((row_tile, K), lambda i: (i, 0)),
            pl.BlockSpec((K, Np), lambda i: (0, 0)),     # weights resident in VMEM
            pl.BlockSpec((1, Np), lambda i: (0, 0)),
        ],
        out_specs=pl.BlockSpec((row_tile, Np), lambda i: (i, 0)),
        out_shape=jax.ShapeDtypeStruct((R, Np), jnp.float32),
        compiler_params=pltpu.CompilerParams(dimension_semantics=("parallel",)),
        cost_estimate=cost,
    )(patches, w_pad, b_pad)


# ----------------------------------------------------------------------------
# im2col (pure data movement, done in the wrapper; heavy FLOPs stay in Pallas)
# ----------------------------------------------------------------------------
def _im2col(x, kh, kw, stride):
    B, C, H, W = x.shape
    OH = (H - kh) // stride + 1
    OW = (W - kw) // stride + 1
    cols = []
    for i in range(kh):
        for j in range(kw):
            cols.append(jax.lax.slice(
                x, (0, 0, i, j),
                (B, C, i + (OH - 1) * stride + 1, j + (OW - 1) * stride + 1),
                (1, 1, stride, stride)))
    p = jnp.stack(cols, axis=2)                      # (B, C, kh*kw, OH, OW)
    p = p.transpose(0, 3, 4, 1, 2).reshape(B * OH * OW, C * kh * kw)
    return p, OH, OW


# ----------------------------------------------------------------------------
# CNNBase.forward (non-recurrent)
# ----------------------------------------------------------------------------
def cnn_base_forward(inputs, rnn_hxs, masks, kp):
    del masks  # only used by the (unimplemented) recurrent GRU branch
    B = inputs.shape[0]

    # conv1: 8x8 stride 4 (input /255 folded into w1), ReLU
    p1, oh1, ow1 = _im2col(inputs, 8, 8, 4)
    y1 = _conv_as_matmul(p1, kp["w1"], kp["b1"], row_tile=400)[:, :32]
    x1 = y1.reshape(B, oh1, ow1, 32).transpose(0, 3, 1, 2)

    # conv2: 4x4 stride 2, ReLU
    p2, oh2, ow2 = _im2col(x1, 4, 4, 2)
    y2 = _conv_as_matmul(p2, kp["w2"], kp["b2"])[:, :64]
    x2 = y2.reshape(B, oh2, ow2, 64).transpose(0, 3, 1, 2)

    # conv3: 3x3 stride 1, ReLU
    p3, oh3, ow3 = _im2col(x2, 3, 3, 1)
    y3 = _conv_as_matmul(p3, kp["w3"], kp["b3"])[:, :32]
    x3 = y3.reshape(B, oh3, ow3, 32).transpose(0, 3, 1, 2)

    # Flatten in PyTorch (C, H, W) order, then fused Linear+ReLU and critic head
    flat = x3.reshape(B, -1)
    K = flat.shape[1]
    H = kp["wf"].shape[1]
    cost = pl.CostEstimate(
        flops=2 * B * K * H + 2 * B * H * LANES, transcendentals=0,
        bytes_accessed=4 * (B * K + K * H + H + H * LANES + LANES + B * H + B * LANES))
    hidden, critic_slab = pl.pallas_call(
        _fc_critic_kernel,
        grid=(1,),
        in_specs=[
            pl.BlockSpec((B, K), lambda i: (0, 0)),
            pl.BlockSpec((K, H), lambda i: (0, 0)),
            pl.BlockSpec((1, H), lambda i: (0, 0)),
            pl.BlockSpec((H, LANES), lambda i: (0, 0)),
            pl.BlockSpec((1, LANES), lambda i: (0, 0)),
        ],
        out_specs=(
            pl.BlockSpec((B, H), lambda i: (0, 0)),
            pl.BlockSpec((B, LANES), lambda i: (0, 0)),
        ),
        out_shape=(
            jax.ShapeDtypeStruct((B, H), jnp.float32),
            jax.ShapeDtypeStruct((B, LANES), jnp.float32),
        ),
        compiler_params=pltpu.CompilerParams(dimension_semantics=("arbitrary",)),
        cost_estimate=cost,
    )(flat, kp["wf"], kp["bf"], kp["wc"], kp["bc"])

    critic = critic_slab[:, :1]
    return critic, hidden, rnn_hxs


# ----------------------------------------------------------------------------
# Pure-JAX reference of the PyTorch module (for the in-script correctness check)
# ----------------------------------------------------------------------------
def ref_forward(inputs, rnn_hxs, params):
    dn = ("NCHW", "OIHW", "NCHW")
    x = inputs / 255.0
    x = jax.lax.conv_general_dilated(x, params["w1"], (4, 4), "VALID", dimension_numbers=dn)
    x = jnp.maximum(x + params["b1"][None, :, None, None], 0.0)
    x = jax.lax.conv_general_dilated(x, params["w2"], (2, 2), "VALID", dimension_numbers=dn)
    x = jnp.maximum(x + params["b2"][None, :, None, None], 0.0)
    x = jax.lax.conv_general_dilated(x, params["w3"], (1, 1), "VALID", dimension_numbers=dn)
    x = jnp.maximum(x + params["b3"][None, :, None, None], 0.0)
    flat = x.reshape(x.shape[0], -1)
    hidden = jnp.maximum(flat @ params["wf"].T + params["bf"][None, :], 0.0)
    critic = hidden @ params["wc"].T + params["bc"][None, :]
    return critic, hidden, rnn_hxs


if __name__ == "__main__":
    key = jax.random.PRNGKey(0)
    k_in, k_p = jax.random.split(key)

    B = 2
    num_inputs = 4        # stacked frames / channels
    hidden_size = 256     # smaller than the 512 default; multiple of 128 => lane-dense hidden
    IMG = 84              # required: Flatten feeds Linear(32*7*7, H) => 84x84 spatial input

    params = init_params(k_p, num_inputs, hidden_size)
    kparams = prepare_kernel_params(params)

    inputs = jax.random.uniform(k_in, (B, num_inputs, IMG, IMG), jnp.float32, 0.0, 255.0)
    rnn_hxs = jnp.zeros((B, 1), jnp.float32)   # recurrent_hidden_state_size == 1 (non-recurrent)
    masks = jnp.ones((B, 1), jnp.float32)

    fwd = jax.jit(cnn_base_forward)
    critic, hidden, rnn_out = fwd(inputs, rnn_hxs, masks, kparams)
    jax.block_until_ready((critic, hidden, rnn_out))

    c_ref, h_ref, _ = ref_forward(inputs, rnn_hxs, params)
    assert critic.shape == (B, 1) and hidden.shape == (B, hidden_size)
    assert rnn_out.shape == rnn_hxs.shape
    assert jnp.allclose(hidden, h_ref, rtol=1e-4, atol=1e-3), "hidden mismatch"
    assert jnp.allclose(critic, c_ref, rtol=1e-4, atol=1e-3), "critic mismatch"

    print("KERNEL_OK")
</pallas_src>

<mosaic_0001>
module attributes {stable_mosaic.version = 11 : i64} {
  func.func @_mm_bias_relu_kernel(%arg0: i32, %arg1: memref<400x256xf32, #tpu.memory_space<vmem>>, %arg2: memref<256x128xf32, #tpu.memory_space<vmem>>, %arg3: memref<1x128xf32, #tpu.memory_space<vmem>>, %arg4: memref<400x128xf32, #tpu.memory_space<vmem>>) attributes {dimension_semantics = [#tpu.dimension_semantics<parallel>], iteration_bounds = array<i64: 2>, scalar_prefetch = 0 : i64, scratch_operands = 0 : i64, tpu.core_type = #tpu.core_type<tc>, window_params = [{transform_indices = @transform_0, window_bounds = array<i64: 400, 256>}, {pipeline_mode = #tpu.pipeline_mode<synchronous>, transform_indices = @transform_1, window_bounds = array<i64: 256, 128>}, {pipeline_mode = #tpu.pipeline_mode<synchronous>, transform_indices = @transform_2, window_bounds = array<i64: 1, 128>}, {transform_indices = @transform_3, window_bounds = array<i64: 400, 128>}]} {
    %c0 = arith.constant 0 : index
    %c0_0 = arith.constant 0 : index
    %0 = vector.load %arg1[%c0, %c0_0] : memref<400x256xf32, #tpu.memory_space<vmem>>, vector<400x256xf32>
    %c0_1 = arith.constant 0 : index
    %c0_2 = arith.constant 0 : index
    %1 = vector.load %arg2[%c0_1, %c0_2] : memref<256x128xf32, #tpu.memory_space<vmem>>, vector<256x128xf32>
    %cst = arith.constant dense<0.000000e+00> : vector<400x128xf32>
    %2 = tpu.matmul %0, %1, %cst {dimension_numbers = #tpu.dot_dimension_numbers<[1], [0], [0], [1], [0, 0, 1, 1], [], []>} : vector<400x256xf32>, vector<256x128xf32>, vector<400x128xf32> -> vector<400x128xf32>
    %c0_3 = arith.constant 0 : index
    %c0_4 = arith.constant 0 : index
    %3 = vector.load %arg3[%c0_3, %c0_4] : memref<1x128xf32, #tpu.memory_space<vmem>>, vector<1x128xf32>
    %4 = vector.broadcast %3 : vector<1x128xf32> to vector<400x128xf32>
    %5 = arith.addf %2, %4 : vector<400x128xf32>
    %cst_5 = arith.constant 0.000000e+00 : f32
    %6 = vector.broadcast %cst_5 : f32 to vector<400x128xf32>
    %7 = arith.maximumf %5, %6 : vector<400x128xf32>
    %c0_6 = arith.constant 0 : index
    %c0_7 = arith.constant 0 : index
    %8 = vector.load %arg4[%c0_6, %c0_7] : memref<400x128xf32, #tpu.memory_space<vmem>>, vector<400x128xf32>
    tpu.vector_store %arg4[%c0_6, %c0_7], %7 {strides = array<i32>} : memref<400x128xf32, #tpu.memory_space<vmem>>, vector<400x128xf32>,
    return
  }
  func.func @transform_0(%arg0: i32) -> (i32, i32) {
    %c0_i32 = arith.constant 0 : i32
    %c0_i32_0 = arith.constant 0 : i32
    return %arg0, %c0_i32 : i32, i32
  }
  func.func @transform_1(%arg0: i32) -> (i32, i32) {
    %c0_i32 = arith.constant 0 : i32
    %c0_i32_0 = arith.constant 0 : i32
    %c0_i32_1 = arith.constant 0 : i32
    return %c0_i32, %c0_i32_0 : i32, i32
  }
  func.func @transform_2(%arg0: i32) -> (i32, i32) {
    %c0_i32 = arith.constant 0 : i32
    %c0_i32_0 = arith.constant 0 : i32
    %c0_i32_1 = arith.constant 0 : i32
    return %c0_i32, %c0_i32_0 : i32, i32
  }
  func.func @transform_3(%arg0: i32) -> (i32, i32) {
    %c0_i32 = arith.constant 0 : i32
    %c0_i32_0 = arith.constant 0 : i32
    return %arg0, %c0_i32 : i32, i32
  }
}

module attributes {stable_mosaic.version = 11 : i64} {
  func.func @_mm_bias_relu_kernel(%arg0: i32, %arg1: memref<162x512xf32, #tpu.memory_space<vmem>>, %arg2: memref<512x128xf32, #tpu.memory_space<vmem>>, %arg3: memref<1x128xf32, #tpu.memory_space<vmem>>, %arg4: memref<162x128xf32, #tpu.memory_space<vmem>>) attributes {dimension_semantics = [#tpu.dimension_semantics<parallel>], iteration_bounds = array<i64: 1>, scalar_prefetch = 0 : i64, scratch_operands = 0 : i64, tpu.core_type = #tpu.core_type<tc>, window_params = [{transform_indices = @transform_0, window_bounds = array<i64: 162, 512>}, {pipeline_mode = #tpu.pipeline_mode<synchronous>, transform_indices = @transform_1, window_bounds = array<i64: 512, 128>}, {pipeline_mode = #tpu.pipeline_mode<synchronous>, transform_indices = @transform_2, window_bounds = array<i64: 1, 128>}, {transform_indices = @transform_3, window_bounds = array<i64: 162, 128>}]} {
    %c0 = arith.constant 0 : index
    %c0_0 = arith.constant 0 : index
    %0 = vector.load %arg1[%c0, %c0_0] : memref<162x512xf32, #tpu.memory_space<vmem>>, vector<162x512xf32>
    %c0_1 = arith.constant 0 : index
    %c0_2 = arith.constant 0 : index
    %1 = vector.load %arg2[%c0_1, %c0_2] : memref<512x128xf32, #tpu.memory_space<vmem>>, vector<512x128xf32>
    %cst = arith.constant dense<0.000000e+00> : vector<162x128xf32>
    %2 = tpu.matmul %0, %1, %cst {dimension_numbers = #tpu.dot_dimension_numbers<[1], [0], [0], [1], [0, 0, 1, 1], [], []>} : vector<162x512xf32>, vector<512x128xf32>, vector<162x128xf32> -> vector<162x128xf32>
    %c0_3 = arith.constant 0 : index
    %c0_4 = arith.constant 0 : index
    %3 = vector.load %arg3[%c0_3, %c0_4] : memref<1x128xf32, #tpu.memory_space<vmem>>, vector<1x128xf32>
    %4 = vector.broadcast %3 : vector<1x128xf32> to vector<162x128xf32>
    %5 = arith.addf %2, %4 : vector<162x128xf32>
    %cst_5 = arith.constant 0.000000e+00 : f32
    %6 = vector.broadcast %cst_5 : f32 to vector<162x128xf32>
    %7 = arith.maximumf %5, %6 : vector<162x128xf32>
    %c0_6 = arith.constant 0 : index
    %c0_7 = arith.constant 0 : index
    %8 = vector.load %arg4[%c0_6, %c0_7] : memref<162x128xf32, #tpu.memory_space<vmem>>, vector<162x128xf32>
    tpu.vector_store %arg4[%c0_6, %c0_7], %7 {strides = array<i32>} : memref<162x128xf32, #tpu.memory_space<vmem>>, vector<162x128xf32>,
    return
  }
  func.func @transform_0(%arg0: i32) -> (i32, i32) {
    %c0_i32 = arith.constant 0 : i32
    %c0_i32_0 = arith.constant 0 : i32
    return %arg0, %c0_i32 : i32, i32
  }
  func.func @transform_1(%arg0: i32) -> (i32, i32) {
    %c0_i32 = arith.constant 0 : i32
    %c0_i32_0 = arith.constant 0 : i32
    %c0_i32_1 = arith.constant 0 : i32
    return %c0_i32, %c0_i32_0 : i32, i32
  }
  func.func @transform_2(%arg0: i32) -> (i32, i32) {
    %c0_i32 = arith.constant 0 : i32
    %c0_i32_0 = arith.constant 0 : i32
    %c0_i32_1 = arith.constant 0 : i32
    return %c0_i32, %c0_i32_0 : i32, i32
  }
  func.func @transform_3(%arg0: i32) -> (i32, i32) {
    %c0_i32 = arith.constant 0 : i32
    %c0_i32_0 = arith.constant 0 : i32
    return %arg0, %c0_i32 : i32, i32
  }
}

module attributes {stable_mosaic.version = 11 : i64} {
  func.func @_mm_bias_relu_kernel(%arg0: i32, %arg1: memref<98x576xf32, #tpu.memory_space<vmem>>, %arg2: memref<576x128xf32, #tpu.memory_space<vmem>>, %arg3: memref<1x128xf32, #tpu.memory_space<vmem>>, %arg4: memref<98x128xf32, #tpu.memory_space<vmem>>) attributes {dimension_semantics = [#tpu.dimension_semantics<parallel>], iteration_bounds = array<i64: 1>, scalar_prefetch = 0 : i64, scratch_operands = 0 : i64, tpu.core_type = #tpu.core_type<tc>, window_params = [{transform_indices = @transform_0, window_bounds = array<i64: 98, 576>}, {pipeline_mode = #tpu.pipeline_mode<synchronous>, transform_indices = @transform_1, window_bounds = array<i64: 576, 128>}, {pipeline_mode = #tpu.pipeline_mode<synchronous>, transform_indices = @transform_2, window_bounds = array<i64: 1, 128>}, {transform_indices = @transform_3, window_bounds = array<i64: 98, 128>}]} {
    %c0 = arith.constant 0 : index
    %c0_0 = arith.constant 0 : index
    %0 = vector.load %arg1[%c0, %c0_0] : memref<98x576xf32, #tpu.memory_space<vmem>>, vector<98x576xf32>
    %c0_1 = arith.constant 0 : index
    %c0_2 = arith.constant 0 : index
    %1 = vector.load %arg2[%c0_1, %c0_2] : memref<576x128xf32, #tpu.memory_space<vmem>>, vector<576x128xf32>
    %cst = arith.constant dense<0.000000e+00> : vector<98x128xf32>
    %2 = tpu.matmul %0, %1, %cst {dimension_numbers = #tpu.dot_dimension_numbers<[1], [0], [0], [1], [0, 0, 1, 1], [], []>} : vector<98x576xf32>, vector<576x128xf32>, vector<98x128xf32> -> vector<98x128xf32>
    %c0_3 = arith.constant 0 : index
    %c0_4 = arith.constant 0 : index
    %3 = vector.load %arg3[%c0_3, %c0_4] : memref<1x128xf32, #tpu.memory_space<vmem>>, vector<1x128xf32>
    %4 = vector.broadcast %3 : vector<1x128xf32> to vector<98x128xf32>
    %5 = arith.addf %2, %4 : vector<98x128xf32>
    %cst_5 = arith.constant 0.000000e+00 : f32
    %6 = vector.broadcast %cst_5 : f32 to vector<98x128xf32>
    %7 = arith.maximumf %5, %6 : vector<98x128xf32>
    %c0_6 = arith.constant 0 : index
    %c0_7 = arith.constant 0 : index
    %8 = vector.load %arg4[%c0_6, %c0_7] : memref<98x128xf32, #tpu.memory_space<vmem>>, vector<98x128xf32>
    tpu.vector_store %arg4[%c0_6, %c0_7], %7 {strides = array<i32>} : memref<98x128xf32, #tpu.memory_space<vmem>>, vector<98x128xf32>,
    return
  }
  func.func @transform_0(%arg0: i32) -> (i32, i32) {
    %c0_i32 = arith.constant 0 : i32
    %c0_i32_0 = arith.constant 0 : i32
    return %arg0, %c0_i32 : i32, i32
  }
  func.func @transform_1(%arg0: i32) -> (i32, i32) {
    %c0_i32 = arith.constant 0 : i32
    %c0_i32_0 = arith.constant 0 : i32
    %c0_i32_1 = arith.constant 0 : i32
    return %c0_i32, %c0_i32_0 : i32, i32
  }
  func.func @transform_2(%arg0: i32) -> (i32, i32) {
    %c0_i32 = arith.constant 0 : i32
    %c0_i32_0 = arith.constant 0 : i32
    %c0_i32_1 = arith.constant 0 : i32
    return %c0_i32, %c0_i32_0 : i32, i32
  }
  func.func @transform_3(%arg0: i32) -> (i32, i32) {
    %c0_i32 = arith.constant 0 : i32
    %c0_i32_0 = arith.constant 0 : i32
    return %arg0, %c0_i32 : i32, i32
  }
}

module attributes {stable_mosaic.version = 11 : i64} {
  func.func @_fc_critic_kernel(%arg0: i32, %arg1: memref<2x1568xf32, #tpu.memory_space<vmem>>, %arg2: memref<1568x256xf32, #tpu.memory_space<vmem>>, %arg3: memref<1x256xf32, #tpu.memory_space<vmem>>, %arg4: memref<256x128xf32, #tpu.memory_space<vmem>>, %arg5: memref<1x128xf32, #tpu.memory_space<vmem>>, %arg6: memref<2x256xf32, #tpu.memory_space<vmem>>, %arg7: memref<2x128xf32, #tpu.memory_space<vmem>>) attributes {dimension_semantics = [#tpu.dimension_semantics<arbitrary>], iteration_bounds = array<i64: 1>, scalar_prefetch = 0 : i64, scratch_operands = 0 : i64, tpu.core_type = #tpu.core_type<tc>, window_params = [{pipeline_mode = #tpu.pipeline_mode<synchronous>, transform_indices = @transform_0, window_bounds = array<i64: 2, 1568>}, {pipeline_mode = #tpu.pipeline_mode<synchronous>, transform_indices = @transform_1, window_bounds = array<i64: 1568, 256>}, {pipeline_mode = #tpu.pipeline_mode<synchronous>, transform_indices = @transform_2, window_bounds = array<i64: 1, 256>}, {pipeline_mode = #tpu.pipeline_mode<synchronous>, transform_indices = @transform_3, window_bounds = array<i64: 256, 128>}, {pipeline_mode = #tpu.pipeline_mode<synchronous>, transform_indices = @transform_4, window_bounds = array<i64: 1, 128>}, {pipeline_mode = #tpu.pipeline_mode<synchronous>, transform_indices = @transform_5, window_bounds = array<i64: 2, 256>}, {pipeline_mode = #tpu.pipeline_mode<synchronous>, transform_indices = @transform_6, window_bounds = array<i64: 2, 128>}]} {
    %c0 = arith.constant 0 : index
    %c0_0 = arith.constant 0 : index
    %0 = vector.load %arg1[%c0, %c0_0] : memref<2x1568xf32, #tpu.memory_space<vmem>>, vector<2x1568xf32>
    %c0_1 = arith.constant 0 : index
    %c0_2 = arith.constant 0 : index
    %1 = vector.load %arg2[%c0_1, %c0_2] : memref<1568x256xf32, #tpu.memory_space<vmem>>, vector<1568x256xf32>
    %cst = arith.constant dense<0.000000e+00> : vector<2x256xf32>
    %2 = tpu.matmul %0, %1, %cst {dimension_numbers = #tpu.dot_dimension_numbers<[1], [0], [0], [1], [0, 0, 1, 1], [], []>} : vector<2x1568xf32>, vector<1568x256xf32>, vector<2x256xf32> -> vector<2x256xf32>
    %c0_3 = arith.constant 0 : index
    %c0_4 = arith.constant 0 : index
    %3 = vector.load %arg3[%c0_3, %c0_4] : memref<1x256xf32, #tpu.memory_space<vmem>>, vector<1x256xf32>
    %4 = vector.broadcast %3 : vector<1x256xf32> to vector<2x256xf32>
    %5 = arith.addf %2, %4 : vector<2x256xf32>
    %cst_5 = arith.constant 0.000000e+00 : f32
    %6 = vector.broadcast %cst_5 : f32 to vector<2x256xf32>
    %7 = arith.maximumf %5, %6 : vector<2x256xf32>
    %c0_6 = arith.constant 0 : index
    %c0_7 = arith.constant 0 : index
    %8 = vector.load %arg6[%c0_6, %c0_7] : memref<2x256xf32, #tpu.memory_space<vmem>>, vector<2x256xf32>
    tpu.vector_store %arg6[%c0_6, %c0_7], %7 {strides = array<i32>} : memref<2x256xf32, #tpu.memory_space<vmem>>, vector<2x256xf32>,
    %c0_8 = arith.constant 0 : index
    %c0_9 = arith.constant 0 : index
    %9 = vector.load %arg4[%c0_8, %c0_9] : memref<256x128xf32, #tpu.memory_space<vmem>>, vector<256x128xf32>
    %cst_10 = arith.constant dense<0.000000e+00> : vector<2x128xf32>
    %10 = tpu.matmul %7, %9, %cst_10 {dimension_numbers = #tpu.dot_dimension_numbers<[1], [0], [0], [1], [0, 0, 1, 1], [], []>} : vector<2x256xf32>, vector<256x128xf32>, vector<2x128xf32> -> vector<2x128xf32>
    %c0_11 = arith.constant 0 : index
    %c0_12 = arith.constant 0 : index
    %11 = vector.load %arg5[%c0_11, %c0_12] : memref<1x128xf32, #tpu.memory_space<vmem>>, vector<1x128xf32>
    %12 = vector.broadcast %11 : vector<1x128xf32> to vector<2x128xf32>
    %13 = arith.addf %10, %12 : vector<2x128xf32>
    %c0_13 = arith.constant 0 : index
    %c0_14 = arith.constant 0 : index
    %14 = vector.load %arg7[%c0_13, %c0_14] : memref<2x128xf32, #tpu.memory_space<vmem>>, vector<2x128xf32>
    tpu.vector_store %arg7[%c0_13, %c0_14], %13 {strides = array<i32>} : memref<2x128xf32, #tpu.memory_space<vmem>>, vector<2x128xf32>,
    return
  }
  func.func @transform_0(%arg0: i32) -> (i32, i32) {
    %c0_i32 = arith.constant 0 : i32
    %c0_i32_0 = arith.constant 0 : i32
    %c0_i32_1 = arith.constant 0 : i32
    return %c0_i32, %c0_i32_0 : i32, i32
  }
  func.func @transform_1(%arg0: i32) -> (i32, i32) {
    %c0_i32 = arith.constant 0 : i32
    %c0_i32_0 = arith.constant 0 : i32
    %c0_i32_1 = arith.constant 0 : i32
    return %c0_i32, %c0_i32_0 : i32, i32
  }
  func.func @transform_2(%arg0: i32) -> (i32, i32) {
    %c0_i32 = arith.constant 0 : i32
    %c0_i32_0 = arith.constant 0 : i32
    %c0_i32_1 = arith.constant 0 : i32
    return %c0_i32, %c0_i32_0 : i32, i32
  }
  func.func @transform_3(%arg0: i32) -> (i32, i32) {
    %c0_i32 = arith.constant 0 : i32
    %c0_i32_0 = arith.constant 0 : i32
    %c0_i32_1 = arith.constant 0 : i32
    return %c0_i32, %c0_i32_0 : i32, i32
  }
  func.func @transform_4(%arg0: i32) -> (i32, i32) {
    %c0_i32 = arith.constant 0 : i32
    %c0_i32_0 = arith.constant 0 : i32
    %c0_i32_1 = arith.constant 0 : i32
    return %c0_i32, %c0_i32_0 : i32, i32
  }
  func.func @transform_5(%arg0: i32) -> (i32, i32) {
    %c0_i32 = arith.constant 0 : i32
    %c0_i32_0 = arith.constant 0 : i32
    %c0_i32_1 = arith.constant 0 : i32
    return %c0_i32, %c0_i32_0 : i32, i32
  }
  func.func @transform_6(%arg0: i32) -> (i32, i32) {
    %c0_i32 = arith.constant 0 : i32
    %c0_i32_0 = arith.constant 0 : i32
    %c0_i32_1 = arith.constant 0 : i32
    return %c0_i32, %c0_i32_0 : i32, i32
  }
}

</mosaic_0001>

<llo_original>
// kernel: cnn_base_forward.4
$region0: #{cnn_base_forward.4}
  #allocation0 [shape = 'u32[]', space=smem, size = 0x4, offset = 0x4, fixed_abs, tag = 'smem constant byte address 0x4 - core index']
  #allocation1 [shape = 'u32[144,128]{1,0:T(1,128)}', space=vmem, size = 0x12000, scoped, tag = 'internal scratch']
  %s0 = inlined_call_operand.vmem [shape: f32[800,256], index: 0, kind: input, shape index: {}]
  %s1 = inlined_call_operand.vmem [shape: f32[256,128], index: 1, kind: input, shape index: {}]
  %s2 = inlined_call_operand.vmem [shape: f32[1,128], index: 2, kind: input, shape index: {}]
  %s3 = inlined_call_operand.vmem [shape: f32[800,128], index: 3, kind: output, shape index: {}]
  %s4 = sld [smem:[#allocation0]]
  $region45: #{cnn_base_forward.4} parent=0
    _
  %s6 = ssub.s32 1, %s4
  %s7 = scalar_select 0, %s6, %s4
  loop: start=0, step=1, limit=4
  $region2: #{cnn_base_forward.4} parent=0 // loop_pre_header
    _
  $region3: #{cnn_base_forward.4} parent=0 // loop_header
    %s9 = sphi 0, %s13
    %p10 = scmp.ge.s32.totalorder %s9, 4
    %s19 = sphi 0, %s21
    %s22 = sphi 0, %s19
    %s23 = sphi 0, %s22
    %s39 = sphi 0, %s23
    %s43 = sphi 0, %s43
    %s45 = sphi 0, %s43
    %s46 = sphi 0, %s45
    %s60 = sphi 0, %s46
    %s64 = sphi 0, %s64
    %s66 = sphi 0, %s64
    %s67 = sphi 0, %s66
    %s81 = sphi 0, %s67
    %s87 = sphi 0, %s89
    %s90 = sphi 0, %s87
    %s91 = sphi 0, %s90
    %s107 = sphi 0, %s91
  $region4: #{cnn_base_forward.4} parent=0 // loop_header_branch
    %12 = sbr.rel (%p10) target = $region8
  $region5: #{cnn_base_forward.4} parent=0 // loop_body
    %s14 = ssub.s32 %s9, 1
    %s15 = ssub.s32 %s9, 2
    %s16 = sadd.s32 %s9, 1
    %s17 = ssub.s32 %s9, %s16
    %p18 = scmp.eq.s32.totalorder %s17, 0
    %s20 = sadd.s32 %s19, 1
    %s21 = scalar_select %p18, %s19, %s20
    %p24 = pneg %p18
    %p25 = scmp.eq.s32.totalorder %s9, 1
    %p26 = por %p24, %p25
    %p27 = scmp.ne.s32.totalorder %s19, %s22
    %p28 = scmp.eq.s32.totalorder %s9, 0
    %p29 = por %p27, %p28
    %p30 = scmp.ne.s32.totalorder %s19, %s22
    %p31 = scmp.eq.s32.totalorder %s14, 1
    %p32 = por %p30, %p31
    %p33 = scmp.ne.s32.totalorder %s22, %s23
    %p34 = scmp.eq.s32.totalorder %s14, 0
    %p35 = por %p33, %p34
    %p36 = scmp.ne.s32.totalorder %s22, %s23
    %p37 = scmp.eq.s32.totalorder %s15, 1
    %p38 = por %p36, %p37
    %p40 = scmp.ne.s32.totalorder %s23, %s39
    %p41 = scmp.eq.s32.totalorder %s15, 0
    %p42 = por %p40, %p41
    %s44 = sadd.s32 %s43, 1
    %p47 = scmp.eq.s32.totalorder %s9, 1
    %p48 = scmp.ne.s32.totalorder %s43, %s45
    %p49 = scmp.eq.s32.totalorder %s9, 0
    %p50 = por %p48, %p49
    %p51 = scmp.ne.s32.totalorder %s43, %s45
    %p52 = scmp.eq.s32.totalorder %s14, 1
    %p53 = por %p51, %p52
    %p54 = scmp.ne.s32.totalorder %s45, %s46
    %p55 = scmp.eq.s32.totalorder %s14, 0
    %p56 = por %p54, %p55
    %p57 = scmp.ne.s32.totalorder %s45, %s46
    %p58 = scmp.eq.s32.totalorder %s15, 1
    %p59 = por %p57, %p58
    %p61 = scmp.ne.s32.totalorder %s46, %s60
    %p62 = scmp.eq.s32.totalorder %s15, 0
    %p63 = por %p61, %p62
    %s65 = sadd.s32 %s64, 1
    %p68 = scmp.eq.s32.totalorder %s9, 1
    %p69 = scmp.ne.s32.totalorder %s64, %s66
    %p70 = scmp.eq.s32.totalorder %s9, 0
    %p71 = por %p69, %p70
    %p72 = scmp.ne.s32.totalorder %s64, %s66
    %p73 = scmp.eq.s32.totalorder %s14, 1
    %p74 = por %p72, %p73
    %p75 = scmp.ne.s32.totalorder %s66, %s67
    %p76 = scmp.eq.s32.totalorder %s14, 0
    %p77 = por %p75, %p76
    %p78 = scmp.ne.s32.totalorder %s66, %s67
    %p79 = scmp.eq.s32.totalorder %s15, 1
    %p80 = por %p78, %p79
    %p82 = scmp.ne.s32.totalorder %s67, %s81
    %p83 = scmp.eq.s32.totalorder %s15, 0
    %p84 = por %p82, %p83
    %s85 = ssub.s32 %s9, %s16
    %p86 = scmp.eq.s32.totalorder %s85, 0
    %s88 = sadd.s32 %s87, 1
    %s89 = scalar_select %p86, %s87, %s88
    %p92 = pneg %p86
    %p93 = scmp.eq.s32.totalorder %s9, 1
    %p94 = por %p92, %p93
    %p95 = scmp.ne.s32.totalorder %s87, %s90
    %p96 = scmp.eq.s32.totalorder %s9, 0
    %p97 = por %p95, %p96
    %p98 = scmp.ne.s32.totalorder %s87, %s90
    %p99 = scmp.eq.s32.totalorder %s14, 1
    %p100 = por %p98, %p99
    %p101 = scmp.ne.s32.totalorder %s90, %s91
    %p102 = scmp.eq.s32.totalorder %s14, 0
    %p103 = por %p101, %p102
    %p104 = scmp.ne.s32.totalorder %s90, %s91
    %p105 = scmp.eq.s32.totalorder %s15, 1
    %p106 = por %p104, %p105
    %p108 = scmp.ne.s32.totalorder %s91, %s107
    %p109 = scmp.eq.s32.totalorder %s15, 0
    %p110 = por %p108, %p109
    %p111 = scmp.le.s32.totalorder 1, %s9
    %p112 = scmp.lt.s32.totalorder %s9, 3
    %p113 = pnand %p111, %p112
    %p114 = pneg %p113
    // Predicated region
    $region9: #{cnn_base_forward.4} parent=5 // pred_check
      _
    $region10: #{cnn_base_forward.4} parent=5 // pred_check_branch
      %116 = sbr.rel (%p113) target = $region12
    $region11: #{cnn_base_forward.4} parent=5 // pred_region
      %s117 = ssub.s32 %s9, 1
      // Predicated region
      $region13: #{cnn_base_forward.4} parent=11 // pred_check
        %p118 = pneg %p56
      $region14: #{cnn_base_forward.4} parent=11 // pred_check_branch
        %120 = sbr.rel (%p118) target = $region16
      $region15: #{cnn_base_forward.4} parent=11 // pred_region
        _
      $region16: #{cnn_base_forward.4} parent=11 // pred_fallthru
        _
      // Predicated region
      $region17: #{cnn_base_forward.4} parent=11 // pred_check
        %p121 = pneg %p77
      $region18: #{cnn_base_forward.4} parent=11 // pred_check_branch
        %123 = sbr.rel (%p121) target = $region20
      $region19: #{cnn_base_forward.4} parent=11 // pred_region
        _
      $region20: #{cnn_base_forward.4} parent=11 // pred_fallthru
        _
    $region12: #{cnn_base_forward.4} parent=5 // pred_fallthru
      _
    %p124 = scmp.lt.s32.totalorder %s9, 2
    // Predicated region
    $region21: #{cnn_base_forward.4} parent=5 // pred_check
      %p125 = pneg %p124
    $region22: #{cnn_base_forward.4} parent=5 // pred_check_branch
      %127 = sbr.rel (%p125) target = $region24
    $region23: #{cnn_base_forward.4} parent=5 // pred_region
      // Predicated region
      $region25: #{cnn_base_forward.4} parent=23 // pred_check
        %p128 = pneg %p29
      $region26: #{cnn_base_forward.4} parent=23 // pred_check_branch
        %130 = sbr.rel (%p128) target = $region28
      $region27: #{cnn_base_forward.4} parent=23 // pred_region
        %s131 = smul.u32 50, %s9
        %p132 = scmp.lt.s32.totalorder %s131, 99
        %s133 = scalar_select %p132, %s131, 99
        %s134 = smul.addr %s133, 2
        %s135 = smul.addr %s134, 8
        %s136 = scalar_lea.vmem %s0, %s135
        %s137 = smul.u32 50, %s9
      $region28: #{cnn_base_forward.4} parent=23 // pred_fallthru
        _
    $region24: #{cnn_base_forward.4} parent=5 // pred_fallthru
      _
    %p138 = scmp.le.s32.totalorder 1, %s9
    %p139 = scmp.lt.s32.totalorder %s9, 3
    %p140 = pnand %p138, %p139
    %p141 = pneg %p140
    // Predicated region
    $region29: #{cnn_base_forward.4} parent=5 // pred_check
      _
    $region30: #{cnn_base_forward.4} parent=5 // pred_check_branch
      %143 = sbr.rel (%p140) target = $region32
    $region31: #{cnn_base_forward.4} parent=5 // pred_region
      %s144 = ssub.s32 %s9, 1
      %s145 = smul.u32 50, %s14
      %p146 = scmp.lt.s32.totalorder %s145, 99
      %s147 = scalar_select %p146, %s145, 99
      %s148 = smul.addr %s147, 2
      %s149 = smul.addr %s148, 8
      %s150 = scalar_lea.vmem %s0, %s149
      %p151 = pneg %p35
      %p152 = pneg %p32
      %p153 = pneg %p56
      %p154 = pneg %p53
      %p155 = pneg %p77
      %p156 = pneg %p74
      %p157 = pneg %p103
      %p158 = pneg %p100
      %s159 = smul.u32 50, %s14
      %p160 = scmp.lt.s32.totalorder %s159, 99
      %s161 = scalar_select %p160, %s159, 99
      %s162 = smul.addr %s161, 8
      %s163 = scalar_lea.vmem %s3, %s162
      %s164 = smul.u32 50, %s14
      %p165 = scmp.lt.s32.totalorder %s164, 99
      %s166 = scalar_select %p165, %s164, 99
      %s167 = smul.addr %s166, 2
      %s168 = smul.addr %s167, 8
      %s169 = scalar_lea.vmem %s0, %s168
      %s170 = smul.u32 50, %s14
      %s171 = smul.u32 50, %s14
      %p172 = scmp.lt.s32.totalorder %s171, 99
      %s173 = scalar_select %p172, %s171, 99
      %s174 = smul.addr %s173, 8
      %s175 = scalar_lea.vmem %s3, %s174
      %s176 = smul.u32 50, %s14
      %v177 = vld [vmem:[%s169] sm:$0xff]
      %v178 = vld [vmem:[%s169 + $0x8] sm:$0xff]
      %v179 = vld [vmem:[%s169 + $0x10] sm:$0xff]
      %v180 = vld [vmem:[%s169 + $0x18] sm:$0xff]
      %v181 = vld [vmem:[%s169 + $0x20] sm:$0xff]
      %v182 = vld [vmem:[%s169 + $0x28] sm:$0xff]
      %v183 = vld [vmem:[%s169 + $0x30] sm:$0xff]
      %v184 = vld [vmem:[%s169 + $0x38] sm:$0xff]
      %v185 = vld [vmem:[%s169 + $0x40] sm:$0xff]
      %v186 = vld [vmem:[%s169 + $0x48] sm:$0xff]
      %v187 = vld [vmem:[%s169 + $0x50] sm:$0xff]
      %v188 = vld [vmem:[%s169 + $0x58] sm:$0xff]
      %v189 = vld [vmem:[%s169 + $0x60] sm:$0xff]
      %v190 = vld [vmem:[%s169 + $0x68] sm:$0xff]
      %v191 = vld [vmem:[%s169 + $0x70] sm:$0xff]
      %v192 = vld [vmem:[%s169 + $0x78] sm:$0xff]
      %v193 = vld [vmem:[%s169 + $0x80] sm:$0xff]
      %v194 = vld [vmem:[%s169 + $0x88] sm:$0xff]
      %v195 = vld [vmem:[%s169 + $0x90] sm:$0xff]
      %v196 = vld [vmem:[%s169 + $0x98] sm:$0xff]
      %v197 = vld [vmem:[%s169 + $0xa0] sm:$0xff]
      %v198 = vld [vmem:[%s169 + $0xa8] sm:$0xff]
      %v199 = vld [vmem:[%s169 + $0xb0] sm:$0xff]
      %v200 = vld [vmem:[%s169 + $0xb8] sm:$0xff]
      %v201 = vld [vmem:[%s169 + $0xc0] sm:$0xff]
      %v202 = vld [vmem:[%s169 + $0xc8] sm:$0xff]
      %v203 = vld [vmem:[%s169 + $0xd0] sm:$0xff]
      %v204 = vld [vmem:[%s169 + $0xd8] sm:$0xff]
      %v205 = vld [vmem:[%s169 + $0xe0] sm:$0xff]
      %v206 = vld [vmem:[%s169 + $0xe8] sm:$0xff]
      %v207 = vld [vmem:[%s169 + $0xf0] sm:$0xff]
      %v208 = vld [vmem:[%s169 + $0xf8] sm:$0xff]
      %v209 = vld [vmem:[%s169 + $0x100] sm:$0xff]
      %v210 = vld [vmem:[%s169 + $0x108] sm:$0xff]
      %v211 = vld [vmem:[%s169 + $0x110] sm:$0xff]
      %v212 = vld [vmem:[%s169 + $0x118] sm:$0xff]
      %v213 = vld [vmem:[%s169 + $0x120] sm:$0xff]
      %v214 = vld [vmem:[%s169 + $0x128] sm:$0xff]
      %v215 = vld [vmem:[%s169 + $0x130] sm:$0xff]
      %v216 = vld [vmem:[%s169 + $0x138] sm:$0xff]
      %v217 = vld [vmem:[%s169 + $0x140] sm:$0xff]
      %v218 = vld [vmem:[%s169 + $0x148] sm:$0xff]
      %v219 = vld [vmem:[%s169 + $0x150] sm:$0xff]
      %v220 = vld [vmem:[%s169 + $0x158] sm:$0xff]
      %v221 = vld [vmem:[%s169 + $0x160] sm:$0xff]
      %v222 = vld [vmem:[%s169 + $0x168] sm:$0xff]
      %v223 = vld [vmem:[%s169 + $0x170] sm:$0xff]
      %v224 = vld [vmem:[%s169 + $0x178] sm:$0xff]
      %v225 = vld [vmem:[%s169 + $0x180] sm:$0xff]
      %v226 = vld [vmem:[%s169 + $0x188] sm:$0xff]
      %v227 = vld [vmem:[%s169 + $0x190] sm:$0xff]
      %v228 = vld [vmem:[%s169 + $0x198] sm:$0xff]
      %v229 = vld [vmem:[%s169 + $0x1a0] sm:$0xff]
      %v230 = vld [vmem:[%s169 + $0x1a8] sm:$0xff]
      %v231 = vld [vmem:[%s169 + $0x1b0] sm:$0xff]
      %v232 = vld [vmem:[%s169 + $0x1b8] sm:$0xff]
      %v233 = vld [vmem:[%s169 + $0x1c0] sm:$0xff]
      %v234 = vld [vmem:[%s169 + $0x1c8] sm:$0xff]
      %v235 = vld [vmem:[%s169 + $0x1d0] sm:$0xff]
      %v236 = vld [vmem:[%s169 + $0x1d8] sm:$0xff]
      %v237 = vld [vmem:[%s169 + $0x1e0] sm:$0xff]
      %v238 = vld [vmem:[%s169 + $0x1e8] sm:$0xff]
      %v239 = vld [vmem:[%s169 + $0x1f0] sm:$0xff]
      %v240 = vld [vmem:[%s169 + $0x1f8] sm:$0xff]
      %v241 = vld [vmem:[%s169 + $0x200] sm:$0xff]
      %v242 = vld [vmem:[%s169 + $0x208] sm:$0xff]
      %v243 = vld [vmem:[%s169 + $0x210] sm:$0xff]
      %v244 = vld [vmem:[%s169 + $0x218] sm:$0xff]
      %v245 = vld [vmem:[%s169 + $0x220] sm:$0xff]
      %v246 = vld [vmem:[%s169 + $0x228] sm:$0xff]
      %v247 = vld [vmem:[%s169 + $0x230] sm:$0xff]
      %v248 = vld [vmem:[%s169 + $0x238] sm:$0xff]
      %v249 = vld [vmem:[%s169 + $0x240] sm:$0xff]
      %v250 = vld [vmem:[%s169 + $0x248] sm:$0xff]
      %v251 = vld [vmem:[%s169 + $0x250] sm:$0xff]
      %v252 = vld [vmem:[%s169 + $0x258] sm:$0xff]
      %v253 = vld [vmem:[%s169 + $0x260] sm:$0xff]
      %v254 = vld [vmem:[%s169 + $0x268] sm:$0xff]
      %v255 = vld [vmem:[%s169 + $0x270] sm:$0xff]
      %v256 = vld [vmem:[%s169 + $0x278] sm:$0xff]
      %v257 = vld [vmem:[%s169 + $0x280] sm:$0xff]
      %v258 = vld [vmem:[%s169 + $0x288] sm:$0xff]
      %v259 = vld [vmem:[%s169 + $0x290] sm:$0xff]
      %v260 = vld [vmem:[%s169 + $0x298] sm:$0xff]
      %v261 = vld [vmem:[%s169 + $0x2a0] sm:$0xff]
      %v262 = vld [vmem:[%s169 + $0x2a8] sm:$0xff]
      %v263 = vld [vmem:[%s169 + $0x2b0] sm:$0xff]
      %v264 = vld [vmem:[%s169 + $0x2b8] sm:$0xff]
      %v265 = vld [vmem:[%s169 + $0x2c0] sm:$0xff]
      %v266 = vld [vmem:[%s169 + $0x2c8] sm:$0xff]
      %v267 = vld [vmem:[%s169 + $0x2d0] sm:$0xff]
      %v268 = vld [vmem:[%s169 + $0x2d8] sm:$0xff]
      %v269 = vld [vmem:[%s169 + $0x2e0] sm:$0xff]
      %v270 = vld [vmem:[%s169 + $0x2e8] sm:$0xff]
      %v271 = vld [vmem:[%s169 + $0x2f0] sm:$0xff]
      %v272 = vld [vmem:[%s169 + $0x2f8] sm:$0xff]
      %v273 = vld [vmem:[%s169 + $0x300] sm:$0xff]
      %v274 = vld [vmem:[%s169 + $0x308] sm:$0xff]
      %v275 = vld [vmem:[%s169 + $0x310] sm:$0xff]
      %v276 = vld [vmem:[%s169 + $0x318] sm:$0xff]
      %v277 = vld [vmem:[%s1] sm:$0xff]
      %v278 = vld [vmem:[%s1 + $0x8] sm:$0xff]
      %v279 = vld [vmem:[%s1 + $0x10] sm:$0xff]
      %v280 = vld [vmem:[%s1 + $0x18] sm:$0xff]
      %v281 = vld [vmem:[%s1 + $0x20] sm:$0xff]
      %v282 = vld [vmem:[%s1 + $0x28] sm:$0xff]
      %v283 = vld [vmem:[%s1 + $0x30] sm:$0xff]
      %v284 = vld [vmem:[%s1 + $0x38] sm:$0xff]
      %v285 = vld [vmem:[%s1 + $0x40] sm:$0xff]
      %v286 = vld [vmem:[%s1 + $0x48] sm:$0xff]
      %v287 = vld [vmem:[%s1 + $0x50] sm:$0xff]
      %v288 = vld [vmem:[%s1 + $0x58] sm:$0xff]
      %v289 = vld [vmem:[%s1 + $0x60] sm:$0xff]
      %v290 = vld [vmem:[%s1 + $0x68] sm:$0xff]
      %v291 = vld [vmem:[%s1 + $0x70] sm:$0xff]
      %v292 = vld [vmem:[%s1 + $0x78] sm:$0xff]
      %v293 = vld [vmem:[%s1 + $0x80] sm:$0xff]
      %v294 = vld [vmem:[%s1 + $0x88] sm:$0xff]
      %v295 = vld [vmem:[%s1 + $0x90] sm:$0xff]
      %v296 = vld [vmem:[%s1 + $0x98] sm:$0xff]
      %v297 = vld [vmem:[%s1 + $0xa0] sm:$0xff]
      %v298 = vld [vmem:[%s1 + $0xa8] sm:$0xff]
      %v299 = vld [vmem:[%s1 + $0xb0] sm:$0xff]
      %v300 = vld [vmem:[%s1 + $0xb8] sm:$0xff]
      %v301 = vld [vmem:[%s1 + $0xc0] sm:$0xff]
      %v302 = vld [vmem:[%s1 + $0xc8] sm:$0xff]
      %v303 = vld [vmem:[%s1 + $0xd0] sm:$0xff]
      %v304 = vld [vmem:[%s1 + $0xd8] sm:$0xff]
      %v305 = vld [vmem:[%s1 + $0xe0] sm:$0xff]
      %v306 = vld [vmem:[%s1 + $0xe8] sm:$0xff]
      %v307 = vld [vmem:[%s1 + $0xf0] sm:$0xff]
      %v308 = vld [vmem:[%s1 + $0xf8] sm:$0xff]
      %v309 = vld [vmem:[%s2] sm:$0x1]
      %v311 = vlaneseq
      %v312 = vshrl.u32 %v311, 7
      %v313 = vsub.s32 0, %v312
      %v314 = vrot.slane %v309, %v313
      %316 = vmatprep.subr.mxu0 0.0
      %317 = vmatpush1.msra.mxu0 %v277
      %318 = vmatprep.subr.mxu0 0.0
      %319 = vmatpush1.msra.mxu0 %v278
      %320 = vmatprep.subr.mxu0 0.0
      %321 = vmatpush1.msra.mxu0 %v279
      %322 = vmatprep.subr.mxu0 0.0
      %323 = vmatpush1.msra.mxu0 %v280
      %324 = vmatprep.subr.mxu0 0.0
      %325 = vmatpush1.msra.mxu0 %v281
      %326 = vmatprep.subr.mxu0 0.0
      %327 = vmatpush1.msra.mxu0 %v282
      %328 = vmatprep.subr.mxu0 0.0
      %329 = vmatpush1.msra.mxu0 %v283
      %330 = vmatprep.subr.mxu0 0.0
      %331 = vmatpush1.msra.mxu0 %v284
      %332 = vmatprep.subr.mxu0 0.0
      %333 = vmatpush1.msra.mxu0 %v285
      %334 = vmatprep.subr.mxu0 0.0
      %335 = vmatpush1.msra.mxu0 %v286
      %336 = vmatprep.subr.mxu0 0.0
      %337 = vmatpush1.msra.mxu0 %v287
      %338 = vmatprep.subr.mxu0 0.0
      %339 = vmatpush1.msra.mxu0 %v288
      %340 = vmatprep.subr.mxu0 0.0
      %341 = vmatpush1.msra.mxu0 %v289
      %342 = vmatprep.subr.mxu0 0.0
      %343 = vmatpush1.msra.mxu0 %v290
      %344 = vmatprep.subr.mxu0 0.0
      %345 = vmatpush1.msra.mxu0 %v291
      %346 = vmatprep.subr.mxu0 0.0
      %347 = vmatpush1.msra.mxu0 %v292
      %348 = vmatprep.subr.mxu0 0.0
      %349 = vmatpush1.msra.mxu0 %v293
      %350 = vmatprep.subr.mxu0 0.0
      %351 = vmatpush1.msra.mxu0 %v294
      %352 = vmatprep.subr.mxu0 0.0
      %353 = vmatpush1.msra.mxu0 %v295
      %354 = vmatprep.subr.mxu0 0.0
      %355 = vmatpush1.msra.mxu0 %v296
      %356 = vmatprep.subr.mxu0 0.0
      %357 = vmatpush1.msra.mxu0 %v297
      %358 = vmatprep.subr.mxu0 0.0
      %359 = vmatpush1.msra.mxu0 %v298
      %360 = vmatprep.subr.mxu0 0.0
      %361 = vmatpush1.msra.mxu0 %v299
      %362 = vmatprep.subr.mxu0 0.0
      %363 = vmatpush1.msra.mxu0 %v300
      %364 = vmatprep.subr.mxu0 0.0
      %365 = vmatpush1.msra.mxu0 %v301
      %366 = vmatprep.subr.mxu0 0.0
      %367 = vmatpush1.msra.mxu0 %v302
      %368 = vmatprep.subr.mxu0 0.0
      %369 = vmatpush1.msra.mxu0 %v303
      %370 = vmatprep.subr.mxu0 0.0
      %371 = vmatpush1.msra.mxu0 %v304
      %372 = vmatprep.subr.mxu0 0.0
      %373 = vmatpush1.msra.mxu0 %v305
      %374 = vmatprep.subr.mxu0 0.0
      %375 = vmatpush1.msra.mxu0 %v306
      %376 = vmatprep.subr.mxu0 0.0
      %377 = vmatpush1.msra.mxu0 %v307
      %378 = vmatprep.subr.mxu0 0.0
      %379 = vmatpush1.msra.mxu0 %v308
      %380 = vmatprep.mubr.f32.mxu0 %v178
      %381 = vmatmul.mubr.f32.gmra.mrb[0].mxu0 %v177
      %v382 = vpop.f32.mrb[0].mxu0
      %v383 = vadd.f32 %v314, %v382
      %v384 = vpop.f32.mrb[0].mxu0
      %385 = vmatprep.mubr.f32.mxu0 %v180
      %386 = vmatmul.mubr.f32.gmra.mrb[0].mxu0 %v179
      %v387 = vpop.f32.mrb[0].mxu0
      %v388 = vadd.f32 %v314, %v387
      %v389 = vpop.f32.mrb[0].mxu0
      %390 = vmatprep.mubr.f32.mxu0 %v182
      %391 = vmatmul.mubr.f32.gmra.mrb[0].mxu0 %v181
      %v392 = vpop.f32.mrb[0].mxu0
      %v393 = vadd.f32 %v314, %v392
      %v394 = vpop.f32.mrb[0].mxu0
      %395 = vmatprep.mubr.f32.mxu0 %v184
      %396 = vmatmul.mubr.f32.gmra.mrb[0].mxu0 %v183
      %v397 = vpop.f32.mrb[0].mxu0
      %v398 = vadd.f32 %v314, %v397
      %v399 = vpop.f32.mrb[0].mxu0
      %400 = vmatprep.mubr.f32.mxu0 %v186
      %401 = vmatmul.mubr.f32.gmra.mrb[0].mxu0 %v185
      %v402 = vpop.f32.mrb[0].mxu0
      %v403 = vadd.f32 %v314, %v402
      %v404 = vpop.f32.mrb[0].mxu0
      %405 = vmatprep.mubr.f32.mxu0 %v188
      %406 = vmatmul.mubr.f32.gmra.mrb[0].mxu0 %v187
      %v407 = vpop.f32.mrb[0].mxu0
      %v408 = vadd.f32 %v314, %v407
      %v409 = vpop.f32.mrb[0].mxu0
      %410 = vmatprep.mubr.f32.mxu0 %v190
      %411 = vmatmul.mubr.f32.gmra.mrb[0].mxu0 %v189
      %v412 = vpop.f32.mrb[0].mxu0
      %v413 = vadd.f32 %v314, %v412
      %v414 = vpop.f32.mrb[0].mxu0
      %415 = vmatprep.mubr.f32.mxu0 %v192
      %416 = vmatmul.mubr.f32.gmra.mrb[0].mxu0 %v191
      %v417 = vpop.f32.mrb[0].mxu0
      %v418 = vadd.f32 %v314, %v417
      %v419 = vpop.f32.mrb[0].mxu0
      %420 = vmatprep.mubr.f32.mxu0 %v194
      %421 = vmatmul.mubr.f32.gmra.mrb[0].mxu0 %v193
      %v422 = vpop.f32.mrb[0].mxu0
      %v423 = vadd.f32 %v314, %v422
      %v424 = vpop.f32.mrb[0].mxu0
      %425 = vmatprep.mubr.f32.mxu0 %v196
      %426 = vmatmul.mubr.f32.gmra.mrb[0].mxu0 %v195
      %v427 = vpop.f32.mrb[0].mxu0
      %v428 = vadd.f32 %v314, %v427
      %v429 = vpop.f32.mrb[0].mxu0
      %430 = vmatprep.mubr.f32.mxu0 %v198
      %431 = vmatmul.mubr.f32.gmra.mrb[0].mxu0 %v197
      %v432 = vpop.f32.mrb[0].mxu0
      %v433 = vadd.f32 %v314, %v432
      %v434 = vpop.f32.mrb[0].mxu0
      %435 = vmatprep.mubr.f32.mxu0 %v200
      %436 = vmatmul.mubr.f32.gmra.mrb[0].mxu0 %v199
      %v437 = vpop.f32.mrb[0].mxu0
      %v438 = vadd.f32 %v314, %v437
      %v439 = vpop.f32.mrb[0].mxu0
      %440 = vmatprep.mubr.f32.mxu0 %v202
      %441 = vmatmul.mubr.f32.gmra.mrb[0].mxu0 %v201
      %v442 = vpop.f32.mrb[0].mxu0
      %v443 = vadd.f32 %v314, %v442
      %v444 = vpop.f32.mrb[0].mxu0
      %445 = vmatprep.mubr.f32.mxu0 %v204
      %446 = vmatmul.mubr.f32.gmra.mrb[0].mxu0 %v203
      %v447 = vpop.f32.mrb[0].mxu0
      %v448 = vadd.f32 %v314, %v447
      %v449 = vpop.f32.mrb[0].mxu0
      %450 = vmatprep.mubr.f32.mxu0 %v206
      %451 = vmatmul.mubr.f32.gmra.mrb[0].mxu0 %v205
      %v452 = vpop.f32.mrb[0].mxu0
      %v453 = vadd.f32 %v314, %v452
      %v454 = vpop.f32.mrb[0].mxu0
      %455 = vmatprep.mubr.f32.mxu0 %v208
      %456 = vmatmul.mubr.f32.gmra.mrb[0].mxu0 %v207
      %v457 = vpop.f32.mrb[0].mxu0
      %v458 = vadd.f32 %v314, %v457
      %v459 = vpop.f32.mrb[0].mxu0
      %460 = vmatprep.mubr.f32.mxu0 %v210
      %461 = vmatmul.mubr.f32.gmra.mrb[0].mxu0 %v209
      %v462 = vpop.f32.mrb[0].mxu0
      %v463 = vadd.f32 %v314, %v462
      %v464 = vpop.f32.mrb[0].mxu0
      %465 = vmatprep.mubr.f32.mxu0 %v212
      %466 = vmatmul.mubr.f32.gmra.mrb[0].mxu0 %v211
      %v467 = vpop.f32.mrb[0].mxu0
      %v468 = vadd.f32 %v314, %v467
      %v469 = vpop.f32.mrb[0].mxu0
      %470 = vmatprep.mubr.f32.mxu0 %v214
      %471 = vmatmul.mubr.f32.gmra.mrb[0].mxu0 %v213
      %v472 = vpop.f32.mrb[0].mxu0
      %v473 = vadd.f32 %v314, %v472
      %v474 = vpop.f32.mrb[0].mxu0
      %475 = vmatprep.mubr.f32.mxu0 %v216
      %476 = vmatmul.mubr.f32.gmra.mrb[0].mxu0 %v215
      %v477 = vpop.f32.mrb[0].mxu0
      %v478 = vadd.f32 %v314, %v477
      %v479 = vpop.f32.mrb[0].mxu0
      %480 = vmatprep.mubr.f32.mxu0 %v218
      %481 = vmatmul.mubr.f32.gmra.mrb[0].mxu0 %v217
      %v482 = vpop.f32.mrb[0].mxu0
      %v483 = vadd.f32 %v314, %v482
      %v484 = vpop.f32.mrb[0].mxu0
      %485 = vmatprep.mubr.f32.mxu0 %v220
      %486 = vmatmul.mubr.f32.gmra.mrb[0].mxu0 %v219
      %v487 = vpop.f32.mrb[0].mxu0
      %v488 = vadd.f32 %v314, %v487
      %v489 = vpop.f32.mrb[0].mxu0
      %490 = vmatprep.mubr.f32.mxu0 %v222
      %491 = vmatmul.mubr.f32.gmra.mrb[0].mxu0 %v221
      %v492 = vpop.f32.mrb[0].mxu0
      %v493 = vadd.f32 %v314, %v492
      %v494 = vpop.f32.mrb[0].mxu0
      %495 = vmatprep.mubr.f32.mxu0 %v224
      %496 = vmatmul.mubr.f32.gmra.mrb[0].mxu0 %v223
      %v497 = vpop.f32.mrb[0].mxu0
      %v498 = vadd.f32 %v314, %v497
      %v499 = vpop.f32.mrb[0].mxu0
      %500 = vmatprep.mubr.f32.mxu0 %v226
      %501 = vmatmul.mubr.f32.gmra.mrb[0].mxu0 %v225
      %v502 = vpop.f32.mrb[0].mxu0
      %v503 = vadd.f32 %v314, %v502
      %v504 = vpop.f32.mrb[0].mxu0
      %505 = vmatprep.mubr.f32.mxu0 %v228
      %506 = vmatmul.mubr.f32.gmra.mrb[0].mxu0 %v227
      %v507 = vpop.f32.mrb[0].mxu0
      %v508 = vadd.f32 %v314, %v507
      %v509 = vpop.f32.mrb[0].mxu0
      %510 = vmatprep.mubr.f32.mxu0 %v230
      %511 = vmatmul.mubr.f32.gmra.mrb[0].mxu0 %v229
      %v512 = vpop.f32.mrb[0].mxu0
      %v513 = vadd.f32 %v314, %v512
      %v514 = vpop.f32.mrb[0].mxu0
      %515 = vmatprep.mubr.f32.mxu0 %v232
      %516 = vmatmul.mubr.f32.gmra.mrb[0].mxu0 %v231
      %v517 = vpop.f32.mrb[0].mxu0
      %v518 = vadd.f32 %v314, %v517
      %v519 = vpop.f32.mrb[0].mxu0
      %520 = vmatprep.mubr.f32.mxu0 %v234
      %521 = vmatmul.mubr.f32.gmra.mrb[0].mxu0 %v233
      %v522 = vpop.f32.mrb[0].mxu0
      %v523 = vadd.f32 %v314, %v522
      %v524 = vpop.f32.mrb[0].mxu0
      %525 = vmatprep.mubr.f32.mxu0 %v236
      %526 = vmatmul.mubr.f32.gmra.mrb[0].mxu0 %v235
      %v527 = vpop.f32.mrb[0].mxu0
      %v528 = vadd.f32 %v314, %v527
      %v529 = vpop.f32.mrb[0].mxu0
      %530 = vmatprep.mubr.f32.mxu0 %v238
      %531 = vmatmul.mubr.f32.gmra.mrb[0].mxu0 %v237
      %v532 = vpop.f32.mrb[0].mxu0
      %v533 = vadd.f32 %v314, %v532
      %v534 = vpop.f32.mrb[0].mxu0
      %535 = vmatprep.mubr.f32.mxu0 %v240
      %536 = vmatmul.mubr.f32.gmra.mrb[0].mxu0 %v239
      %v537 = vpop.f32.mrb[0].mxu0
      %v538 = vadd.f32 %v314, %v537
      %v539 = vpop.f32.mrb[0].mxu0
      %540 = vmatprep.mubr.f32.mxu0 %v242
      %541 = vmatmul.mubr.f32.gmra.mrb[0].mxu0 %v241
      %v542 = vpop.f32.mrb[0].mxu0
      %v543 = vadd.f32 %v314, %v542
      %v544 = vpop.f32.mrb[0].mxu0
      %545 = vmatprep.mubr.f32.mxu0 %v244
      %546 = vmatmul.mubr.f32.gmra.mrb[0].mxu0 %v243
      %v547 = vpop.f32.mrb[0].mxu0
      %v548 = vadd.f32 %v314, %v547
      %v549 = vpop.f32.mrb[0].mxu0
      %550 = vmatprep.mubr.f32.mxu0 %v246
      %551 = vmatmul.mubr.f32.gmra.mrb[0].mxu0 %v245
      %v552 = vpop.f32.mrb[0].mxu0
      %v553 = vadd.f32 %v314, %v552
      %v554 = vpop.f32.mrb[0].mxu0
      %555 = vmatprep.mubr.f32.mxu0 %v248
      %556 = vmatmul.mubr.f32.gmra.mrb[0].mxu0 %v247
      %v557 = vpop.f32.mrb[0].mxu0
      %v558 = vadd.f32 %v314, %v557
      %v559 = vpop.f32.mrb[0].mxu0
      %560 = vmatprep.mubr.f32.mxu0 %v250
      %561 = vmatmul.mubr.f32.gmra.mrb[0].mxu0 %v249
      %v562 = vpop.f32.mrb[0].mxu0
      %v563 = vadd.f32 %v314, %v562
      %v564 = vpop.f32.mrb[0].mxu0
      %565 = vmatprep.mubr.f32.mxu0 %v252
      %566 = vmatmul.mubr.f32.gmra.mrb[0].mxu0 %v251
      %v567 = vpop.f32.mrb[0].mxu0
      %v568 = vadd.f32 %v314, %v567
      %v569 = vpop.f32.mrb[0].mxu0
      %570 = vmatprep.mubr.f32.mxu0 %v254
      %571 = vmatmul.mubr.f32.gmra.mrb[0].mxu0 %v253
      %v572 = vpop.f32.mrb[0].mxu0
      %v573 = vadd.f32 %v314, %v572
      %v574 = vpop.f32.mrb[0].mxu0
      %575 = vmatprep.mubr.f32.mxu0 %v256
      %576 = vmatmul.mubr.f32.gmra.mrb[0].mxu0 %v255
      %v577 = vpop.f32.mrb[0].mxu0
      %v578 = vadd.f32 %v314, %v577
      %v579 = vpop.f32.mrb[0].mxu0
      %580 = vmatprep.mubr.f32.mxu0 %v258
      %581 = vmatmul.mubr.f32.gmra.mrb[0].mxu0 %v257
      %v582 = vpop.f32.mrb[0].mxu0
      %v583 = vadd.f32 %v314, %v582
      %v584 = vpop.f32.mrb[0].mxu0
      %585 = vmatprep.mubr.f32.mxu0 %v260
      %586 = vmatmul.mubr.f32.gmra.mrb[0].mxu0 %v259
      %v587 = vpop.f32.mrb[0].mxu0
      %v588 = vadd.f32 %v314, %v587
      %v589 = vpop.f32.mrb[0].mxu0
      %590 = vmatprep.mubr.f32.mxu0 %v262
      %591 = vmatmul.mubr.f32.gmra.mrb[0].mxu0 %v261
      %v592 = vpop.f32.mrb[0].mxu0
      %v593 = vadd.f32 %v314, %v592
      %v594 = vpop.f32.mrb[0].mxu0
      %595 = vmatprep.mubr.f32.mxu0 %v264
      %596 = vmatmul.mubr.f32.gmra.mrb[0].mxu0 %v263
      %v597 = vpop.f32.mrb[0].mxu0
      %v598 = vadd.f32 %v314, %v597
      %v599 = vpop.f32.mrb[0].mxu0
      %600 = vmatprep.mubr.f32.mxu0 %v266
      %601 = vmatmul.mubr.f32.gmra.mrb[0].mxu0 %v265
      %v602 = vpop.f32.mrb[0].mxu0
      %v603 = vadd.f32 %v314, %v602
      %v604 = vpop.f32.mrb[0].mxu0
      %605 = vmatprep.mubr.f32.mxu0 %v268
      %606 = vmatmul.mubr.f32.gmra.mrb[0].mxu0 %v267
      %v607 = vpop.f32.mrb[0].mxu0
      %v608 = vadd.f32 %v314, %v607
      %v609 = vpop.f32.mrb[0].mxu0
      %610 = vmatprep.mubr.f32.mxu0 %v270
      %611 = vmatmul.mubr.f32.gmra.mrb[0].mxu0 %v269
      %v612 = vpop.f32.mrb[0].mxu0
      %v613 = vadd.f32 %v314, %v612
      %v614 = vpop.f32.mrb[0].mxu0
      %615 = vmatprep.mubr.f32.mxu0 %v272
      %616 = vmatmul.mubr.f32.gmra.mrb[0].mxu0 %v271
      %v617 = vpop.f32.mrb[0].mxu0
      %v618 = vadd.f32 %v314, %v617
      %v619 = vpop.f32.mrb[0].mxu0
      %620 = vmatprep.mubr.f32.mxu0 %v274
      %621 = vmatmul.mubr.f32.gmra.mrb[0].mxu0 %v273
      %v622 = vpop.f32.mrb[0].mxu0
      %v623 = vadd.f32 %v314, %v622
      %v624 = vpop.f32.mrb[0].mxu0
      %625 = vmatprep.mubr.f32.mxu0 %v276
      %626 = vmatmul.mubr.f32.gmra.mrb[0].mxu0 %v275
      %v627 = vpop.f32.mrb[0].mxu0
      %v628 = vadd.f32 %v314, %v627
      %v629 = vpop.f32.mrb[0].mxu0
      %630 = vdwg.mxu0
      %v631 = vmax.f32 %v383, 0.0
      %v632 = vmax.f32 %v388, 0.0
      %v633 = vmax.f32 %v393, 0.0
      %v634 = vmax.f32 %v398, 0.0
      %v635 = vmax.f32 %v403, 0.0
      %v636 = vmax.f32 %v408, 0.0
      %v637 = vmax.f32 %v413, 0.0
      %v638 = vmax.f32 %v418, 0.0
      %v639 = vmax.f32 %v423, 0.0
      %v640 = vmax.f32 %v428, 0.0
      %v641 = vmax.f32 %v433, 0.0
      %v642 = vmax.f32 %v438, 0.0
      %v643 = vmax.f32 %v443, 0.0
      %v644 = vmax.f32 %v448, 0.0
      %v645 = vmax.f32 %v453, 0.0
      %v646 = vmax.f32 %v458, 0.0
      %v647 = vmax.f32 %v463, 0.0
      %v648 = vmax.f32 %v468, 0.0
      %v649 = vmax.f32 %v473, 0.0
      %v650 = vmax.f32 %v478, 0.0
      %v651 = vmax.f32 %v483, 0.0
      %v652 = vmax.f32 %v488, 0.0
      %v653 = vmax.f32 %v493, 0.0
      %v654 = vmax.f32 %v498, 0.0
      %v655 = vmax.f32 %v503, 0.0
      %v656 = vmax.f32 %v508, 0.0
      %v657 = vmax.f32 %v513, 0.0
      %v658 = vmax.f32 %v518, 0.0
      %v659 = vmax.f32 %v523, 0.0
      %v660 = vmax.f32 %v528, 0.0
      %v661 = vmax.f32 %v533, 0.0
      %v662 = vmax.f32 %v538, 0.0
      %v663 = vmax.f32 %v543, 0.0
      %v664 = vmax.f32 %v548, 0.0
      %v665 = vmax.f32 %v553, 0.0
      %v666 = vmax.f32 %v558, 0.0
      %v667 = vmax.f32 %v563, 0.0
      %v668 = vmax.f32 %v568, 0.0
      %v669 = vmax.f32 %v573, 0.0
      %v670 = vmax.f32 %v578, 0.0
      %v671 = vmax.f32 %v583, 0.0
      %v672 = vmax.f32 %v588, 0.0
      %v673 = vmax.f32 %v593, 0.0
      %v674 = vmax.f32 %v598, 0.0
      %v675 = vmax.f32 %v603, 0.0
      %v676 = vmax.f32 %v608, 0.0
      %v677 = vmax.f32 %v613, 0.0
      %v678 = vmax.f32 %v618, 0.0
      %v679 = vmax.f32 %v623, 0.0
      %v680 = vmax.f32 %v628, 0.0
      %681 = vst [vmem:[%s175] sm:$0xff] %v631
      %682 = vst [vmem:[%s175 + $0x8] sm:$0xff] %v632
      %683 = vst [vmem:[%s175 + $0x10] sm:$0xff] %v633
      %684 = vst [vmem:[%s175 + $0x18] sm:$0xff] %v634
      %685 = vst [vmem:[%s175 + $0x20] sm:$0xff] %v635
      %686 = vst [vmem:[%s175 + $0x28] sm:$0xff] %v636
      %687 = vst [vmem:[%s175 + $0x30] sm:$0xff] %v637
      %688 = vst [vmem:[%s175 + $0x38] sm:$0xff] %v638
      %689 = vst [vmem:[%s175 + $0x40] sm:$0xff] %v639
      %690 = vst [vmem:[%s175 + $0x48] sm:$0xff] %v640
      %691 = vst [vmem:[%s175 + $0x50] sm:$0xff] %v641
      %692 = vst [vmem:[%s175 + $0x58] sm:$0xff] %v642
      %693 = vst [vmem:[%s175 + $0x60] sm:$0xff] %v643
      %694 = vst [vmem:[%s175 + $0x68] sm:$0xff] %v644
      %695 = vst [vmem:[%s175 + $0x70] sm:$0xff] %v645
      %696 = vst [vmem:[%s175 + $0x78] sm:$0xff] %v646
      %697 = vst [vmem:[%s175 + $0x80] sm:$0xff] %v647
      %698 = vst [vmem:[%s175 + $0x88] sm:$0xff] %v648
      %699 = vst [vmem:[%s175 + $0x90] sm:$0xff] %v649
      %700 = vst [vmem:[%s175 + $0x98] sm:$0xff] %v650
      %701 = vst [vmem:[%s175 + $0xa0] sm:$0xff] %v651
      %702 = vst [vmem:[%s175 + $0xa8] sm:$0xff] %v652
      %703 = vst [vmem:[%s175 + $0xb0] sm:$0xff] %v653
      %704 = vst [vmem:[%s175 + $0xb8] sm:$0xff] %v654
      %705 = vst [vmem:[%s175 + $0xc0] sm:$0xff] %v655
      %706 = vst [vmem:[%s175 + $0xc8] sm:$0xff] %v656
      %707 = vst [vmem:[%s175 + $0xd0] sm:$0xff] %v657
      %708 = vst [vmem:[%s175 + $0xd8] sm:$0xff] %v658
      %709 = vst [vmem:[%s175 + $0xe0] sm:$0xff] %v659
      %710 = vst [vmem:[%s175 + $0xe8] sm:$0xff] %v660
      %711 = vst [vmem:[%s175 + $0xf0] sm:$0xff] %v661
      %712 = vst [vmem:[%s175 + $0xf8] sm:$0xff] %v662
      %713 = vst [vmem:[%s175 + $0x100] sm:$0xff] %v663
      %714 = vst [vmem:[%s175 + $0x108] sm:$0xff] %v664
      %715 = vst [vmem:[%s175 + $0x110] sm:$0xff] %v665
      %716 = vst [vmem:[%s175 + $0x118] sm:$0xff] %v666
      %717 = vst [vmem:[%s175 + $0x120] sm:$0xff] %v667
      %718 = vst [vmem:[%s175 + $0x128] sm:$0xff] %v668
      %719 = vst [vmem:[%s175 + $0x130] sm:$0xff] %v669
      %720 = vst [vmem:[%s175 + $0x138] sm:$0xff] %v670
      %721 = vst [vmem:[%s175 + $0x140] sm:$0xff] %v671
      %722 = vst [vmem:[%s175 + $0x148] sm:$0xff] %v672
      %723 = vst [vmem:[%s175 + $0x150] sm:$0xff] %v673
      %724 = vst [vmem:[%s175 + $0x158] sm:$0xff] %v674
      %725 = vst [vmem:[%s175 + $0x160] sm:$0xff] %v675
      %726 = vst [vmem:[%s175 + $0x168] sm:$0xff] %v676
      %727 = vst [vmem:[%s175 + $0x170] sm:$0xff] %v677
      %728 = vst [vmem:[%s175 + $0x178] sm:$0xff] %v678
      %729 = vst [vmem:[%s175 + $0x180] sm:$0xff] %v679
      %730 = vst [vmem:[%s175 + $0x188] sm:$0xff] %v680
      %s731 = smul.u32 50, %s14
      %p732 = scmp.lt.s32.totalorder %s731, 99
      %s733 = scalar_select %p732, %s731, 99
      %s734 = smul.addr %s733, 8
      %s735 = scalar_lea.vmem %s3, %s734
      // Predicated region
      $region33: #{cnn_base_forward.4} parent=31 // pred_check
        %p736 = pneg %p100
      $region34: #{cnn_base_forward.4} parent=31 // pred_check_branch
        %738 = sbr.rel (%p736) target = $region36
      $region35: #{cnn_base_forward.4} parent=31 // pred_region
        %s739 = smul.u32 50, %s14
      $region36: #{cnn_base_forward.4} parent=31 // pred_fallthru
        _
    $region32: #{cnn_base_forward.4} parent=5 // pred_fallthru
      _
    %p740 = scmp.le.s32.totalorder 2, %s9
    // Predicated region
    $region37: #{cnn_base_forward.4} parent=5 // pred_check
      %p741 = pneg %p740
    $region38: #{cnn_base_forward.4} parent=5 // pred_check_branch
      %743 = sbr.rel (%p741) target = $region40
    $region39: #{cnn_base_forward.4} parent=5 // pred_region
      %s744 = ssub.s32 %s9, 2
      // Predicated region
      $region41: #{cnn_base_forward.4} parent=39 // pred_check
        %p745 = pneg %p106
      $region42: #{cnn_base_forward.4} parent=39 // pred_check_branch
        %747 = sbr.rel (%p745) target = $region44
      $region43: #{cnn_base_forward.4} parent=39 // pred_region
        %s748 = smul.u32 50, %s15
        %p749 = scmp.lt.s32.totalorder %s748, 99
        %s750 = scalar_select %p749, %s748, 99
        %s751 = smul.addr %s750, 8
        %s752 = scalar_lea.vmem %s3, %s751
      $region44: #{cnn_base_forward.4} parent=39 // pred_fallthru
        _
    $region40: #{cnn_base_forward.4} parent=5 // pred_fallthru
      _
  $region6: #{cnn_base_forward.4} parent=0 // loop_footer
    %s13 = sadd.s32 1, %s9
  $region7: #{cnn_base_forward.4} parent=0 // loop_footer_branch
    %8 = sbr.rel target = $region3
  $region8: #{cnn_base_forward.4} parent=0 // loop_exit
    _

// kernel: cnn_base_forward.5
$region0: #{cnn_base_forward.5}
  #allocation0 [shape = 'u32[]', space=smem, size = 0x4, offset = 0x4, fixed_abs, tag = 'smem constant byte address 0x4 - core index']
  #allocation1 [shape = 'u32[144,128]{1,0:T(1,128)}', space=vmem, size = 0x12000, scoped, tag = 'internal scratch']
  %s0 = inlined_call_operand.vmem [shape: f32[162,512], index: 0, kind: input, shape index: {}]
  %s1 = inlined_call_operand.vmem [shape: f32[512,128], index: 1, kind: input, shape index: {}]
  %s2 = inlined_call_operand.vmem [shape: f32[1,128], index: 2, kind: input, shape index: {}]
  %s3 = inlined_call_operand.vmem [shape: f32[162,128], index: 3, kind: output, shape index: {}]
  %s4 = sld [smem:[#allocation0]]
  $region22: #{cnn_base_forward.5} parent=0
    _
  %s6 = ssub.s32 1, %s4
  %s7 = scalar_select 0, %s6, %s4
  // Predicated region
  $region2: #{cnn_base_forward.5} parent=0 // pred_check
    _
  $region3: #{cnn_base_forward.5} parent=0 // pred_check_branch
    %9 = sbr.rel (0) target = $region5
  $region4: #{cnn_base_forward.5} parent=0 // pred_region
    _
  $region5: #{cnn_base_forward.5} parent=0 // pred_fallthru
    _
  // Predicated region
  $region6: #{cnn_base_forward.5} parent=0 // pred_check
    _
  $region7: #{cnn_base_forward.5} parent=0 // pred_check_branch
    %11 = sbr.rel (0) target = $region9
  $region8: #{cnn_base_forward.5} parent=0 // pred_region
    _
  $region9: #{cnn_base_forward.5} parent=0 // pred_fallthru
    _
  // Predicated region
  $region10: #{cnn_base_forward.5} parent=0 // pred_check
    _
  $region11: #{cnn_base_forward.5} parent=0 // pred_check_branch
    %13 = sbr.rel (0) target = $region13
  $region12: #{cnn_base_forward.5} parent=0 // pred_region
    _
  $region13: #{cnn_base_forward.5} parent=0 // pred_fallthru
    _
  %v14 = vld [vmem:[%s0] sm:$0xff]
  %v15 = vld [vmem:[%s0 + $0x8] sm:$0xff]
  %v16 = vld [vmem:[%s0 + $0x10] sm:$0xff]
  %v17 = vld [vmem:[%s0 + $0x18] sm:$0xff]
  %v18 = vld [vmem:[%s0 + $0x20] sm:$0xff]
  %v19 = vld [vmem:[%s0 + $0x28] sm:$0xff]
  %v20 = vld [vmem:[%s0 + $0x30] sm:$0xff]
  %v21 = vld [vmem:[%s0 + $0x38] sm:$0xff]
  %v22 = vld [vmem:[%s0 + $0x40] sm:$0xff]
  %v23 = vld [vmem:[%s0 + $0x48] sm:$0xff]
  %v24 = vld [vmem:[%s0 + $0x50] sm:$0xff]
  %v25 = vld [vmem:[%s0 + $0x58] sm:$0xff]
  %v26 = vld [vmem:[%s0 + $0x60] sm:$0xff]
  %v27 = vld [vmem:[%s0 + $0x68] sm:$0xff]
  %v28 = vld [vmem:[%s0 + $0x70] sm:$0xff]
  %v29 = vld [vmem:[%s0 + $0x78] sm:$0xff]
  %v30 = vld [vmem:[%s0 + $0x80] sm:$0xff]
  %v31 = vld [vmem:[%s0 + $0x88] sm:$0xff]
  %v32 = vld [vmem:[%s0 + $0x90] sm:$0xff]
  %v33 = vld [vmem:[%s0 + $0x98] sm:$0xff]
  %v34 = vld [vmem:[%s0 + $0xa0] sm:$0xff]
  %v35 = vld [vmem:[%s0 + $0xa8] sm:$0xff]
  %v36 = vld [vmem:[%s0 + $0xb0] sm:$0xff]
  %v37 = vld [vmem:[%s0 + $0xb8] sm:$0xff]
  %v38 = vld [vmem:[%s0 + $0xc0] sm:$0xff]
  %v39 = vld [vmem:[%s0 + $0xc8] sm:$0xff]
  %v40 = vld [vmem:[%s0 + $0xd0] sm:$0xff]
  %v41 = vld [vmem:[%s0 + $0xd8] sm:$0xff]
  %v42 = vld [vmem:[%s0 + $0xe0] sm:$0xff]
  %v43 = vld [vmem:[%s0 + $0xe8] sm:$0xff]
  %v44 = vld [vmem:[%s0 + $0xf0] sm:$0xff]
  %v45 = vld [vmem:[%s0 + $0xf8] sm:$0xff]
  %v46 = vld [vmem:[%s0 + $0x100] sm:$0xff]
  %v47 = vld [vmem:[%s0 + $0x108] sm:$0xff]
  %v48 = vld [vmem:[%s0 + $0x110] sm:$0xff]
  %v49 = vld [vmem:[%s0 + $0x118] sm:$0xff]
  %v50 = vld [vmem:[%s0 + $0x120] sm:$0xff]
  %v51 = vld [vmem:[%s0 + $0x128] sm:$0xff]
  %v52 = vld [vmem:[%s0 + $0x130] sm:$0xff]
  %v53 = vld [vmem:[%s0 + $0x138] sm:$0xff]
  %v54 = vld [vmem:[%s0 + $0x140] sm:$0xff]
  %v55 = vld [vmem:[%s0 + $0x148] sm:$0xff]
  %v56 = vld [vmem:[%s0 + $0x150] sm:$0xff]
  %v57 = vld [vmem:[%s0 + $0x158] sm:$0xff]
  %v58 = vld [vmem:[%s0 + $0x160] sm:$0xff]
  %v59 = vld [vmem:[%s0 + $0x168] sm:$0xff]
  %v60 = vld [vmem:[%s0 + $0x170] sm:$0xff]
  %v61 = vld [vmem:[%s0 + $0x178] sm:$0xff]
  %v62 = vld [vmem:[%s0 + $0x180] sm:$0xff]
  %v63 = vld [vmem:[%s0 + $0x188] sm:$0xff]
  %v64 = vld [vmem:[%s0 + $0x190] sm:$0xff]
  %v65 = vld [vmem:[%s0 + $0x198] sm:$0xff]
  %v66 = vld [vmem:[%s0 + $0x1a0] sm:$0xff]
  %v67 = vld [vmem:[%s0 + $0x1a8] sm:$0xff]
  %v68 = vld [vmem:[%s0 + $0x1b0] sm:$0xff]
  %v69 = vld [vmem:[%s0 + $0x1b8] sm:$0xff]
  %v70 = vld [vmem:[%s0 + $0x1c0] sm:$0xff]
  %v71 = vld [vmem:[%s0 + $0x1c8] sm:$0xff]
  %v72 = vld [vmem:[%s0 + $0x1d0] sm:$0xff]
  %v73 = vld [vmem:[%s0 + $0x1d8] sm:$0xff]
  %v74 = vld [vmem:[%s0 + $0x1e0] sm:$0xff]
  %v75 = vld [vmem:[%s0 + $0x1e8] sm:$0xff]
  %v76 = vld [vmem:[%s0 + $0x1f0] sm:$0xff]
  %v77 = vld [vmem:[%s0 + $0x1f8] sm:$0xff]
  %v78 = vld [vmem:[%s0 + $0x200] sm:$0xff]
  %v79 = vld [vmem:[%s0 + $0x208] sm:$0xff]
  %v80 = vld [vmem:[%s0 + $0x210] sm:$0xff]
  %v81 = vld [vmem:[%s0 + $0x218] sm:$0xff]
  %v82 = vld [vmem:[%s0 + $0x220] sm:$0xff]
  %v83 = vld [vmem:[%s0 + $0x228] sm:$0xff]
  %v84 = vld [vmem:[%s0 + $0x230] sm:$0xff]
  %v85 = vld [vmem:[%s0 + $0x238] sm:$0xff]
  %v86 = vld [vmem:[%s0 + $0x240] sm:$0xff]
  %v87 = vld [vmem:[%s0 + $0x248] sm:$0xff]
  %v88 = vld [vmem:[%s0 + $0x250] sm:$0xff]
  %v89 = vld [vmem:[%s0 + $0x258] sm:$0xff]
  %v90 = vld [vmem:[%s0 + $0x260] sm:$0xff]
  %v91 = vld [vmem:[%s0 + $0x268] sm:$0xff]
  %v92 = vld [vmem:[%s0 + $0x270] sm:$0xff]
  %v93 = vld [vmem:[%s0 + $0x278] sm:$0xff]
  %v94 = vld [vmem:[%s0 + $0x280] sm:$0x3]
  %v95 = vld [vmem:[%s0 + $0x288] sm:$0x3]
  %v96 = vld [vmem:[%s0 + $0x290] sm:$0x3]
  %v97 = vld [vmem:[%s0 + $0x298] sm:$0x3]
  %v98 = vld [vmem:[%s1] sm:$0xff]
  %v99 = vld [vmem:[%s1 + $0x8] sm:$0xff]
  %v100 = vld [vmem:[%s1 + $0x10] sm:$0xff]
  %v101 = vld [vmem:[%s1 + $0x18] sm:$0xff]
  %v102 = vld [vmem:[%s1 + $0x20] sm:$0xff]
  %v103 = vld [vmem:[%s1 + $0x28] sm:$0xff]
  %v104 = vld [vmem:[%s1 + $0x30] sm:$0xff]
  %v105 = vld [vmem:[%s1 + $0x38] sm:$0xff]
  %v106 = vld [vmem:[%s1 + $0x40] sm:$0xff]
  %v107 = vld [vmem:[%s1 + $0x48] sm:$0xff]
  %v108 = vld [vmem:[%s1 + $0x50] sm:$0xff]
  %v109 = vld [vmem:[%s1 + $0x58] sm:$0xff]
  %v110 = vld [vmem:[%s1 + $0x60] sm:$0xff]
  %v111 = vld [vmem:[%s1 + $0x68] sm:$0xff]
  %v112 = vld [vmem:[%s1 + $0x70] sm:$0xff]
  %v113 = vld [vmem:[%s1 + $0x78] sm:$0xff]
  %v114 = vld [vmem:[%s1 + $0x80] sm:$0xff]
  %v115 = vld [vmem:[%s1 + $0x88] sm:$0xff]
  %v116 = vld [vmem:[%s1 + $0x90] sm:$0xff]
  %v117 = vld [vmem:[%s1 + $0x98] sm:$0xff]
  %v118 = vld [vmem:[%s1 + $0xa0] sm:$0xff]
  %v119 = vld [vmem:[%s1 + $0xa8] sm:$0xff]
  %v120 = vld [vmem:[%s1 + $0xb0] sm:$0xff]
  %v121 = vld [vmem:[%s1 + $0xb8] sm:$0xff]
  %v122 = vld [vmem:[%s1 + $0xc0] sm:$0xff]
  %v123 = vld [vmem:[%s1 + $0xc8] sm:$0xff]
  %v124 = vld [vmem:[%s1 + $0xd0] sm:$0xff]
  %v125 = vld [vmem:[%s1 + $0xd8] sm:$0xff]
  %v126 = vld [vmem:[%s1 + $0xe0] sm:$0xff]
  %v127 = vld [vmem:[%s1 + $0xe8] sm:$0xff]
  %v128 = vld [vmem:[%s1 + $0xf0] sm:$0xff]
  %v129 = vld [vmem:[%s1 + $0xf8] sm:$0xff]
  %v130 = vld [vmem:[%s1 + $0x100] sm:$0xff]
  %v131 = vld [vmem:[%s1 + $0x108] sm:$0xff]
  %v132 = vld [vmem:[%s1 + $0x110] sm:$0xff]
  %v133 = vld [vmem:[%s1 + $0x118] sm:$0xff]
  %v134 = vld [vmem:[%s1 + $0x120] sm:$0xff]
  %v135 = vld [vmem:[%s1 + $0x128] sm:$0xff]
  %v136 = vld [vmem:[%s1 + $0x130] sm:$0xff]
  %v137 = vld [vmem:[%s1 + $0x138] sm:$0xff]
  %v138 = vld [vmem:[%s1 + $0x140] sm:$0xff]
  %v139 = vld [vmem:[%s1 + $0x148] sm:$0xff]
  %v140 = vld [vmem:[%s1 + $0x150] sm:$0xff]
  %v141 = vld [vmem:[%s1 + $0x158] sm:$0xff]
  %v142 = vld [vmem:[%s1 + $0x160] sm:$0xff]
  %v143 = vld [vmem:[%s1 + $0x168] sm:$0xff]
  %v144 = vld [vmem:[%s1 + $0x170] sm:$0xff]
  %v145 = vld [vmem:[%s1 + $0x178] sm:$0xff]
  %v146 = vld [vmem:[%s1 + $0x180] sm:$0xff]
  %v147 = vld [vmem:[%s1 + $0x188] sm:$0xff]
  %v148 = vld [vmem:[%s1 + $0x190] sm:$0xff]
  %v149 = vld [vmem:[%s1 + $0x198] sm:$0xff]
  %v150 = vld [vmem:[%s1 + $0x1a0] sm:$0xff]
  %v151 = vld [vmem:[%s1 + $0x1a8] sm:$0xff]
  %v152 = vld [vmem:[%s1 + $0x1b0] sm:$0xff]
  %v153 = vld [vmem:[%s1 + $0x1b8] sm:$0xff]
  %v154 = vld [vmem:[%s1 + $0x1c0] sm:$0xff]
  %v155 = vld [vmem:[%s1 + $0x1c8] sm:$0xff]
  %v156 = vld [vmem:[%s1 + $0x1d0] sm:$0xff]
  %v157 = vld [vmem:[%s1 + $0x1d8] sm:$0xff]
  %v158 = vld [vmem:[%s1 + $0x1e0] sm:$0xff]
  %v159 = vld [vmem:[%s1 + $0x1e8] sm:$0xff]
  %v160 = vld [vmem:[%s1 + $0x1f0] sm:$0xff]
  %v161 = vld [vmem:[%s1 + $0x1f8] sm:$0xff]
  %v162 = vld [vmem:[%s2] sm:$0x1]
  %v164 = vlaneseq
  %v165 = vshrl.u32 %v164, 7
  %v166 = vsub.s32 0, %v165
  %v167 = vrot.slane %v162, %v166
  %169 = vmatprep.subr.mxu0 0.0
  %170 = vmatpush1.msra.mxu0 %v98
  %171 = vmatprep.subr.mxu0 0.0
  %172 = vmatpush1.msra.mxu0 %v99
  %173 = vmatprep.subr.mxu0 0.0
  %174 = vmatpush1.msra.mxu0 %v100
  %175 = vmatprep.subr.mxu0 0.0
  %176 = vmatpush1.msra.mxu0 %v101
  %177 = vmatprep.subr.mxu0 0.0
  %178 = vmatpush1.msra.mxu0 %v102
  %179 = vmatprep.subr.mxu0 0.0
  %180 = vmatpush1.msra.mxu0 %v103
  %181 = vmatprep.subr.mxu0 0.0
  %182 = vmatpush1.msra.mxu0 %v104
  %183 = vmatprep.subr.mxu0 0.0
  %184 = vmatpush1.msra.mxu0 %v105
  %185 = vmatprep.subr.mxu0 0.0
  %186 = vmatpush1.msra.mxu0 %v106
  %187 = vmatprep.subr.mxu0 0.0
  %188 = vmatpush1.msra.mxu0 %v107
  %189 = vmatprep.subr.mxu0 0.0
  %190 = vmatpush1.msra.mxu0 %v108
  %191 = vmatprep.subr.mxu0 0.0
  %192 = vmatpush1.msra.mxu0 %v109
  %193 = vmatprep.subr.mxu0 0.0
  %194 = vmatpush1.msra.mxu0 %v110
  %195 = vmatprep.subr.mxu0 0.0
  %196 = vmatpush1.msra.mxu0 %v111
  %197 = vmatprep.subr.mxu0 0.0
  %198 = vmatpush1.msra.mxu0 %v112
  %199 = vmatprep.subr.mxu0 0.0
  %200 = vmatpush1.msra.mxu0 %v113
  %201 = vmatprep.subr.mxu0 0.0
  %202 = vmatpush1.msra.mxu0 %v114
  %203 = vmatprep.subr.mxu0 0.0
  %204 = vmatpush1.msra.mxu0 %v115
  %205 = vmatprep.subr.mxu0 0.0
  %206 = vmatpush1.msra.mxu0 %v116
  %207 = vmatprep.subr.mxu0 0.0
  %208 = vmatpush1.msra.mxu0 %v117
  %209 = vmatprep.subr.mxu0 0.0
  %210 = vmatpush1.msra.mxu0 %v118
  %211 = vmatprep.subr.mxu0 0.0
  %212 = vmatpush1.msra.mxu0 %v119
  %213 = vmatprep.subr.mxu0 0.0
  %214 = vmatpush1.msra.mxu0 %v120
  %215 = vmatprep.subr.mxu0 0.0
  %216 = vmatpush1.msra.mxu0 %v121
  %217 = vmatprep.subr.mxu0 0.0
  %218 = vmatpush1.msra.mxu0 %v122
  %219 = vmatprep.subr.mxu0 0.0
  %220 = vmatpush1.msra.mxu0 %v123
  %221 = vmatprep.subr.mxu0 0.0
  %222 = vmatpush1.msra.mxu0 %v124
  %223 = vmatprep.subr.mxu0 0.0
  %224 = vmatpush1.msra.mxu0 %v125
  %225 = vmatprep.subr.mxu0 0.0
  %226 = vmatpush1.msra.mxu0 %v126
  %227 = vmatprep.subr.mxu0 0.0
  %228 = vmatpush1.msra.mxu0 %v127
  %229 = vmatprep.subr.mxu0 0.0
  %230 = vmatpush1.msra.mxu0 %v128
  %231 = vmatprep.subr.mxu0 0.0
  %232 = vmatpush1.msra.mxu0 %v129
  %233 = vmatprep.mubr.f32.mxu0 %v15
  %234 = vmatmul.mubr.f32.gmra.mrb[0].mxu0 %v14
  %v235 = vpop.f32.mrb[0].mxu0
  %v236 = vadd.f32 %v167, %v235
  %v237 = vpop.f32.mrb[0].mxu0
  %238 = vmatprep.mubr.f32.mxu0 %v19
  %239 = vmatmul.mubr.f32.gmra.mrb[0].mxu0 %v18
  %v240 = vpop.f32.mrb[0].mxu0
  %v241 = vadd.f32 %v167, %v240
  %v242 = vpop.f32.mrb[0].mxu0
  %243 = vmatprep.mubr.f32.mxu0 %v23
  %244 = vmatmul.mubr.f32.gmra.mrb[0].mxu0 %v22
  %v245 = vpop.f32.mrb[0].mxu0
  %v246 = vadd.f32 %v167, %v245
  %v247 = vpop.f32.mrb[0].mxu0
  %248 = vmatprep.mubr.f32.mxu0 %v27
  %249 = vmatmul.mubr.f32.gmra.mrb[0].mxu0 %v26
  %v250 = vpop.f32.mrb[0].mxu0
  %v251 = vadd.f32 %v167, %v250
  %v252 = vpop.f32.mrb[0].mxu0
  %253 = vmatprep.mubr.f32.mxu0 %v31
  %254 = vmatmul.mubr.f32.gmra.mrb[0].mxu0 %v30
  %v255 = vpop.f32.mrb[0].mxu0
  %v256 = vadd.f32 %v167, %v255
  %v257 = vpop.f32.mrb[0].mxu0
  %258 = vmatprep.mubr.f32.mxu0 %v35
  %259 = vmatmul.mubr.f32.gmra.mrb[0].mxu0 %v34
  %v260 = vpop.f32.mrb[0].mxu0
  %v261 = vadd.f32 %v167, %v260
  %v262 = vpop.f32.mrb[0].mxu0
  %263 = vmatprep.mubr.f32.mxu0 %v39
  %264 = vmatmul.mubr.f32.gmra.mrb[0].mxu0 %v38
  %v265 = vpop.f32.mrb[0].mxu0
  %v266 = vadd.f32 %v167, %v265
  %v267 = vpop.f32.mrb[0].mxu0
  %268 = vmatprep.mubr.f32.mxu0 %v43
  %269 = vmatmul.mubr.f32.gmra.mrb[0].mxu0 %v42
  %v270 = vpop.f32.mrb[0].mxu0
  %v271 = vadd.f32 %v167, %v270
  %v272 = vpop.f32.mrb[0].mxu0
  %273 = vmatprep.mubr.f32.mxu0 %v47
  %274 = vmatmul.mubr.f32.gmra.mrb[0].mxu0 %v46
  %v275 = vpop.f32.mrb[0].mxu0
  %v276 = vadd.f32 %v167, %v275
  %v277 = vpop.f32.mrb[0].mxu0
  %278 = vmatprep.mubr.f32.mxu0 %v51
  %279 = vmatmul.mubr.f32.gmra.mrb[0].mxu0 %v50
  %v280 = vpop.f32.mrb[0].mxu0
  %v281 = vadd.f32 %v167, %v280
  %v282 = vpop.f32.mrb[0].mxu0
  %283 = vmatprep.mubr.f32.mxu0 %v55
  %284 = vmatmul.mubr.f32.gmra.mrb[0].mxu0 %v54
  %v285 = vpop.f32.mrb[0].mxu0
  %v286 = vadd.f32 %v167, %v285
  %v287 = vpop.f32.mrb[0].mxu0
  %288 = vmatprep.mubr.f32.mxu0 %v59
  %289 = vmatmul.mubr.f32.gmra.mrb[0].mxu0 %v58
  %v290 = vpop.f32.mrb[0].mxu0
  %v291 = vadd.f32 %v167, %v290
  %v292 = vpop.f32.mrb[0].mxu0
  %293 = vmatprep.mubr.f32.mxu0 %v63
  %294 = vmatmul.mubr.f32.gmra.mrb[0].mxu0 %v62
  %v295 = vpop.f32.mrb[0].mxu0
  %v296 = vadd.f32 %v167, %v295
  %v297 = vpop.f32.mrb[0].mxu0
  %298 = vmatprep.mubr.f32.mxu0 %v67
  %299 = vmatmul.mubr.f32.gmra.mrb[0].mxu0 %v66
  %v300 = vpop.f32.mrb[0].mxu0
  %v301 = vadd.f32 %v167, %v300
  %v302 = vpop.f32.mrb[0].mxu0
  %303 = vmatprep.mubr.f32.mxu0 %v71
  %304 = vmatmul.mubr.f32.gmra.mrb[0].mxu0 %v70
  %v305 = vpop.f32.mrb[0].mxu0
  %v306 = vadd.f32 %v167, %v305
  %v307 = vpop.f32.mrb[0].mxu0
  %308 = vmatprep.mubr.f32.mxu0 %v75
  %309 = vmatmul.mubr.f32.gmra.mrb[0].mxu0 %v74
  %v310 = vpop.f32.mrb[0].mxu0
  %v311 = vadd.f32 %v167, %v310
  %v312 = vpop.f32.mrb[0].mxu0
  %313 = vmatprep.mubr.f32.mxu0 %v79
  %314 = vmatmul.mubr.f32.gmra.mrb[0].mxu0 %v78
  %v315 = vpop.f32.mrb[0].mxu0
  %v316 = vadd.f32 %v167, %v315
  %v317 = vpop.f32.mrb[0].mxu0
  %318 = vmatprep.mubr.f32.mxu0 %v83
  %319 = vmatmul.mubr.f32.gmra.mrb[0].mxu0 %v82
  %v320 = vpop.f32.mrb[0].mxu0
  %v321 = vadd.f32 %v167, %v320
  %v322 = vpop.f32.mrb[0].mxu0
  %323 = vmatprep.mubr.f32.mxu0 %v87
  %324 = vmatmul.mubr.f32.gmra.mrb[0].mxu0 %v86
  %v325 = vpop.f32.mrb[0].mxu0
  %v326 = vadd.f32 %v167, %v325
  %v327 = vpop.f32.mrb[0].mxu0
  %328 = vmatprep.mubr.f32.mxu0 %v91
  %329 = vmatmul.mubr.f32.gmra.mrb[0].mxu0 %v90
  %v330 = vpop.f32.mrb[0].mxu0
  %v331 = vadd.f32 %v167, %v330
  %v332 = vpop.f32.mrb[0].mxu0
  %333 = vmatprep.mubr.f32.mxu0 %v95
  %334 = vmatmul.mubr.f32.gmra.mrb[0].mxu0 %v94
  %v335 = vpop.f32.mrb[0].mxu0
  %v336 = vadd.f32 %v167, %v335
  %v337 = vpop.f32.mrb[0].mxu0
  %338 = vdwg.mxu0
  %339 = vmatprep.subr.mxu0 0.0
  %340 = vmatpush1.msra.mxu0 %v130
  %341 = vmatprep.subr.mxu0 0.0
  %342 = vmatpush1.msra.mxu0 %v131
  %343 = vmatprep.subr.mxu0 0.0
  %344 = vmatpush1.msra.mxu0 %v132
  %345 = vmatprep.subr.mxu0 0.0
  %346 = vmatpush1.msra.mxu0 %v133
  %347 = vmatprep.subr.mxu0 0.0
  %348 = vmatpush1.msra.mxu0 %v134
  %349 = vmatprep.subr.mxu0 0.0
  %350 = vmatpush1.msra.mxu0 %v135
  %351 = vmatprep.subr.mxu0 0.0
  %352 = vmatpush1.msra.mxu0 %v136
  %353 = vmatprep.subr.mxu0 0.0
  %354 = vmatpush1.msra.mxu0 %v137
  %355 = vmatprep.subr.mxu0 0.0
  %356 = vmatpush1.msra.mxu0 %v138
  %357 = vmatprep.subr.mxu0 0.0
  %358 = vmatpush1.msra.mxu0 %v139
  %359 = vmatprep.subr.mxu0 0.0
  %360 = vmatpush1.msra.mxu0 %v140
  %361 = vmatprep.subr.mxu0 0.0
  %362 = vmatpush1.msra.mxu0 %v141
  %363 = vmatprep.subr.mxu0 0.0
  %364 = vmatpush1.msra.mxu0 %v142
  %365 = vmatprep.subr.mxu0 0.0
  %366 = vmatpush1.msra.mxu0 %v143
  %367 = vmatprep.subr.mxu0 0.0
  %368 = vmatpush1.msra.mxu0 %v144
  %369 = vmatprep.subr.mxu0 0.0
  %370 = vmatpush1.msra.mxu0 %v145
  %371 = vmatprep.subr.mxu0 0.0
  %372 = vmatpush1.msra.mxu0 %v146
  %373 = vmatprep.subr.mxu0 0.0
  %374 = vmatpush1.msra.mxu0 %v147
  %375 = vmatprep.subr.mxu0 0.0
  %376 = vmatpush1.msra.mxu0 %v148
  %377 = vmatprep.subr.mxu0 0.0
  %378 = vmatpush1.msra.mxu0 %v149
  %379 = vmatprep.subr.mxu0 0.0
  %380 = vmatpush1.msra.mxu0 %v150
  %381 = vmatprep.subr.mxu0 0.0
  %382 = vmatpush1.msra.mxu0 %v151
  %383 = vmatprep.subr.mxu0 0.0
  %384 = vmatpush1.msra.mxu0 %v152
  %385 = vmatprep.subr.mxu0 0.0
  %386 = vmatpush1.msra.mxu0 %v153
  %387 = vmatprep.subr.mxu0 0.0
  %388 = vmatpush1.msra.mxu0 %v154
  %389 = vmatprep.subr.mxu0 0.0
  %390 = vmatpush1.msra.mxu0 %v155
  %391 = vmatprep.subr.mxu0 0.0
  %392 = vmatpush1.msra.mxu0 %v156
  %393 = vmatprep.subr.mxu0 0.0
  %394 = vmatpush1.msra.mxu0 %v157
  %395 = vmatprep.subr.mxu0 0.0
  %396 = vmatpush1.msra.mxu0 %v158
  %397 = vmatprep.subr.mxu0 0.0
  %398 = vmatpush1.msra.mxu0 %v159
  %399 = vmatprep.subr.mxu0 0.0
  %400 = vmatpush1.msra.mxu0 %v160
  %401 = vmatprep.subr.mxu0 0.0
  %402 = vmatpush1.msra.mxu0 %v161
  %403 = vmatprep.mubr.f32.mxu0 %v17
  %404 = vmatmul.mubr.f32.gmra.mrb[0].mxu0 %v16
  %v405 = vpop.f32.mrb[0].mxu0
  %v406 = vadd.f32 %v236, %v405
  %v407 = vpop.f32.mrb[0].mxu0
  %408 = vmatprep.mubr.f32.mxu0 %v21
  %409 = vmatmul.mubr.f32.gmra.mrb[0].mxu0 %v20
  %v410 = vpop.f32.mrb[0].mxu0
  %v411 = vadd.f32 %v241, %v410
  %v412 = vpop.f32.mrb[0].mxu0
  %413 = vmatprep.mubr.f32.mxu0 %v25
  %414 = vmatmul.mubr.f32.gmra.mrb[0].mxu0 %v24
  %v415 = vpop.f32.mrb[0].mxu0
  %v416 = vadd.f32 %v246, %v415
  %v417 = vpop.f32.mrb[0].mxu0
  %418 = vmatprep.mubr.f32.mxu0 %v29
  %419 = vmatmul.mubr.f32.gmra.mrb[0].mxu0 %v28
  %v420 = vpop.f32.mrb[0].mxu0
  %v421 = vadd.f32 %v251, %v420
  %v422 = vpop.f32.mrb[0].mxu0
  %423 = vmatprep.mubr.f32.mxu0 %v33
  %424 = vmatmul.mubr.f32.gmra.mrb[0].mxu0 %v32
  %v425 = vpop.f32.mrb[0].mxu0
  %v426 = vadd.f32 %v256, %v425
  %v427 = vpop.f32.mrb[0].mxu0
  %428 = vmatprep.mubr.f32.mxu0 %v37
  %429 = vmatmul.mubr.f32.gmra.mrb[0].mxu0 %v36
  %v430 = vpop.f32.mrb[0].mxu0
  %v431 = vadd.f32 %v261, %v430
  %v432 = vpop.f32.mrb[0].mxu0
  %433 = vmatprep.mubr.f32.mxu0 %v41
  %434 = vmatmul.mubr.f32.gmra.mrb[0].mxu0 %v40
  %v435 = vpop.f32.mrb[0].mxu0
  %v436 = vadd.f32 %v266, %v435
  %v437 = vpop.f32.mrb[0].mxu0
  %438 = vmatprep.mubr.f32.mxu0 %v45
  %439 = vmatmul.mubr.f32.gmra.mrb[0].mxu0 %v44
  %v440 = vpop.f32.mrb[0].mxu0
  %v441 = vadd.f32 %v271, %v440
  %v442 = vpop.f32.mrb[0].mxu0
  %443 = vmatprep.mubr.f32.mxu0 %v49
  %444 = vmatmul.mubr.f32.gmra.mrb[0].mxu0 %v48
  %v445 = vpop.f32.mrb[0].mxu0
  %v446 = vadd.f32 %v276, %v445
  %v447 = vpop.f32.mrb[0].mxu0
  %448 = vmatprep.mubr.f32.mxu0 %v53
  %449 = vmatmul.mubr.f32.gmra.mrb[0].mxu0 %v52
  %v450 = vpop.f32.mrb[0].mxu0
  %v451 = vadd.f32 %v281, %v450
  %v452 = vpop.f32.mrb[0].mxu0
  %453 = vmatprep.mubr.f32.mxu0 %v57
  %454 = vmatmul.mubr.f32.gmra.mrb[0].mxu0 %v56
  %v455 = vpop.f32.mrb[0].mxu0
  %v456 = vadd.f32 %v286, %v455
  %v457 = vpop.f32.mrb[0].mxu0
  %458 = vmatprep.mubr.f32.mxu0 %v61
  %459 = vmatmul.mubr.f32.gmra.mrb[0].mxu0 %v60
  %v460 = vpop.f32.mrb[0].mxu0
  %v461 = vadd.f32 %v291, %v460
  %v462 = vpop.f32.mrb[0].mxu0
  %463 = vmatprep.mubr.f32.mxu0 %v65
  %464 = vmatmul.mubr.f32.gmra.mrb[0].mxu0 %v64
  %v465 = vpop.f32.mrb[0].mxu0
  %v466 = vadd.f32 %v296, %v465
  %v467 = vpop.f32.mrb[0].mxu0
  %468 = vmatprep.mubr.f32.mxu0 %v69
  %469 = vmatmul.mubr.f32.gmra.mrb[0].mxu0 %v68
  %v470 = vpop.f32.mrb[0].mxu0
  %v471 = vadd.f32 %v301, %v470
  %v472 = vpop.f32.mrb[0].mxu0
  %473 = vmatprep.mubr.f32.mxu0 %v73
  %474 = vmatmul.mubr.f32.gmra.mrb[0].mxu0 %v72
  %v475 = vpop.f32.mrb[0].mxu0
  %v476 = vadd.f32 %v306, %v475
  %v477 = vpop.f32.mrb[0].mxu0
  %478 = vmatprep.mubr.f32.mxu0 %v77
  %479 = vmatmul.mubr.f32.gmra.mrb[0].mxu0 %v76
  %v480 = vpop.f32.mrb[0].mxu0
  %v481 = vadd.f32 %v311, %v480
  %v482 = vpop.f32.mrb[0].mxu0
  %483 = vmatprep.mubr.f32.mxu0 %v81
  %484 = vmatmul.mubr.f32.gmra.mrb[0].mxu0 %v80
  %v485 = vpop.f32.mrb[0].mxu0
  %v486 = vadd.f32 %v316, %v485
  %v487 = vpop.f32.mrb[0].mxu0
  %488 = vmatprep.mubr.f32.mxu0 %v85
  %489 = vmatmul.mubr.f32.gmra.mrb[0].mxu0 %v84
  %v490 = vpop.f32.mrb[0].mxu0
  %v491 = vadd.f32 %v321, %v490
  %v492 = vpop.f32.mrb[0].mxu0
  %493 = vmatprep.mubr.f32.mxu0 %v89
  %494 = vmatmul.mubr.f32.gmra.mrb[0].mxu0 %v88
  %v495 = vpop.f32.mrb[0].mxu0
  %v496 = vadd.f32 %v326, %v495
  %v497 = vpop.f32.mrb[0].mxu0
  %498 = vmatprep.mubr.f32.mxu0 %v93
  %499 = vmatmul.mubr.f32.gmra.mrb[0].mxu0 %v92
  %v500 = vpop.f32.mrb[0].mxu0
  %v501 = vadd.f32 %v331, %v500
  %v502 = vpop.f32.mrb[0].mxu0
  %503 = vmatprep.mubr.f32.mxu0 %v97
  %504 = vmatmul.mubr.f32.gmra.mrb[0].mxu0 %v96
  %v505 = vpop.f32.mrb[0].mxu0
  %v506 = vadd.f32 %v336, %v505
  %v507 = vpop.f32.mrb[0].mxu0
  %508 = vdwg.mxu0
  %v509 = vmax.f32 %v406, 0.0
  %v510 = vmax.f32 %v411, 0.0
  %v511 = vmax.f32 %v416, 0.0
  %v512 = vmax.f32 %v421, 0.0
  %v513 = vmax.f32 %v426, 0.0
  %v514 = vmax.f32 %v431, 0.0
  %v515 = vmax.f32 %v436, 0.0
  %v516 = vmax.f32 %v441, 0.0
  %v517 = vmax.f32 %v446, 0.0
  %v518 = vmax.f32 %v451, 0.0
  %v519 = vmax.f32 %v456, 0.0
  %v520 = vmax.f32 %v461, 0.0
  %v521 = vmax.f32 %v466, 0.0
  %v522 = vmax.f32 %v471, 0.0
  %v523 = vmax.f32 %v476, 0.0
  %v524 = vmax.f32 %v481, 0.0
  %v525 = vmax.f32 %v486, 0.0
  %v526 = vmax.f32 %v491, 0.0
  %v527 = vmax.f32 %v496, 0.0
  %v528 = vmax.f32 %v501, 0.0
  %v529 = vmax.f32 %v506, 0.0
  %530 = vst [vmem:[%s3] sm:$0xff] %v509
  %531 = vst [vmem:[%s3 + $0x8] sm:$0xff] %v510
  %532 = vst [vmem:[%s3 + $0x10] sm:$0xff] %v511
  %533 = vst [vmem:[%s3 + $0x18] sm:$0xff] %v512
  %534 = vst [vmem:[%s3 + $0x20] sm:$0xff] %v513
  %535 = vst [vmem:[%s3 + $0x28] sm:$0xff] %v514
  %536 = vst [vmem:[%s3 + $0x30] sm:$0xff] %v515
  %537 = vst [vmem:[%s3 + $0x38] sm:$0xff] %v516
  %538 = vst [vmem:[%s3 + $0x40] sm:$0xff] %v517
  %539 = vst [vmem:[%s3 + $0x48] sm:$0xff] %v518
  %540 = vst [vmem:[%s3 + $0x50] sm:$0xff] %v519
  %541 = vst [vmem:[%s3 + $0x58] sm:$0xff] %v520
  %542 = vst [vmem:[%s3 + $0x60] sm:$0xff] %v521
  %543 = vst [vmem:[%s3 + $0x68] sm:$0xff] %v522
  %544 = vst [vmem:[%s3 + $0x70] sm:$0xff] %v523
  %545 = vst [vmem:[%s3 + $0x78] sm:$0xff] %v524
  %546 = vst [vmem:[%s3 + $0x80] sm:$0xff] %v525
  %547 = vst [vmem:[%s3 + $0x88] sm:$0xff] %v526
  %548 = vst [vmem:[%s3 + $0x90] sm:$0xff] %v527
  %549 = vst [vmem:[%s3 + $0x98] sm:$0xff] %v528
  %550 = vst [vmem:[%s3 + $0xa0] sm:$0x3] %v529
  // Predicated region
  $region14: #{cnn_base_forward.5} parent=0 // pred_check
    _
  $region15: #{cnn_base_forward.5} parent=0 // pred_check_branch
    %552 = sbr.rel (0) target = $region17
  $region16: #{cnn_base_forward.5} parent=0 // pred_region
    _
  $region17: #{cnn_base_forward.5} parent=0 // pred_fallthru
    _
  // Predicated region
  $region18: #{cnn_base_forward.5} parent=0 // pred_check
    _
  $region19: #{cnn_base_forward.5} parent=0 // pred_check_branch
    %554 = sbr.rel (0) target = $region21
  $region20: #{cnn_base_forward.5} parent=0 // pred_region
    _
  $region21: #{cnn_base_forward.5} parent=0 // pred_fallthru
    _

// kernel: cnn_base_forward.6
$region0: #{cnn_base_forward.6}
  #allocation0 [shape = 'u32[]', space=smem, size = 0x4, offset = 0x4, fixed_abs, tag = 'smem constant byte address 0x4 - core index']
  #allocation1 [shape = 'u32[144,128]{1,0:T(1,128)}', space=vmem, size = 0x12000, scoped, tag = 'internal scratch']
  %s0 = inlined_call_operand.vmem [shape: f32[98,576], index: 0, kind: input, shape index: {}]
  %s1 = inlined_call_operand.vmem [shape: f32[576,128], index: 1, kind: input, shape index: {}]
  %s2 = inlined_call_operand.vmem [shape: f32[1,128], index: 2, kind: input, shape index: {}]
  %s3 = inlined_call_operand.vmem [shape: f32[98,128], index: 3, kind: output, shape index: {}]
  %s4 = sld [smem:[#allocation0]]
  $region22: #{cnn_base_forward.6} parent=0
    _
  %s6 = ssub.s32 1, %s4
  %s7 = scalar_select 0, %s6, %s4
  // Predicated region
  $region2: #{cnn_base_forward.6} parent=0 // pred_check
    _
  $region3: #{cnn_base_forward.6} parent=0 // pred_check_branch
    %9 = sbr.rel (0) target = $region5
  $region4: #{cnn_base_forward.6} parent=0 // pred_region
    _
  $region5: #{cnn_base_forward.6} parent=0 // pred_fallthru
    _
  // Predicated region
  $region6: #{cnn_base_forward.6} parent=0 // pred_check
    _
  $region7: #{cnn_base_forward.6} parent=0 // pred_check_branch
    %11 = sbr.rel (0) target = $region9
  $region8: #{cnn_base_forward.6} parent=0 // pred_region
    _
  $region9: #{cnn_base_forward.6} parent=0 // pred_fallthru
    _
  // Predicated region
  $region10: #{cnn_base_forward.6} parent=0 // pred_check
    _
  $region11: #{cnn_base_forward.6} parent=0 // pred_check_branch
    %13 = sbr.rel (0) target = $region13
  $region12: #{cnn_base_forward.6} parent=0 // pred_region
    _
  $region13: #{cnn_base_forward.6} parent=0 // pred_fallthru
    _
  %v14 = vld [vmem:[%s0] sm:$0xff]
  %v15 = vld [vmem:[%s0 + $0x8] sm:$0xff]
  %v16 = vld [vmem:[%s0 + $0x10] sm:$0xff]
  %v17 = vld [vmem:[%s0 + $0x18] sm:$0xff]
  %v18 = vld [vmem:[%s0 + $0x20] sm:$0xff]
  %v19 = vld [vmem:[%s0 + $0x28] sm:$0xff]
  %v20 = vld [vmem:[%s0 + $0x30] sm:$0xff]
  %v21 = vld [vmem:[%s0 + $0x38] sm:$0xff]
  %v22 = vld [vmem:[%s0 + $0x40] sm:$0xff]
  %v23 = vld [vmem:[%s0 + $0x48] sm:$0xff]
  %v24 = vld [vmem:[%s0 + $0x50] sm:$0xff]
  %v25 = vld [vmem:[%s0 + $0x58] sm:$0xff]
  %v26 = vld [vmem:[%s0 + $0x60] sm:$0xff]
  %v27 = vld [vmem:[%s0 + $0x68] sm:$0xff]
  %v28 = vld [vmem:[%s0 + $0x70] sm:$0xff]
  %v29 = vld [vmem:[%s0 + $0x78] sm:$0xff]
  %v30 = vld [vmem:[%s0 + $0x80] sm:$0xff]
  %v31 = vld [vmem:[%s0 + $0x88] sm:$0xff]
  %v32 = vld [vmem:[%s0 + $0x90] sm:$0xff]
  %v33 = vld [vmem:[%s0 + $0x98] sm:$0xff]
  %v34 = vld [vmem:[%s0 + $0xa0] sm:$0xff]
  %v35 = vld [vmem:[%s0 + $0xa8] sm:$0xff]
  %v36 = vld [vmem:[%s0 + $0xb0] sm:$0xff]
  %v37 = vld [vmem:[%s0 + $0xb8] sm:$0xff]
  %v38 = vld [vmem:[%s0 + $0xc0] sm:$0xff]
  %v39 = vld [vmem:[%s0 + $0xc8] sm:$0xff]
  %v40 = vld [vmem:[%s0 + $0xd0] sm:$0xff]
  %v41 = vld [vmem:[%s0 + $0xd8] sm:$0xff]
  %v42 = vld [vmem:[%s0 + $0xe0] sm:$0xff]
  %v43 = vld [vmem:[%s0 + $0xe8] sm:$0xff]
  %v44 = vld [vmem:[%s0 + $0xf0] sm:$0xff]
  %v45 = vld [vmem:[%s0 + $0xf8] sm:$0xff]
  %v46 = vld [vmem:[%s0 + $0x100] sm:$0xff]
  %v47 = vld [vmem:[%s0 + $0x108] sm:$0xff]
  %v48 = vld [vmem:[%s0 + $0x110] sm:$0xff]
  %v49 = vld [vmem:[%s0 + $0x118] sm:$0xff]
  %v50 = vld [vmem:[%s0 + $0x120] sm:$0xff]
  %v51 = vld [vmem:[%s0 + $0x128] sm:$0xff]
  %v52 = vld [vmem:[%s0 + $0x130] sm:$0xff]
  %v53 = vld [vmem:[%s0 + $0x138] sm:$0xff]
  %v54 = vld [vmem:[%s0 + $0x140] sm:$0xff]
  %v55 = vld [vmem:[%s0 + $0x148] sm:$0xff]
  %v56 = vld [vmem:[%s0 + $0x150] sm:$0xff]
  %v57 = vld [vmem:[%s0 + $0x158] sm:$0xff]
  %v58 = vld [vmem:[%s0 + $0x160] sm:$0xff]
  %v59 = vld [vmem:[%s0 + $0x168] sm:$0xff]
  %v60 = vld [vmem:[%s0 + $0x170] sm:$0xff]
  %v61 = vld [vmem:[%s0 + $0x178] sm:$0xff]
  %v62 = vld [vmem:[%s0 + $0x180] sm:$0xff]
  %v63 = vld [vmem:[%s0 + $0x188] sm:$0xff]
  %v64 = vld [vmem:[%s0 + $0x190] sm:$0xff]
  %v65 = vld [vmem:[%s0 + $0x198] sm:$0xff]
  %v66 = vld [vmem:[%s0 + $0x1a0] sm:$0xff]
  %v67 = vld [vmem:[%s0 + $0x1a8] sm:$0xff]
  %v68 = vld [vmem:[%s0 + $0x1b0] sm:$0xff]
  %v69 = vld [vmem:[%s0 + $0x1b8] sm:$0xff]
  %v70 = vld [vmem:[%s0 + $0x1c0] sm:$0xff]
  %v71 = vld [vmem:[%s0 + $0x1c8] sm:$0xff]
  %v72 = vld [vmem:[%s0 + $0x1d0] sm:$0xff]
  %v73 = vld [vmem:[%s0 + $0x1d8] sm:$0xff]
  %v74 = vld [vmem:[%s0 + $0x1e0] sm:$0x3]
  %v75 = vld [vmem:[%s0 + $0x1e8] sm:$0x3]
  %v76 = vld [vmem:[%s0 + $0x1f0] sm:$0x3]
  %v77 = vld [vmem:[%s0 + $0x1f8] sm:$0x3]
  %v78 = vld [vmem:[%s0 + $0x200] sm:$0x3]
  %v79 = vld [vmem:[%s1] sm:$0xff]
  %v80 = vld [vmem:[%s1 + $0x8] sm:$0xff]
  %v81 = vld [vmem:[%s1 + $0x10] sm:$0xff]
  %v82 = vld [vmem:[%s1 + $0x18] sm:$0xff]
  %v83 = vld [vmem:[%s1 + $0x20] sm:$0xff]
  %v84 = vld [vmem:[%s1 + $0x28] sm:$0xff]
  %v85 = vld [vmem:[%s1 + $0x30] sm:$0xff]
  %v86 = vld [vmem:[%s1 + $0x38] sm:$0xff]
  %v87 = vld [vmem:[%s1 + $0x40] sm:$0xff]
  %v88 = vld [vmem:[%s1 + $0x48] sm:$0xff]
  %v89 = vld [vmem:[%s1 + $0x50] sm:$0xff]
  %v90 = vld [vmem:[%s1 + $0x58] sm:$0xff]
  %v91 = vld [vmem:[%s1 + $0x60] sm:$0xff]
  %v92 = vld [vmem:[%s1 + $0x68] sm:$0xff]
  %v93 = vld [vmem:[%s1 + $0x70] sm:$0xff]
  %v94 = vld [vmem:[%s1 + $0x78] sm:$0xff]
  %v95 = vld [vmem:[%s1 + $0x80] sm:$0xff]
  %v96 = vld [vmem:[%s1 + $0x88] sm:$0xff]
  %v97 = vld [vmem:[%s1 + $0x90] sm:$0xff]
  %v98 = vld [vmem:[%s1 + $0x98] sm:$0xff]
  %v99 = vld [vmem:[%s1 + $0xa0] sm:$0xff]
  %v100 = vld [vmem:[%s1 + $0xa8] sm:$0xff]
  %v101 = vld [vmem:[%s1 + $0xb0] sm:$0xff]
  %v102 = vld [vmem:[%s1 + $0xb8] sm:$0xff]
  %v103 = vld [vmem:[%s1 + $0xc0] sm:$0xff]
  %v104 = vld [vmem:[%s1 + $0xc8] sm:$0xff]
  %v105 = vld [vmem:[%s1 + $0xd0] sm:$0xff]
  %v106 = vld [vmem:[%s1 + $0xd8] sm:$0xff]
  %v107 = vld [vmem:[%s1 + $0xe0] sm:$0xff]
  %v108 = vld [vmem:[%s1 + $0xe8] sm:$0xff]
  %v109 = vld [vmem:[%s1 + $0xf0] sm:$0xff]
  %v110 = vld [vmem:[%s1 + $0xf8] sm:$0xff]
  %v111 = vld [vmem:[%s1 + $0x100] sm:$0xff]
  %v112 = vld [vmem:[%s1 + $0x108] sm:$0xff]
  %v113 = vld [vmem:[%s1 + $0x110] sm:$0xff]
  %v114 = vld [vmem:[%s1 + $0x118] sm:$0xff]
  %v115 = vld [vmem:[%s1 + $0x120] sm:$0xff]
  %v116 = vld [vmem:[%s1 + $0x128] sm:$0xff]
  %v117 = vld [vmem:[%s1 + $0x130] sm:$0xff]
  %v118 = vld [vmem:[%s1 + $0x138] sm:$0xff]
  %v119 = vld [vmem:[%s1 + $0x140] sm:$0xff]
  %v120 = vld [vmem:[%s1 + $0x148] sm:$0xff]
  %v121 = vld [vmem:[%s1 + $0x150] sm:$0xff]
  %v122 = vld [vmem:[%s1 + $0x158] sm:$0xff]
  %v123 = vld [vmem:[%s1 + $0x160] sm:$0xff]
  %v124 = vld [vmem:[%s1 + $0x168] sm:$0xff]
  %v125 = vld [vmem:[%s1 + $0x170] sm:$0xff]
  %v126 = vld [vmem:[%s1 + $0x178] sm:$0xff]
  %v127 = vld [vmem:[%s1 + $0x180] sm:$0xff]
  %v128 = vld [vmem:[%s1 + $0x188] sm:$0xff]
  %v129 = vld [vmem:[%s1 + $0x190] sm:$0xff]
  %v130 = vld [vmem:[%s1 + $0x198] sm:$0xff]
  %v131 = vld [vmem:[%s1 + $0x1a0] sm:$0xff]
  %v132 = vld [vmem:[%s1 + $0x1a8] sm:$0xff]
  %v133 = vld [vmem:[%s1 + $0x1b0] sm:$0xff]
  %v134 = vld [vmem:[%s1 + $0x1b8] sm:$0xff]
  %v135 = vld [vmem:[%s1 + $0x1c0] sm:$0xff]
  %v136 = vld [vmem:[%s1 + $0x1c8] sm:$0xff]
  %v137 = vld [vmem:[%s1 + $0x1d0] sm:$0xff]
  %v138 = vld [vmem:[%s1 + $0x1d8] sm:$0xff]
  %v139 = vld [vmem:[%s1 + $0x1e0] sm:$0xff]
  %v140 = vld [vmem:[%s1 + $0x1e8] sm:$0xff]
  %v141 = vld [vmem:[%s1 + $0x1f0] sm:$0xff]
  %v142 = vld [vmem:[%s1 + $0x1f8] sm:$0xff]
  %v143 = vld [vmem:[%s1 + $0x200] sm:$0xff]
  %v144 = vld [vmem:[%s1 + $0x208] sm:$0xff]
  %v145 = vld [vmem:[%s1 + $0x210] sm:$0xff]
  %v146 = vld [vmem:[%s1 + $0x218] sm:$0xff]
  %v147 = vld [vmem:[%s1 + $0x220] sm:$0xff]
  %v148 = vld [vmem:[%s1 + $0x228] sm:$0xff]
  %v149 = vld [vmem:[%s1 + $0x230] sm:$0xff]
  %v150 = vld [vmem:[%s1 + $0x238] sm:$0xff]
  %v151 = vld [vmem:[%s2] sm:$0x1]
  %v153 = vlaneseq
  %v154 = vshrl.u32 %v153, 7
  %v155 = vsub.s32 0, %v154
  %v156 = vrot.slane %v151, %v155
  %vm158 = vcmask 523264
  %v160 = vsel %vm158, %v18, 0
  %v163 = vsel %vm158, %v23, 0
  %v166 = vsel %vm158, %v28, 0
  %v169 = vsel %vm158, %v33, 0
  %v172 = vsel %vm158, %v38, 0
  %v175 = vsel %vm158, %v43, 0
  %v178 = vsel %vm158, %v48, 0
  %v181 = vsel %vm158, %v53, 0
  %v184 = vsel %vm158, %v58, 0
  %v187 = vsel %vm158, %v63, 0
  %v190 = vsel %vm158, %v68, 0
  %v193 = vsel %vm158, %v73, 0
  %v196 = vsel %vm158, %v78, 0
  %198 = vmatprep.subr.mxu0 0.0
  %199 = vmatpush1.msra.mxu0 %v79
  %200 = vmatprep.subr.mxu0 0.0
  %201 = vmatpush1.msra.mxu0 %v80
  %202 = vmatprep.subr.mxu0 0.0
  %203 = vmatpush1.msra.mxu0 %v81
  %204 = vmatprep.subr.mxu0 0.0
  %205 = vmatpush1.msra.mxu0 %v82
  %206 = vmatprep.subr.mxu0 0.0
  %207 = vmatpush1.msra.mxu0 %v83
  %208 = vmatprep.subr.mxu0 0.0
  %209 = vmatpush1.msra.mxu0 %v84
  %210 = vmatprep.subr.mxu0 0.0
  %211 = vmatpush1.msra.mxu0 %v85
  %212 = vmatprep.subr.mxu0 0.0
  %213 = vmatpush1.msra.mxu0 %v86
  %214 = vmatprep.subr.mxu0 0.0
  %215 = vmatpush1.msra.mxu0 %v87
  %216 = vmatprep.subr.mxu0 0.0
  %217 = vmatpush1.msra.mxu0 %v88
  %218 = vmatprep.subr.mxu0 0.0
  %219 = vmatpush1.msra.mxu0 %v89
  %220 = vmatprep.subr.mxu0 0.0
  %221 = vmatpush1.msra.mxu0 %v90
  %222 = vmatprep.subr.mxu0 0.0
  %223 = vmatpush1.msra.mxu0 %v91
  %224 = vmatprep.subr.mxu0 0.0
  %225 = vmatpush1.msra.mxu0 %v92
  %226 = vmatprep.subr.mxu0 0.0
  %227 = vmatpush1.msra.mxu0 %v93
  %228 = vmatprep.subr.mxu0 0.0
  %229 = vmatpush1.msra.mxu0 %v94
  %230 = vmatprep.subr.mxu0 0.0
  %231 = vmatpush1.msra.mxu0 %v95
  %232 = vmatprep.subr.mxu0 0.0
  %233 = vmatpush1.msra.mxu0 %v96
  %234 = vmatprep.subr.mxu0 0.0
  %235 = vmatpush1.msra.mxu0 %v97
  %236 = vmatprep.subr.mxu0 0.0
  %237 = vmatpush1.msra.mxu0 %v98
  %238 = vmatprep.subr.mxu0 0.0
  %239 = vmatpush1.msra.mxu0 %v99
  %240 = vmatprep.subr.mxu0 0.0
  %241 = vmatpush1.msra.mxu0 %v100
  %242 = vmatprep.subr.mxu0 0.0
  %243 = vmatpush1.msra.mxu0 %v101
  %244 = vmatprep.subr.mxu0 0.0
  %245 = vmatpush1.msra.mxu0 %v102
  %246 = vmatprep.subr.mxu0 0.0
  %247 = vmatpush1.msra.mxu0 %v103
  %248 = vmatprep.subr.mxu0 0.0
  %249 = vmatpush1.msra.mxu0 %v104
  %250 = vmatprep.subr.mxu0 0.0
  %251 = vmatpush1.msra.mxu0 %v105
  %252 = vmatprep.subr.mxu0 0.0
  %253 = vmatpush1.msra.mxu0 %v106
  %254 = vmatprep.subr.mxu0 0.0
  %255 = vmatpush1.msra.mxu0 %v107
  %256 = vmatprep.subr.mxu0 0.0
  %257 = vmatpush1.msra.mxu0 %v108
  %258 = vmatprep.subr.mxu0 0.0
  %259 = vmatpush1.msra.mxu0 %v109
  %260 = vmatprep.subr.mxu0 0.0
  %261 = vmatpush1.msra.mxu0 %v110
  %262 = vmatprep.mubr.f32.mxu0 %v15
  %263 = vmatmul.mubr.f32.gmra.mrb[0].mxu0 %v14
  %v264 = vpop.f32.mrb[0].mxu0
  %v265 = vadd.f32 %v156, %v264
  %v266 = vpop.f32.mrb[0].mxu0
  %267 = vmatprep.mubr.f32.mxu0 %v20
  %268 = vmatmul.mubr.f32.gmra.mrb[0].mxu0 %v19
  %v269 = vpop.f32.mrb[0].mxu0
  %v270 = vadd.f32 %v156, %v269
  %v271 = vpop.f32.mrb[0].mxu0
  %272 = vmatprep.mubr.f32.mxu0 %v25
  %273 = vmatmul.mubr.f32.gmra.mrb[0].mxu0 %v24
  %v274 = vpop.f32.mrb[0].mxu0
  %v275 = vadd.f32 %v156, %v274
  %v276 = vpop.f32.mrb[0].mxu0
  %277 = vmatprep.mubr.f32.mxu0 %v30
  %278 = vmatmul.mubr.f32.gmra.mrb[0].mxu0 %v29
  %v279 = vpop.f32.mrb[0].mxu0
  %v280 = vadd.f32 %v156, %v279
  %v281 = vpop.f32.mrb[0].mxu0
  %282 = vmatprep.mubr.f32.mxu0 %v35
  %283 = vmatmul.mubr.f32.gmra.mrb[0].mxu0 %v34
  %v284 = vpop.f32.mrb[0].mxu0
  %v285 = vadd.f32 %v156, %v284
  %v286 = vpop.f32.mrb[0].mxu0
  %287 = vmatprep.mubr.f32.mxu0 %v40
  %288 = vmatmul.mubr.f32.gmra.mrb[0].mxu0 %v39
  %v289 = vpop.f32.mrb[0].mxu0
  %v290 = vadd.f32 %v156, %v289
  %v291 = vpop.f32.mrb[0].mxu0
  %292 = vmatprep.mubr.f32.mxu0 %v45
  %293 = vmatmul.mubr.f32.gmra.mrb[0].mxu0 %v44
  %v294 = vpop.f32.mrb[0].mxu0
  %v295 = vadd.f32 %v156, %v294
  %v296 = vpop.f32.mrb[0].mxu0
  %297 = vmatprep.mubr.f32.mxu0 %v50
  %298 = vmatmul.mubr.f32.gmra.mrb[0].mxu0 %v49
  %v299 = vpop.f32.mrb[0].mxu0
  %v300 = vadd.f32 %v156, %v299
  %v301 = vpop.f32.mrb[0].mxu0
  %302 = vmatprep.mubr.f32.mxu0 %v55
  %303 = vmatmul.mubr.f32.gmra.mrb[0].mxu0 %v54
  %v304 = vpop.f32.mrb[0].mxu0
  %v305 = vadd.f32 %v156, %v304
  %v306 = vpop.f32.mrb[0].mxu0
  %307 = vmatprep.mubr.f32.mxu0 %v60
  %308 = vmatmul.mubr.f32.gmra.mrb[0].mxu0 %v59
  %v309 = vpop.f32.mrb[0].mxu0
  %v310 = vadd.f32 %v156, %v309
  %v311 = vpop.f32.mrb[0].mxu0
  %312 = vmatprep.mubr.f32.mxu0 %v65
  %313 = vmatmul.mubr.f32.gmra.mrb[0].mxu0 %v64
  %v314 = vpop.f32.mrb[0].mxu0
  %v315 = vadd.f32 %v156, %v314
  %v316 = vpop.f32.mrb[0].mxu0
  %317 = vmatprep.mubr.f32.mxu0 %v70
  %318 = vmatmul.mubr.f32.gmra.mrb[0].mxu0 %v69
  %v319 = vpop.f32.mrb[0].mxu0
  %v320 = vadd.f32 %v156, %v319
  %v321 = vpop.f32.mrb[0].mxu0
  %322 = vmatprep.mubr.f32.mxu0 %v75
  %323 = vmatmul.mubr.f32.gmra.mrb[0].mxu0 %v74
  %v324 = vpop.f32.mrb[0].mxu0
  %v325 = vadd.f32 %v156, %v324
  %v326 = vpop.f32.mrb[0].mxu0
  %327 = vdwg.mxu0
  %328 = vmatprep.subr.mxu0 0.0
  %329 = vmatpush1.msra.mxu0 %v111
  %330 = vmatprep.subr.mxu0 0.0
  %331 = vmatpush1.msra.mxu0 %v112
  %332 = vmatprep.subr.mxu0 0.0
  %333 = vmatpush1.msra.mxu0 %v113
  %334 = vmatprep.subr.mxu0 0.0
  %335 = vmatpush1.msra.mxu0 %v114
  %336 = vmatprep.subr.mxu0 0.0
  %337 = vmatpush1.msra.mxu0 %v115
  %338 = vmatprep.subr.mxu0 0.0
  %339 = vmatpush1.msra.mxu0 %v116
  %340 = vmatprep.subr.mxu0 0.0
  %341 = vmatpush1.msra.mxu0 %v117
  %342 = vmatprep.subr.mxu0 0.0
  %343 = vmatpush1.msra.mxu0 %v118
  %344 = vmatprep.subr.mxu0 0.0
  %345 = vmatpush1.msra.mxu0 %v119
  %346 = vmatprep.subr.mxu0 0.0
  %347 = vmatpush1.msra.mxu0 %v120
  %348 = vmatprep.subr.mxu0 0.0
  %349 = vmatpush1.msra.mxu0 %v121
  %350 = vmatprep.subr.mxu0 0.0
  %351 = vmatpush1.msra.mxu0 %v122
  %352 = vmatprep.subr.mxu0 0.0
  %353 = vmatpush1.msra.mxu0 %v123
  %354 = vmatprep.subr.mxu0 0.0
  %355 = vmatpush1.msra.mxu0 %v124
  %356 = vmatprep.subr.mxu0 0.0
  %357 = vmatpush1.msra.mxu0 %v125
  %358 = vmatprep.subr.mxu0 0.0
  %359 = vmatpush1.msra.mxu0 %v126
  %360 = vmatprep.subr.mxu0 0.0
  %361 = vmatpush1.msra.mxu0 %v127
  %362 = vmatprep.subr.mxu0 0.0
  %363 = vmatpush1.msra.mxu0 %v128
  %364 = vmatprep.subr.mxu0 0.0
  %365 = vmatpush1.msra.mxu0 %v129
  %366 = vmatprep.subr.mxu0 0.0
  %367 = vmatpush1.msra.mxu0 %v130
  %368 = vmatprep.subr.mxu0 0.0
  %369 = vmatpush1.msra.mxu0 %v131
  %370 = vmatprep.subr.mxu0 0.0
  %371 = vmatpush1.msra.mxu0 %v132
  %372 = vmatprep.subr.mxu0 0.0
  %373 = vmatpush1.msra.mxu0 %v133
  %374 = vmatprep.subr.mxu0 0.0
  %375 = vmatpush1.msra.mxu0 %v134
  %376 = vmatprep.subr.mxu0 0.0
  %377 = vmatpush1.msra.mxu0 %v135
  %378 = vmatprep.subr.mxu0 0.0
  %379 = vmatpush1.msra.mxu0 %v136
  %380 = vmatprep.subr.mxu0 0.0
  %381 = vmatpush1.msra.mxu0 %v137
  %382 = vmatprep.subr.mxu0 0.0
  %383 = vmatpush1.msra.mxu0 %v138
  %384 = vmatprep.subr.mxu0 0.0
  %385 = vmatpush1.msra.mxu0 %v139
  %386 = vmatprep.subr.mxu0 0.0
  %387 = vmatpush1.msra.mxu0 %v140
  %388 = vmatprep.subr.mxu0 0.0
  %389 = vmatpush1.msra.mxu0 %v141
  %390 = vmatprep.subr.mxu0 0.0
  %391 = vmatpush1.msra.mxu0 %v142
  %392 = vmatprep.mubr.f32.mxu0 %v17
  %393 = vmatmul.mubr.f32.gmra.mrb[0].mxu0 %v16
  %v394 = vpop.f32.mrb[0].mxu0
  %v395 = vadd.f32 %v265, %v394
  %v396 = vpop.f32.mrb[0].mxu0
  %397 = vmatprep.mubr.f32.mxu0 %v22
  %398 = vmatmul.mubr.f32.gmra.mrb[0].mxu0 %v21
  %v399 = vpop.f32.mrb[0].mxu0
  %v400 = vadd.f32 %v270, %v399
  %v401 = vpop.f32.mrb[0].mxu0
  %402 = vmatprep.mubr.f32.mxu0 %v27
  %403 = vmatmul.mubr.f32.gmra.mrb[0].mxu0 %v26
  %v404 = vpop.f32.mrb[0].mxu0
  %v405 = vadd.f32 %v275, %v404
  %v406 = vpop.f32.mrb[0].mxu0
  %407 = vmatprep.mubr.f32.mxu0 %v32
  %408 = vmatmul.mubr.f32.gmra.mrb[0].mxu0 %v31
  %v409 = vpop.f32.mrb[0].mxu0
  %v410 = vadd.f32 %v280, %v409
  %v411 = vpop.f32.mrb[0].mxu0
  %412 = vmatprep.mubr.f32.mxu0 %v37
  %413 = vmatmul.mubr.f32.gmra.mrb[0].mxu0 %v36
  %v414 = vpop.f32.mrb[0].mxu0
  %v415 = vadd.f32 %v285, %v414
  %v416 = vpop.f32.mrb[0].mxu0
  %417 = vmatprep.mubr.f32.mxu0 %v42
  %418 = vmatmul.mubr.f32.gmra.mrb[0].mxu0 %v41
  %v419 = vpop.f32.mrb[0].mxu0
  %v420 = vadd.f32 %v290, %v419
  %v421 = vpop.f32.mrb[0].mxu0
  %422 = vmatprep.mubr.f32.mxu0 %v47
  %423 = vmatmul.mubr.f32.gmra.mrb[0].mxu0 %v46
  %v424 = vpop.f32.mrb[0].mxu0
  %v425 = vadd.f32 %v295, %v424
  %v426 = vpop.f32.mrb[0].mxu0
  %427 = vmatprep.mubr.f32.mxu0 %v52
  %428 = vmatmul.mubr.f32.gmra.mrb[0].mxu0 %v51
  %v429 = vpop.f32.mrb[0].mxu0
  %v430 = vadd.f32 %v300, %v429
  %v431 = vpop.f32.mrb[0].mxu0
  %432 = vmatprep.mubr.f32.mxu0 %v57
  %433 = vmatmul.mubr.f32.gmra.mrb[0].mxu0 %v56
  %v434 = vpop.f32.mrb[0].mxu0
  %v435 = vadd.f32 %v305, %v434
  %v436 = vpop.f32.mrb[0].mxu0
  %437 = vmatprep.mubr.f32.mxu0 %v62
  %438 = vmatmul.mubr.f32.gmra.mrb[0].mxu0 %v61
  %v439 = vpop.f32.mrb[0].mxu0
  %v440 = vadd.f32 %v310, %v439
  %v441 = vpop.f32.mrb[0].mxu0
  %442 = vmatprep.mubr.f32.mxu0 %v67
  %443 = vmatmul.mubr.f32.gmra.mrb[0].mxu0 %v66
  %v444 = vpop.f32.mrb[0].mxu0
  %v445 = vadd.f32 %v315, %v444
  %v446 = vpop.f32.mrb[0].mxu0
  %447 = vmatprep.mubr.f32.mxu0 %v72
  %448 = vmatmul.mubr.f32.gmra.mrb[0].mxu0 %v71
  %v449 = vpop.f32.mrb[0].mxu0
  %v450 = vadd.f32 %v320, %v449
  %v451 = vpop.f32.mrb[0].mxu0
  %452 = vmatprep.mubr.f32.mxu0 %v77
  %453 = vmatmul.mubr.f32.gmra.mrb[0].mxu0 %v76
  %v454 = vpop.f32.mrb[0].mxu0
  %v455 = vadd.f32 %v325, %v454
  %v456 = vpop.f32.mrb[0].mxu0
  %457 = vdwg.mxu0
  %458 = vmatprep.subr.mxu0 0.0
  %459 = vmatpush1.msra.mxu0 %v143
  %460 = vmatprep.subr.mxu0 0.0
  %461 = vmatpush1.msra.mxu0 %v144
  %462 = vmatprep.subr.mxu0 0.0
  %463 = vmatpush1.msra.mxu0 %v145
  %464 = vmatprep.subr.mxu0 0.0
  %465 = vmatpush1.msra.mxu0 %v146
  %466 = vmatprep.subr.mxu0 0.0
  %467 = vmatpush1.msra.mxu0 %v147
  %468 = vmatprep.subr.mxu0 0.0
  %469 = vmatpush1.msra.mxu0 %v148
  %470 = vmatprep.subr.mxu0 0.0
  %471 = vmatpush1.msra.mxu0 %v149
  %472 = vmatprep.subr.mxu0 0.0
  %473 = vmatpush1.msra.mxu0 %v150
  %474 = vmatprep.subr.mxu0 0.0
  %475 = vmatpush1.msra.mxu0 0.0
  %476 = vmatprep.subr.mxu0 0.0
  %477 = vmatpush1.msra.mxu0 0.0
  %478 = vmatprep.subr.mxu0 0.0
  %479 = vmatpush1.msra.mxu0 0.0
  %480 = vmatprep.subr.mxu0 0.0
  %481 = vmatpush1.msra.mxu0 0.0
  %482 = vmatprep.subr.mxu0 0.0
  %483 = vmatpush1.msra.mxu0 0.0
  %484 = vmatprep.subr.mxu0 0.0
  %485 = vmatpush1.msra.mxu0 0.0
  %486 = vmatprep.subr.mxu0 0.0
  %487 = vmatpush1.msra.mxu0 0.0
  %488 = vmatprep.subr.mxu0 0.0
  %489 = vmatpush1.msra.mxu0 0.0
  %490 = vmatprep.subr.mxu0 0.0
  %491 = vmatpush1.msra.mxu0 0.0
  %492 = vmatprep.subr.mxu0 0.0
  %493 = vmatpush1.msra.mxu0 0.0
  %494 = vmatprep.subr.mxu0 0.0
  %495 = vmatpush1.msra.mxu0 0.0
  %496 = vmatprep.subr.mxu0 0.0
  %497 = vmatpush1.msra.mxu0 0.0
  %498 = vmatprep.subr.mxu0 0.0
  %499 = vmatpush1.msra.mxu0 0.0
  %500 = vmatprep.subr.mxu0 0.0
  %501 = vmatpush1.msra.mxu0 0.0
  %502 = vmatprep.subr.mxu0 0.0
  %503 = vmatpush1.msra.mxu0 0.0
  %504 = vmatprep.subr.mxu0 0.0
  %505 = vmatpush1.msra.mxu0 0.0
  %506 = vmatprep.subr.mxu0 0.0
  %507 = vmatpush1.msra.mxu0 0.0
  %508 = vmatprep.subr.mxu0 0.0
  %509 = vmatpush1.msra.mxu0 0.0
  %510 = vmatprep.subr.mxu0 0.0
  %511 = vmatpush1.msra.mxu0 0.0
  %512 = vmatprep.subr.mxu0 0.0
  %513 = vmatpush1.msra.mxu0 0.0
  %514 = vmatprep.subr.mxu0 0.0
  %515 = vmatpush1.msra.mxu0 0.0
  %516 = vmatprep.subr.mxu0 0.0
  %517 = vmatpush1.msra.mxu0 0.0
  %518 = vmatprep.subr.mxu0 0.0
  %519 = vmatpush1.msra.mxu0 0.0
  %520 = vmatprep.subr.mxu0 0.0
  %521 = vmatpush1.msra.mxu0 0.0
  %522 = vmatprep.mubr.f32.mxu0 0.0
  %523 = vmatmul.mubr.f32.gmra.mrb[0].mxu0 %v160
  %v524 = vpop.f32.mrb[0].mxu0
  %v525 = vadd.f32 %v395, %v524
  %v526 = vpop.f32.mrb[0].mxu0
  %527 = vmatprep.mubr.f32.mxu0 0.0
  %528 = vmatmul.mubr.f32.gmra.mrb[0].mxu0 %v163
  %v529 = vpop.f32.mrb[0].mxu0
  %v530 = vadd.f32 %v400, %v529
  %v531 = vpop.f32.mrb[0].mxu0
  %532 = vmatprep.mubr.f32.mxu0 0.0
  %533 = vmatmul.mubr.f32.gmra.mrb[0].mxu0 %v166
  %v534 = vpop.f32.mrb[0].mxu0
  %v535 = vadd.f32 %v405, %v534
  %v536 = vpop.f32.mrb[0].mxu0
  %537 = vmatprep.mubr.f32.mxu0 0.0
  %538 = vmatmul.mubr.f32.gmra.mrb[0].mxu0 %v169
  %v539 = vpop.f32.mrb[0].mxu0
  %v540 = vadd.f32 %v410, %v539
  %v541 = vpop.f32.mrb[0].mxu0
  %542 = vmatprep.mubr.f32.mxu0 0.0
  %543 = vmatmul.mubr.f32.gmra.mrb[0].mxu0 %v172
  %v544 = vpop.f32.mrb[0].mxu0
  %v545 = vadd.f32 %v415, %v544
  %v546 = vpop.f32.mrb[0].mxu0
  %547 = vmatprep.mubr.f32.mxu0 0.0
  %548 = vmatmul.mubr.f32.gmra.mrb[0].mxu0 %v175
  %v549 = vpop.f32.mrb[0].mxu0
  %v550 = vadd.f32 %v420, %v549
  %v551 = vpop.f32.mrb[0].mxu0
  %552 = vmatprep.mubr.f32.mxu0 0.0
  %553 = vmatmul.mubr.f32.gmra.mrb[0].mxu0 %v178
  %v554 = vpop.f32.mrb[0].mxu0
  %v555 = vadd.f32 %v425, %v554
  %v556 = vpop.f32.mrb[0].mxu0
  %557 = vmatprep.mubr.f32.mxu0 0.0
  %558 = vmatmul.mubr.f32.gmra.mrb[0].mxu0 %v181
  %v559 = vpop.f32.mrb[0].mxu0
  %v560 = vadd.f32 %v430, %v559
  %v561 = vpop.f32.mrb[0].mxu0
  %562 = vmatprep.mubr.f32.mxu0 0.0
  %563 = vmatmul.mubr.f32.gmra.mrb[0].mxu0 %v184
  %v564 = vpop.f32.mrb[0].mxu0
  %v565 = vadd.f32 %v435, %v564
  %v566 = vpop.f32.mrb[0].mxu0
  %567 = vmatprep.mubr.f32.mxu0 0.0
  %568 = vmatmul.mubr.f32.gmra.mrb[0].mxu0 %v187
  %v569 = vpop.f32.mrb[0].mxu0
  %v570 = vadd.f32 %v440, %v569
  %v571 = vpop.f32.mrb[0].mxu0
  %572 = vmatprep.mubr.f32.mxu0 0.0
  %573 = vmatmul.mubr.f32.gmra.mrb[0].mxu0 %v190
  %v574 = vpop.f32.mrb[0].mxu0
  %v575 = vadd.f32 %v445, %v574
  %v576 = vpop.f32.mrb[0].mxu0
  %577 = vmatprep.mubr.f32.mxu0 0.0
  %578 = vmatmul.mubr.f32.gmra.mrb[0].mxu0 %v193
  %v579 = vpop.f32.mrb[0].mxu0
  %v580 = vadd.f32 %v450, %v579
  %v581 = vpop.f32.mrb[0].mxu0
  %582 = vmatprep.mubr.f32.mxu0 0.0
  %583 = vmatmul.mubr.f32.gmra.mrb[0].mxu0 %v196
  %v584 = vpop.f32.mrb[0].mxu0
  %v585 = vadd.f32 %v455, %v584
  %v586 = vpop.f32.mrb[0].mxu0
  %587 = vdwg.mxu0
  %v588 = vmax.f32 %v525, 0.0
  %v589 = vmax.f32 %v530, 0.0
  %v590 = vmax.f32 %v535, 0.0
  %v591 = vmax.f32 %v540, 0.0
  %v592 = vmax.f32 %v545, 0.0
  %v593 = vmax.f32 %v550, 0.0
  %v594 = vmax.f32 %v555, 0.0
  %v595 = vmax.f32 %v560, 0.0
  %v596 = vmax.f32 %v565, 0.0
  %v597 = vmax.f32 %v570, 0.0
  %v598 = vmax.f32 %v575, 0.0
  %v599 = vmax.f32 %v580, 0.0
  %v600 = vmax.f32 %v585, 0.0
  %601 = vst [vmem:[%s3] sm:$0xff] %v588
  %602 = vst [vmem:[%s3 + $0x8] sm:$0xff] %v589
  %603 = vst [vmem:[%s3 + $0x10] sm:$0xff] %v590
  %604 = vst [vmem:[%s3 + $0x18] sm:$0xff] %v591
  %605 = vst [vmem:[%s3 + $0x20] sm:$0xff] %v592
  %606 = vst [vmem:[%s3 + $0x28] sm:$0xff] %v593
  %607 = vst [vmem:[%s3 + $0x30] sm:$0xff] %v594
  %608 = vst [vmem:[%s3 + $0x38] sm:$0xff] %v595
  %609 = vst [vmem:[%s3 + $0x40] sm:$0xff] %v596
  %610 = vst [vmem:[%s3 + $0x48] sm:$0xff] %v597
  %611 = vst [vmem:[%s3 + $0x50] sm:$0xff] %v598
  %612 = vst [vmem:[%s3 + $0x58] sm:$0xff] %v599
  %613 = vst [vmem:[%s3 + $0x60] sm:$0x3] %v600
  // Predicated region
  $region14: #{cnn_base_forward.6} parent=0 // pred_check
    _
  $region15: #{cnn_base_forward.6} parent=0 // pred_check_branch
    %615 = sbr.rel (0) target = $region17
  $region16: #{cnn_base_forward.6} parent=0 // pred_region
    _
  $region17: #{cnn_base_forward.6} parent=0 // pred_fallthru
    _
  // Predicated region
  $region18: #{cnn_base_forward.6} parent=0 // pred_check
    _
  $region19: #{cnn_base_forward.6} parent=0 // pred_check_branch
    %617 = sbr.rel (0) target = $region21
  $region20: #{cnn_base_forward.6} parent=0 // pred_region
    _
  $region21: #{cnn_base_forward.6} parent=0 // pred_fallthru
    _

// kernel: cnn_base_forward.7
$region0: #{cnn_base_forward.7}
  #allocation0 [shape = 'u32[]', space=smem, size = 0x4, offset = 0x4, fixed_abs, tag = 'smem constant byte address 0x4 - core index']
  #allocation1 [shape = 'u32[144,128]{1,0:T(1,128)}', space=vmem, size = 0x12000, scoped, tag = 'internal scratch']
  %s0 = inlined_call_operand.vmem [shape: f32[2,1568], index: 0, kind: input, shape index: {}]
  %s1 = inlined_call_operand.vmem [shape: f32[1568,256], index: 1, kind: input, shape index: {}]
  %s2 = inlined_call_operand.vmem [shape: f32[1,256], index: 2, kind: input, shape index: {}]
  %s3 = inlined_call_operand.vmem [shape: f32[256,128], index: 3, kind: input, shape index: {}]
  %s4 = inlined_call_operand.vmem [shape: f32[1,128], index: 4, kind: input, shape index: {}]
  %s5 = inlined_call_operand.hbm [shape: f32[2,256], index: 5, kind: output, shape index: {0}]
  %s6 = inlined_call_operand.vmem [shape: f32[2,128], index: 6, kind: output, shape index: {1}]
  %7 = xla_tuple %s5, %s6
  %s8 = sld [smem:[#allocation0]]
  $region38: #{cnn_base_forward.7} parent=0
    _
  %s10 = ssub.s32 1, %s8
  %s11 = scalar_select 0, %s10, %s8
  $region1: #{cnn_base_forward.7} parent=0
    #allocation2 [shape = 'u8[2048]{0}', space=vmem, size = 0x800, scoped, tag = 'output window, operand 0, single buffered']
    #allocation3 [shape = 's32[1]{0}', space=sflag, size = 0x4, scoped, tag = 'scoped memory for cnn_base_forward.7']
    %12 = vsyncpa [#allocation3], 0
    // Predicated region
    $region2: #{cnn_base_forward.7} parent=1 // pred_check
      _
    $region3: #{cnn_base_forward.7} parent=1 // pred_check_branch
      %14 = sbr.rel (0) target = $region5
    $region4: #{cnn_base_forward.7} parent=1 // pred_region
      _
    $region5: #{cnn_base_forward.7} parent=1 // pred_fallthru
      _
    // Predicated region
    $region6: #{cnn_base_forward.7} parent=1 // pred_check
      _
    $region7: #{cnn_base_forward.7} parent=1 // pred_check_branch
      %16 = sbr.rel (0) target = $region9
    $region8: #{cnn_base_forward.7} parent=1 // pred_region
      _
    $region9: #{cnn_base_forward.7} parent=1 // pred_fallthru
      _
    // Predicated region
    $region10: #{cnn_base_forward.7} parent=1 // pred_check
      _
    $region11: #{cnn_base_forward.7} parent=1 // pred_check_branch
      %18 = sbr.rel (0) target = $region13
    $region12: #{cnn_base_forward.7} parent=1 // pred_region
      _
    $region13: #{cnn_base_forward.7} parent=1 // pred_fallthru
      _
    // Predicated region
    $region14: #{cnn_base_forward.7} parent=1 // pred_check
      _
    $region15: #{cnn_base_forward.7} parent=1 // pred_check_branch
      %20 = sbr.rel (0) target = $region17
    $region16: #{cnn_base_forward.7} parent=1 // pred_region
      _
    $region17: #{cnn_base_forward.7} parent=1 // pred_fallthru
      _
    // Predicated region
    $region18: #{cnn_base_forward.7} parent=1 // pred_check
      _
    $region19: #{cnn_base_forward.7} parent=1 // pred_check_branch
      %22 = sbr.rel (0) target = $region21
    $region20: #{cnn_base_forward.7} parent=1 // pred_region
      _
    $region21: #{cnn_base_forward.7} parent=1 // pred_fallthru
      _
    %v23 = vld [vmem:[%s0] sm:$0xff]
    %v24 = vld [vmem:[%s0 + $0x8] sm:$0xff]
    %v25 = vld [vmem:[%s0 + $0x10] sm:$0xff]
    %v26 = vld [vmem:[%s0 + $0x18] sm:$0x3]
    %v27 = vld [vmem:[%s1] sm:$0xff]
    %v28 = vld [vmem:[%s1 + $0x8] sm:$0xff]
    %v29 = vld [vmem:[%s1 + $0x10] sm:$0xff]
    %v30 = vld [vmem:[%s1 + $0x18] sm:$0xff]
    %v31 = vld [vmem:[%s1 + $0x20] sm:$0xff]
    %v32 = vld [vmem:[%s1 + $0x28] sm:$0xff]
    %v33 = vld [vmem:[%s1 + $0x30] sm:$0xff]
    %v34 = vld [vmem:[%s1 + $0x38] sm:$0xff]
    %v35 = vld [vmem:[%s1 + $0x40] sm:$0xff]
    %v36 = vld [vmem:[%s1 + $0x48] sm:$0xff]
    %v37 = vld [vmem:[%s1 + $0x50] sm:$0xff]
    %v38 = vld [vmem:[%s1 + $0x58] sm:$0xff]
    %v39 = vld [vmem:[%s1 + $0x60] sm:$0xff]
    %v40 = vld [vmem:[%s1 + $0x68] sm:$0xff]
    %v41 = vld [vmem:[%s1 + $0x70] sm:$0xff]
    %v42 = vld [vmem:[%s1 + $0x78] sm:$0xff]
    %v43 = vld [vmem:[%s1 + $0x80] sm:$0xff]
    %v44 = vld [vmem:[%s1 + $0x88] sm:$0xff]
    %v45 = vld [vmem:[%s1 + $0x90] sm:$0xff]
    %v46 = vld [vmem:[%s1 + $0x98] sm:$0xff]
    %v47 = vld [vmem:[%s1 + $0xa0] sm:$0xff]
    %v48 = vld [vmem:[%s1 + $0xa8] sm:$0xff]
    %v49 = vld [vmem:[%s1 + $0xb0] sm:$0xff]
    %v50 = vld [vmem:[%s1 + $0xb8] sm:$0xff]
    %v51 = vld [vmem:[%s1 + $0xc0] sm:$0xff]
    %v52 = vld [vmem:[%s1 + $0xc8] sm:$0xff]
    %v53 = vld [vmem:[%s1 + $0xd0] sm:$0xff]
    %v54 = vld [vmem:[%s1 + $0xd8] sm:$0xff]
    %v55 = vld [vmem:[%s1 + $0xe0] sm:$0xff]
    %v56 = vld [vmem:[%s1 + $0xe8] sm:$0xff]
    %v57 = vld [vmem:[%s1 + $0xf0] sm:$0xff]
    %v58 = vld [vmem:[%s1 + $0xf8] sm:$0xff]
    %v59 = vld [vmem:[%s1 + $0x100] sm:$0xff]
    %v60 = vld [vmem:[%s1 + $0x108] sm:$0xff]
    %v61 = vld [vmem:[%s1 + $0x110] sm:$0xff]
    %v62 = vld [vmem:[%s1 + $0x118] sm:$0xff]
    %v63 = vld [vmem:[%s1 + $0x120] sm:$0xff]
    %v64 = vld [vmem:[%s1 + $0x128] sm:$0xff]
    %v65 = vld [vmem:[%s1 + $0x130] sm:$0xff]
    %v66 = vld [vmem:[%s1 + $0x138] sm:$0xff]
    %v67 = vld [vmem:[%s1 + $0x140] sm:$0xff]
    %v68 = vld [vmem:[%s1 + $0x148] sm:$0xff]
    %v69 = vld [vmem:[%s1 + $0x150] sm:$0xff]
    %v70 = vld [vmem:[%s1 + $0x158] sm:$0xff]
    %v71 = vld [vmem:[%s1 + $0x160] sm:$0xff]
    %v72 = vld [vmem:[%s1 + $0x168] sm:$0xff]
    %v73 = vld [vmem:[%s1 + $0x170] sm:$0xff]
    %v74 = vld [vmem:[%s1 + $0x178] sm:$0xff]
    %v75 = vld [vmem:[%s1 + $0x180] sm:$0xff]
    %v76 = vld [vmem:[%s1 + $0x188] sm:$0xff]
    %v77 = vld [vmem:[%s1 + $0x190] sm:$0xff]
    %v78 = vld [vmem:[%s1 + $0x198] sm:$0xff]
    %v79 = vld [vmem:[%s1 + $0x1a0] sm:$0xff]
    %v80 = vld [vmem:[%s1 + $0x1a8] sm:$0xff]
    %v81 = vld [vmem:[%s1 + $0x1b0] sm:$0xff]
    %v82 = vld [vmem:[%s1 + $0x1b8] sm:$0xff]
    %v83 = vld [vmem:[%s1 + $0x1c0] sm:$0xff]
    %v84 = vld [vmem:[%s1 + $0x1c8] sm:$0xff]
    %v85 = vld [vmem:[%s1 + $0x1d0] sm:$0xff]
    %v86 = vld [vmem:[%s1 + $0x1d8] sm:$0xff]
    %v87 = vld [vmem:[%s1 + $0x1e0] sm:$0xff]
    %v88 = vld [vmem:[%s1 + $0x1e8] sm:$0xff]
    %v89 = vld [vmem:[%s1 + $0x1f0] sm:$0xff]
    %v90 = vld [vmem:[%s1 + $0x1f8] sm:$0xff]
    %v91 = vld [vmem:[%s1 + $0x200] sm:$0xff]
    %v92 = vld [vmem:[%s1 + $0x208] sm:$0xff]
    %v93 = vld [vmem:[%s1 + $0x210] sm:$0xff]
    %v94 = vld [vmem:[%s1 + $0x218] sm:$0xff]
    %v95 = vld [vmem:[%s1 + $0x220] sm:$0xff]
    %v96 = vld [vmem:[%s1 + $0x228] sm:$0xff]
    %v97 = vld [vmem:[%s1 + $0x230] sm:$0xff]
    %v98 = vld [vmem:[%s1 + $0x238] sm:$0xff]
    %v99 = vld [vmem:[%s1 + $0x240] sm:$0xff]
    %v100 = vld [vmem:[%s1 + $0x248] sm:$0xff]
    %v101 = vld [vmem:[%s1 + $0x250] sm:$0xff]
    %v102 = vld [vmem:[%s1 + $0x258] sm:$0xff]
    %v103 = vld [vmem:[%s1 + $0x260] sm:$0xff]
    %v104 = vld [vmem:[%s1 + $0x268] sm:$0xff]
    %v105 = vld [vmem:[%s1 + $0x270] sm:$0xff]
    %v106 = vld [vmem:[%s1 + $0x278] sm:$0xff]
    %v107 = vld [vmem:[%s1 + $0x280] sm:$0xff]
    %v108 = vld [vmem:[%s1 + $0x288] sm:$0xff]
    %v109 = vld [vmem:[%s1 + $0x290] sm:$0xff]
    %v110 = vld [vmem:[%s1 + $0x298] sm:$0xff]
    %v111 = vld [vmem:[%s1 + $0x2a0] sm:$0xff]
    %v112 = vld [vmem:[%s1 + $0x2a8] sm:$0xff]
    %v113 = vld [vmem:[%s1 + $0x2b0] sm:$0xff]
    %v114 = vld [vmem:[%s1 + $0x2b8] sm:$0xff]
    %v115 = vld [vmem:[%s1 + $0x2c0] sm:$0xff]
    %v116 = vld [vmem:[%s1 + $0x2c8] sm:$0xff]
    %v117 = vld [vmem:[%s1 + $0x2d0] sm:$0xff]
    %v118 = vld [vmem:[%s1 + $0x2d8] sm:$0xff]
    %v119 = vld [vmem:[%s1 + $0x2e0] sm:$0xff]
    %v120 = vld [vmem:[%s1 + $0x2e8] sm:$0xff]
    %v121 = vld [vmem:[%s1 + $0x2f0] sm:$0xff]
    %v122 = vld [vmem:[%s1 + $0x2f8] sm:$0xff]
    %v123 = vld [vmem:[%s1 + $0x300] sm:$0xff]
    %v124 = vld [vmem:[%s1 + $0x308] sm:$0xff]
    %v125 = vld [vmem:[%s1 + $0x310] sm:$0xff]
    %v126 = vld [vmem:[%s1 + $0x318] sm:$0xff]
    %v127 = vld [vmem:[%s1 + $0x320] sm:$0xff]
    %v128 = vld [vmem:[%s1 + $0x328] sm:$0xff]
    %v129 = vld [vmem:[%s1 + $0x330] sm:$0xff]
    %v130 = vld [vmem:[%s1 + $0x338] sm:$0xff]
    %v131 = vld [vmem:[%s1 + $0x340] sm:$0xff]
    %v132 = vld [vmem:[%s1 + $0x348] sm:$0xff]
    %v133 = vld [vmem:[%s1 + $0x350] sm:$0xff]
    %v134 = vld [vmem:[%s1 + $0x358] sm:$0xff]
    %v135 = vld [vmem:[%s1 + $0x360] sm:$0xff]
    %v136 = vld [vmem:[%s1 + $0x368] sm:$0xff]
    %v137 = vld [vmem:[%s1 + $0x370] sm:$0xff]
    %v138 = vld [vmem:[%s1 + $0x378] sm:$0xff]
    %v139 = vld [vmem:[%s1 + $0x380] sm:$0xff]
    %v140 = vld [vmem:[%s1 + $0x388] sm:$0xff]
    %v141 = vld [vmem:[%s1 + $0x390] sm:$0xff]
    %v142 = vld [vmem:[%s1 + $0x398] sm:$0xff]
    %v143 = vld [vmem:[%s1 + $0x3a0] sm:$0xff]
    %v144 = vld [vmem:[%s1 + $0x3a8] sm:$0xff]
    %v145 = vld [vmem:[%s1 + $0x3b0] sm:$0xff]
    %v146 = vld [vmem:[%s1 + $0x3b8] sm:$0xff]
    %v147 = vld [vmem:[%s1 + $0x3c0] sm:$0xff]
    %v148 = vld [vmem:[%s1 + $0x3c8] sm:$0xff]
    %v149 = vld [vmem:[%s1 + $0x3d0] sm:$0xff]
    %v150 = vld [vmem:[%s1 + $0x3d8] sm:$0xff]
    %v151 = vld [vmem:[%s1 + $0x3e0] sm:$0xff]
    %v152 = vld [vmem:[%s1 + $0x3e8] sm:$0xff]
    %v153 = vld [vmem:[%s1 + $0x3f0] sm:$0xff]
    %v154 = vld [vmem:[%s1 + $0x3f8] sm:$0xff]
    %v155 = vld [vmem:[%s1 + $0x400] sm:$0xff]
    %v156 = vld [vmem:[%s1 + $0x408] sm:$0xff]
    %v157 = vld [vmem:[%s1 + $0x410] sm:$0xff]
    %v158 = vld [vmem:[%s1 + $0x418] sm:$0xff]
    %v159 = vld [vmem:[%s1 + $0x420] sm:$0xff]
    %v160 = vld [vmem:[%s1 + $0x428] sm:$0xff]
    %v161 = vld [vmem:[%s1 + $0x430] sm:$0xff]
    %v162 = vld [vmem:[%s1 + $0x438] sm:$0xff]
    %v163 = vld [vmem:[%s1 + $0x440] sm:$0xff]
    %v164 = vld [vmem:[%s1 + $0x448] sm:$0xff]
    %v165 = vld [vmem:[%s1 + $0x450] sm:$0xff]
    %v166 = vld [vmem:[%s1 + $0x458] sm:$0xff]
    %v167 = vld [vmem:[%s1 + $0x460] sm:$0xff]
    %v168 = vld [vmem:[%s1 + $0x468] sm:$0xff]
    %v169 = vld [vmem:[%s1 + $0x470] sm:$0xff]
    %v170 = vld [vmem:[%s1 + $0x478] sm:$0xff]
    %v171 = vld [vmem:[%s1 + $0x480] sm:$0xff]
    %v172 = vld [vmem:[%s1 + $0x488] sm:$0xff]
    %v173 = vld [vmem:[%s1 + $0x490] sm:$0xff]
    %v174 = vld [vmem:[%s1 + $0x498] sm:$0xff]
    %v175 = vld [vmem:[%s1 + $0x4a0] sm:$0xff]
    %v176 = vld [vmem:[%s1 + $0x4a8] sm:$0xff]
    %v177 = vld [vmem:[%s1 + $0x4b0] sm:$0xff]
    %v178 = vld [vmem:[%s1 + $0x4b8] sm:$0xff]
    %v179 = vld [vmem:[%s1 + $0x4c0] sm:$0xff]
    %v180 = vld [vmem:[%s1 + $0x4c8] sm:$0xff]
    %v181 = vld [vmem:[%s1 + $0x4d0] sm:$0xff]
    %v182 = vld [vmem:[%s1 + $0x4d8] sm:$0xff]
    %v183 = vld [vmem:[%s1 + $0x4e0] sm:$0xff]
    %v184 = vld [vmem:[%s1 + $0x4e8] sm:$0xff]
    %v185 = vld [vmem:[%s1 + $0x4f0] sm:$0xff]
    %v186 = vld [vmem:[%s1 + $0x4f8] sm:$0xff]
    %v187 = vld [vmem:[%s1 + $0x500] sm:$0xff]
    %v188 = vld [vmem:[%s1 + $0x508] sm:$0xff]
    %v189 = vld [vmem:[%s1 + $0x510] sm:$0xff]
    %v190 = vld [vmem:[%s1 + $0x518] sm:$0xff]
    %v191 = vld [vmem:[%s1 + $0x520] sm:$0xff]
    %v192 = vld [vmem:[%s1 + $0x528] sm:$0xff]
    %v193 = vld [vmem:[%s1 + $0x530] sm:$0xff]
    %v194 = vld [vmem:[%s1 + $0x538] sm:$0xff]
    %v195 = vld [vmem:[%s1 + $0x540] sm:$0xff]
    %v196 = vld [vmem:[%s1 + $0x548] sm:$0xff]
    %v197 = vld [vmem:[%s1 + $0x550] sm:$0xff]
    %v198 = vld [vmem:[%s1 + $0x558] sm:$0xff]
    %v199 = vld [vmem:[%s1 + $0x560] sm:$0xff]
    %v200 = vld [vmem:[%s1 + $0x568] sm:$0xff]
    %v201 = vld [vmem:[%s1 + $0x570] sm:$0xff]
    %v202 = vld [vmem:[%s1 + $0x578] sm:$0xff]
    %v203 = vld [vmem:[%s1 + $0x580] sm:$0xff]
    %v204 = vld [vmem:[%s1 + $0x588] sm:$0xff]
    %v205 = vld [vmem:[%s1 + $0x590] sm:$0xff]
    %v206 = vld [vmem:[%s1 + $0x598] sm:$0xff]
    %v207 = vld [vmem:[%s1 + $0x5a0] sm:$0xff]
    %v208 = vld [vmem:[%s1 + $0x5a8] sm:$0xff]
    %v209 = vld [vmem:[%s1 + $0x5b0] sm:$0xff]
    %v210 = vld [vmem:[%s1 + $0x5b8] sm:$0xff]
    %v211 = vld [vmem:[%s1 + $0x5c0] sm:$0xff]
    %v212 = vld [vmem:[%s1 + $0x5c8] sm:$0xff]
    %v213 = vld [vmem:[%s1 + $0x5d0] sm:$0xff]
    %v214 = vld [vmem:[%s1 + $0x5d8] sm:$0xff]
    %v215 = vld [vmem:[%s1 + $0x5e0] sm:$0xff]
    %v216 = vld [vmem:[%s1 + $0x5e8] sm:$0xff]
    %v217 = vld [vmem:[%s1 + $0x5f0] sm:$0xff]
    %v218 = vld [vmem:[%s1 + $0x5f8] sm:$0xff]
    %v219 = vld [vmem:[%s1 + $0x600] sm:$0xff]
    %v220 = vld [vmem:[%s1 + $0x608] sm:$0xff]
    %v221 = vld [vmem:[%s1 + $0x610] sm:$0xff]
    %v222 = vld [vmem:[%s1 + $0x618] sm:$0xff]
    %v223 = vld [vmem:[%s1 + $0x620] sm:$0xff]
    %v224 = vld [vmem:[%s1 + $0x628] sm:$0xff]
    %v225 = vld [vmem:[%s1 + $0x630] sm:$0xff]
    %v226 = vld [vmem:[%s1 + $0x638] sm:$0xff]
    %v227 = vld [vmem:[%s1 + $0x640] sm:$0xff]
    %v228 = vld [vmem:[%s1 + $0x648] sm:$0xff]
    %v229 = vld [vmem:[%s1 + $0x650] sm:$0xff]
    %v230 = vld [vmem:[%s1 + $0x658] sm:$0xff]
    %v231 = vld [vmem:[%s1 + $0x660] sm:$0xff]
    %v232 = vld [vmem:[%s1 + $0x668] sm:$0xff]
    %v233 = vld [vmem:[%s1 + $0x670] sm:$0xff]
    %v234 = vld [vmem:[%s1 + $0x678] sm:$0xff]
    %v235 = vld [vmem:[%s1 + $0x680] sm:$0xff]
    %v236 = vld [vmem:[%s1 + $0x688] sm:$0xff]
    %v237 = vld [vmem:[%s1 + $0x690] sm:$0xff]
    %v238 = vld [vmem:[%s1 + $0x698] sm:$0xff]
    %v239 = vld [vmem:[%s1 + $0x6a0] sm:$0xff]
    %v240 = vld [vmem:[%s1 + $0x6a8] sm:$0xff]
    %v241 = vld [vmem:[%s1 + $0x6b0] sm:$0xff]
    %v242 = vld [vmem:[%s1 + $0x6b8] sm:$0xff]
    %v243 = vld [vmem:[%s1 + $0x6c0] sm:$0xff]
    %v244 = vld [vmem:[%s1 + $0x6c8] sm:$0xff]
    %v245 = vld [vmem:[%s1 + $0x6d0] sm:$0xff]
    %v246 = vld [vmem:[%s1 + $0x6d8] sm:$0xff]
    %v247 = vld [vmem:[%s1 + $0x6e0] sm:$0xff]
    %v248 = vld [vmem:[%s1 + $0x6e8] sm:$0xff]
    %v249 = vld [vmem:[%s1 + $0x6f0] sm:$0xff]
    %v250 = vld [vmem:[%s1 + $0x6f8] sm:$0xff]
    %v251 = vld [vmem:[%s1 + $0x700] sm:$0xff]
    %v252 = vld [vmem:[%s1 + $0x708] sm:$0xff]
    %v253 = vld [vmem:[%s1 + $0x710] sm:$0xff]
    %v254 = vld [vmem:[%s1 + $0x718] sm:$0xff]
    %v255 = vld [vmem:[%s1 + $0x720] sm:$0xff]
    %v256 = vld [vmem:[%s1 + $0x728] sm:$0xff]
    %v257 = vld [vmem:[%s1 + $0x730] sm:$0xff]
    %v258 = vld [vmem:[%s1 + $0x738] sm:$0xff]
    %v259 = vld [vmem:[%s1 + $0x740] sm:$0xff]
    %v260 = vld [vmem:[%s1 + $0x748] sm:$0xff]
    %v261 = vld [vmem:[%s1 + $0x750] sm:$0xff]
    %v262 = vld [vmem:[%s1 + $0x758] sm:$0xff]
    %v263 = vld [vmem:[%s1 + $0x760] sm:$0xff]
    %v264 = vld [vmem:[%s1 + $0x768] sm:$0xff]
    %v265 = vld [vmem:[%s1 + $0x770] sm:$0xff]
    %v266 = vld [vmem:[%s1 + $0x778] sm:$0xff]
    %v267 = vld [vmem:[%s1 + $0x780] sm:$0xff]
    %v268 = vld [vmem:[%s1 + $0x788] sm:$0xff]
    %v269 = vld [vmem:[%s1 + $0x790] sm:$0xff]
    %v270 = vld [vmem:[%s1 + $0x798] sm:$0xff]
    %v271 = vld [vmem:[%s1 + $0x7a0] sm:$0xff]
    %v272 = vld [vmem:[%s1 + $0x7a8] sm:$0xff]
    %v273 = vld [vmem:[%s1 + $0x7b0] sm:$0xff]
    %v274 = vld [vmem:[%s1 + $0x7b8] sm:$0xff]
    %v275 = vld [vmem:[%s1 + $0x7c0] sm:$0xff]
    %v276 = vld [vmem:[%s1 + $0x7c8] sm:$0xff]
    %v277 = vld [vmem:[%s1 + $0x7d0] sm:$0xff]
    %v278 = vld [vmem:[%s1 + $0x7d8] sm:$0xff]
    %v279 = vld [vmem:[%s1 + $0x7e0] sm:$0xff]
    %v280 = vld [vmem:[%s1 + $0x7e8] sm:$0xff]
    %v281 = vld [vmem:[%s1 + $0x7f0] sm:$0xff]
    %v282 = vld [vmem:[%s1 + $0x7f8] sm:$0xff]
    %v283 = vld [vmem:[%s1 + $0x800] sm:$0xff]
    %v284 = vld [vmem:[%s1 + $0x808] sm:$0xff]
    %v285 = vld [vmem:[%s1 + $0x810] sm:$0xff]
    %v286 = vld [vmem:[%s1 + $0x818] sm:$0xff]
    %v287 = vld [vmem:[%s1 + $0x820] sm:$0xff]
    %v288 = vld [vmem:[%s1 + $0x828] sm:$0xff]
    %v289 = vld [vmem:[%s1 + $0x830] sm:$0xff]
    %v290 = vld [vmem:[%s1 + $0x838] sm:$0xff]
    %v291 = vld [vmem:[%s1 + $0x840] sm:$0xff]
    %v292 = vld [vmem:[%s1 + $0x848] sm:$0xff]
    %v293 = vld [vmem:[%s1 + $0x850] sm:$0xff]
    %v294 = vld [vmem:[%s1 + $0x858] sm:$0xff]
    %v295 = vld [vmem:[%s1 + $0x860] sm:$0xff]
    %v296 = vld [vmem:[%s1 + $0x868] sm:$0xff]
    %v297 = vld [vmem:[%s1 + $0x870] sm:$0xff]
    %v298 = vld [vmem:[%s1 + $0x878] sm:$0xff]
    %v299 = vld [vmem:[%s1 + $0x880] sm:$0xff]
    %v300 = vld [vmem:[%s1 + $0x888] sm:$0xff]
    %v301 = vld [vmem:[%s1 + $0x890] sm:$0xff]
    %v302 = vld [vmem:[%s1 + $0x898] sm:$0xff]
    %v303 = vld [vmem:[%s1 + $0x8a0] sm:$0xff]
    %v304 = vld [vmem:[%s1 + $0x8a8] sm:$0xff]
    %v305 = vld [vmem:[%s1 + $0x8b0] sm:$0xff]
    %v306 = vld [vmem:[%s1 + $0x8b8] sm:$0xff]
    %v307 = vld [vmem:[%s1 + $0x8c0] sm:$0xff]
    %v308 = vld [vmem:[%s1 + $0x8c8] sm:$0xff]
    %v309 = vld [vmem:[%s1 + $0x8d0] sm:$0xff]
    %v310 = vld [vmem:[%s1 + $0x8d8] sm:$0xff]
    %v311 = vld [vmem:[%s1 + $0x8e0] sm:$0xff]
    %v312 = vld [vmem:[%s1 + $0x8e8] sm:$0xff]
    %v313 = vld [vmem:[%s1 + $0x8f0] sm:$0xff]
    %v314 = vld [vmem:[%s1 + $0x8f8] sm:$0xff]
    %v315 = vld [vmem:[%s1 + $0x900] sm:$0xff]
    %v316 = vld [vmem:[%s1 + $0x908] sm:$0xff]
    %v317 = vld [vmem:[%s1 + $0x910] sm:$0xff]
    %v318 = vld [vmem:[%s1 + $0x918] sm:$0xff]
    %v319 = vld [vmem:[%s1 + $0x920] sm:$0xff]
    %v320 = vld [vmem:[%s1 + $0x928] sm:$0xff]
    %v321 = vld [vmem:[%s1 + $0x930] sm:$0xff]
    %v322 = vld [vmem:[%s1 + $0x938] sm:$0xff]
    %v323 = vld [vmem:[%s1 + $0x940] sm:$0xff]
    %v324 = vld [vmem:[%s1 + $0x948] sm:$0xff]
    %v325 = vld [vmem:[%s1 + $0x950] sm:$0xff]
    %v326 = vld [vmem:[%s1 + $0x958] sm:$0xff]
    %v327 = vld [vmem:[%s1 + $0x960] sm:$0xff]
    %v328 = vld [vmem:[%s1 + $0x968] sm:$0xff]
    %v329 = vld [vmem:[%s1 + $0x970] sm:$0xff]
    %v330 = vld [vmem:[%s1 + $0x978] sm:$0xff]
    %v331 = vld [vmem:[%s1 + $0x980] sm:$0xff]
    %v332 = vld [vmem:[%s1 + $0x988] sm:$0xff]
    %v333 = vld [vmem:[%s1 + $0x990] sm:$0xff]
    %v334 = vld [vmem:[%s1 + $0x998] sm:$0xff]
    %v335 = vld [vmem:[%s1 + $0x9a0] sm:$0xff]
    %v336 = vld [vmem:[%s1 + $0x9a8] sm:$0xff]
    %v337 = vld [vmem:[%s1 + $0x9b0] sm:$0xff]
    %v338 = vld [vmem:[%s1 + $0x9b8] sm:$0xff]
    %v339 = vld [vmem:[%s1 + $0x9c0] sm:$0xff]
    %v340 = vld [vmem:[%s1 + $0x9c8] sm:$0xff]
    %v341 = vld [vmem:[%s1 + $0x9d0] sm:$0xff]
    %v342 = vld [vmem:[%s1 + $0x9d8] sm:$0xff]
    %v343 = vld [vmem:[%s1 + $0x9e0] sm:$0xff]
    %v344 = vld [vmem:[%s1 + $0x9e8] sm:$0xff]
    %v345 = vld [vmem:[%s1 + $0x9f0] sm:$0xff]
    %v346 = vld [vmem:[%s1 + $0x9f8] sm:$0xff]
    %v347 = vld [vmem:[%s1 + $0xa00] sm:$0xff]
    %v348 = vld [vmem:[%s1 + $0xa08] sm:$0xff]
    %v349 = vld [vmem:[%s1 + $0xa10] sm:$0xff]
    %v350 = vld [vmem:[%s1 + $0xa18] sm:$0xff]
    %v351 = vld [vmem:[%s1 + $0xa20] sm:$0xff]
    %v352 = vld [vmem:[%s1 + $0xa28] sm:$0xff]
    %v353 = vld [vmem:[%s1 + $0xa30] sm:$0xff]
    %v354 = vld [vmem:[%s1 + $0xa38] sm:$0xff]
    %v355 = vld [vmem:[%s1 + $0xa40] sm:$0xff]
    %v356 = vld [vmem:[%s1 + $0xa48] sm:$0xff]
    %v357 = vld [vmem:[%s1 + $0xa50] sm:$0xff]
    %v358 = vld [vmem:[%s1 + $0xa58] sm:$0xff]
    %v359 = vld [vmem:[%s1 + $0xa60] sm:$0xff]
    %v360 = vld [vmem:[%s1 + $0xa68] sm:$0xff]
    %v361 = vld [vmem:[%s1 + $0xa70] sm:$0xff]
    %v362 = vld [vmem:[%s1 + $0xa78] sm:$0xff]
    %v363 = vld [vmem:[%s1 + $0xa80] sm:$0xff]
    %v364 = vld [vmem:[%s1 + $0xa88] sm:$0xff]
    %v365 = vld [vmem:[%s1 + $0xa90] sm:$0xff]
    %v366 = vld [vmem:[%s1 + $0xa98] sm:$0xff]
    %v367 = vld [vmem:[%s1 + $0xaa0] sm:$0xff]
    %v368 = vld [vmem:[%s1 + $0xaa8] sm:$0xff]
    %v369 = vld [vmem:[%s1 + $0xab0] sm:$0xff]
    %v370 = vld [vmem:[%s1 + $0xab8] sm:$0xff]
    %v371 = vld [vmem:[%s1 + $0xac0] sm:$0xff]
    %v372 = vld [vmem:[%s1 + $0xac8] sm:$0xff]
    %v373 = vld [vmem:[%s1 + $0xad0] sm:$0xff]
    %v374 = vld [vmem:[%s1 + $0xad8] sm:$0xff]
    %v375 = vld [vmem:[%s1 + $0xae0] sm:$0xff]
    %v376 = vld [vmem:[%s1 + $0xae8] sm:$0xff]
    %v377 = vld [vmem:[%s1 + $0xaf0] sm:$0xff]
    %v378 = vld [vmem:[%s1 + $0xaf8] sm:$0xff]
    %v379 = vld [vmem:[%s1 + $0xb00] sm:$0xff]
    %v380 = vld [vmem:[%s1 + $0xb08] sm:$0xff]
    %v381 = vld [vmem:[%s1 + $0xb10] sm:$0xff]
    %v382 = vld [vmem:[%s1 + $0xb18] sm:$0xff]
    %v383 = vld [vmem:[%s1 + $0xb20] sm:$0xff]
    %v384 = vld [vmem:[%s1 + $0xb28] sm:$0xff]
    %v385 = vld [vmem:[%s1 + $0xb30] sm:$0xff]
    %v386 = vld [vmem:[%s1 + $0xb38] sm:$0xff]
    %v387 = vld [vmem:[%s1 + $0xb40] sm:$0xff]
    %v388 = vld [vmem:[%s1 + $0xb48] sm:$0xff]
    %v389 = vld [vmem:[%s1 + $0xb50] sm:$0xff]
    %v390 = vld [vmem:[%s1 + $0xb58] sm:$0xff]
    %v391 = vld [vmem:[%s1 + $0xb60] sm:$0xff]
    %v392 = vld [vmem:[%s1 + $0xb68] sm:$0xff]
    %v393 = vld [vmem:[%s1 + $0xb70] sm:$0xff]
    %v394 = vld [vmem:[%s1 + $0xb78] sm:$0xff]
    %v395 = vld [vmem:[%s1 + $0xb80] sm:$0xff]
    %v396 = vld [vmem:[%s1 + $0xb88] sm:$0xff]
    %v397 = vld [vmem:[%s1 + $0xb90] sm:$0xff]
    %v398 = vld [vmem:[%s1 + $0xb98] sm:$0xff]
    %v399 = vld [vmem:[%s1 + $0xba0] sm:$0xff]
    %v400 = vld [vmem:[%s1 + $0xba8] sm:$0xff]
    %v401 = vld [vmem:[%s1 + $0xbb0] sm:$0xff]
    %v402 = vld [vmem:[%s1 + $0xbb8] sm:$0xff]
    %v403 = vld [vmem:[%s1 + $0xbc0] sm:$0xff]
    %v404 = vld [vmem:[%s1 + $0xbc8] sm:$0xff]
    %v405 = vld [vmem:[%s1 + $0xbd0] sm:$0xff]
    %v406 = vld [vmem:[%s1 + $0xbd8] sm:$0xff]
    %v407 = vld [vmem:[%s1 + $0xbe0] sm:$0xff]
    %v408 = vld [vmem:[%s1 + $0xbe8] sm:$0xff]
    %v409 = vld [vmem:[%s1 + $0xbf0] sm:$0xff]
    %v410 = vld [vmem:[%s1 + $0xbf8] sm:$0xff]
    %v411 = vld [vmem:[%s1 + $0xc00] sm:$0xff]
    %v412 = vld [vmem:[%s1 + $0xc08] sm:$0xff]
    %v413 = vld [vmem:[%s1 + $0xc10] sm:$0xff]
    %v414 = vld [vmem:[%s1 + $0xc18] sm:$0xff]
    %v415 = vld [vmem:[%s1 + $0xc20] sm:$0xff]
    %v416 = vld [vmem:[%s1 + $0xc28] sm:$0xff]
    %v417 = vld [vmem:[%s1 + $0xc30] sm:$0xff]
    %v418 = vld [vmem:[%s1 + $0xc38] sm:$0xff]
    %v419 = vld [vmem:[%s2] sm:$0x3]
    %v421 = vlaneseq
    %v422 = vshrl.u32 %v421, 7
    %v423 = vsub.s32 0, %v422
    %v424 = vrot.slane %v419, %v423
    %v425 = vlaneseq
    %v426 = vshrl.u32 %v425, 7
    %v427 = vsub.s32 1, %v426
    %v428 = vrot.slane %v419, %v427
    %v435 = vcombine.high %v23, %v23
    %v437 = vunpack.c.l.s4 1983009808
    %v438 = vunpack.c.0.s8 %v437
    %v439 = vlaneseq
    %v440 = vshrl.u32 %v439, 7
    %v441 = vsub.s32 %v438, %v440
    %v442 = vrot.slane %v23, %v441
    %v444 = vunpack.c.l.s4 1983009808
    %v445 = vunpack.c.0.s8 %v444
    %v446 = vlaneseq
    %v447 = vshrl.u32 %v446, 7
    %v448 = vsub.s32 %v445, %v447
    %v449 = vrot.slane %v435, %v448
    %v450 = vcombine.high %v442, %v442
    %v451 = vcombine.high %v449, %v449
    %v452 = vcombine.high %v24, %v24
    %v454 = vunpack.c.l.s4 1983009808
    %v455 = vunpack.c.0.s8 %v454
    %v456 = vlaneseq
    %v457 = vshrl.u32 %v456, 7
    %v458 = vsub.s32 %v455, %v457
    %v459 = vrot.slane %v24, %v458
    %v461 = vunpack.c.l.s4 1983009808
    %v462 = vunpack.c.0.s8 %v461
    %v463 = vlaneseq
    %v464 = vshrl.u32 %v463, 7
    %v465 = vsub.s32 %v462, %v464
    %v466 = vrot.slane %v452, %v465
    %v467 = vcombine.high %v459, %v459
    %v468 = vcombine.high %v466, %v466
    %v469 = vcombine.high %v25, %v25
    %v471 = vunpack.c.l.s4 1983009808
    %v472 = vunpack.c.0.s8 %v471
    %v473 = vlaneseq
    %v474 = vshrl.u32 %v473, 7
    %v475 = vsub.s32 %v472, %v474
    %v476 = vrot.slane %v25, %v475
    %v478 = vunpack.c.l.s4 1983009808
    %v479 = vunpack.c.0.s8 %v478
    %v480 = vlaneseq
    %v481 = vshrl.u32 %v480, 7
    %v482 = vsub.s32 %v479, %v481
    %v483 = vrot.slane %v469, %v482
    %v484 = vcombine.high %v476, %v476
    %v485 = vcombine.high %v483, %v483
    %v487 = vunpack.c.l.s4 1983009808
    %v488 = vunpack.c.0.s8 %v487
    %v489 = vlaneseq
    %v490 = vshrl.u32 %v489, 7
    %v491 = vsub.s32 %v488, %v490
    %v492 = vrot.slane %v26, %v491
    %vm505 = vcmask 261120
    %v506 = vsel %vm505, %v492, 0
    %508 = vmatprep.subr.mxu0 %v28
    %509 = vmatpush1.msra.mxu0 %v27
    %510 = vmatprep.subr.mxu0 %v30
    %511 = vmatpush1.msra.mxu0 %v29
    %512 = vmatprep.subr.mxu0 %v32
    %513 = vmatpush1.msra.mxu0 %v31
    %514 = vmatprep.subr.mxu0 %v34
    %515 = vmatpush1.msra.mxu0 %v33
    %516 = vmatprep.subr.mxu0 %v36
    %517 = vmatpush1.msra.mxu0 %v35
    %518 = vmatprep.subr.mxu0 %v38
    %519 = vmatpush1.msra.mxu0 %v37
    %520 = vmatprep.subr.mxu0 %v40
    %521 = vmatpush1.msra.mxu0 %v39
    %522 = vmatprep.subr.mxu0 %v42
    %523 = vmatpush1.msra.mxu0 %v41
    %524 = vmatprep.subr.mxu0 %v44
    %525 = vmatpush1.msra.mxu0 %v43
    %526 = vmatprep.subr.mxu0 %v46
    %527 = vmatpush1.msra.mxu0 %v45
    %528 = vmatprep.subr.mxu0 %v48
    %529 = vmatpush1.msra.mxu0 %v47
    %530 = vmatprep.subr.mxu0 %v50
    %531 = vmatpush1.msra.mxu0 %v49
    %532 = vmatprep.subr.mxu0 %v52
    %533 = vmatpush1.msra.mxu0 %v51
    %534 = vmatprep.subr.mxu0 %v54
    %535 = vmatpush1.msra.mxu0 %v53
    %536 = vmatprep.subr.mxu0 %v56
    %537 = vmatpush1.msra.mxu0 %v55
    %538 = vmatprep.subr.mxu0 %v58
    %539 = vmatpush1.msra.mxu0 %v57
    %540 = vmatprep.subr.mxu0 %v60
    %541 = vmatpush1.msra.mxu0 %v59
    %542 = vmatprep.subr.mxu0 %v62
    %543 = vmatpush1.msra.mxu0 %v61
    %544 = vmatprep.subr.mxu0 %v64
    %545 = vmatpush1.msra.mxu0 %v63
    %546 = vmatprep.subr.mxu0 %v66
    %547 = vmatpush1.msra.mxu0 %v65
    %548 = vmatprep.subr.mxu0 %v68
    %549 = vmatpush1.msra.mxu0 %v67
    %550 = vmatprep.subr.mxu0 %v70
    %551 = vmatpush1.msra.mxu0 %v69
    %552 = vmatprep.subr.mxu0 %v72
    %553 = vmatpush1.msra.mxu0 %v71
    %554 = vmatprep.subr.mxu0 %v74
    %555 = vmatpush1.msra.mxu0 %v73
    %556 = vmatprep.subr.mxu0 %v76
    %557 = vmatpush1.msra.mxu0 %v75
    %558 = vmatprep.subr.mxu0 %v78
    %559 = vmatpush1.msra.mxu0 %v77
    %560 = vmatprep.subr.mxu0 %v80
    %561 = vmatpush1.msra.mxu0 %v79
    %562 = vmatprep.subr.mxu0 %v82
    %563 = vmatpush1.msra.mxu0 %v81
    %564 = vmatprep.subr.mxu0 %v84
    %565 = vmatpush1.msra.mxu0 %v83
    %566 = vmatprep.subr.mxu0 %v86
    %567 = vmatpush1.msra.mxu0 %v85
    %568 = vmatprep.subr.mxu0 %v88
    %569 = vmatpush1.msra.mxu0 %v87
    %570 = vmatprep.subr.mxu0 %v90
    %571 = vmatpush1.msra.mxu0 %v89
    %572 = vmatprep.mubr.f32.mxu0 %v450
    %573 = vmatmul.mubr.f32.gmra.mrb[0].mxu0 %v442
    %v574 = vpop.f32.mrb[0].mxu0
    %v575 = vadd.f32 %v424, %v574
    %v576 = vpop.f32.mrb[0].mxu0
    %v577 = vadd.f32 %v428, %v576
    %578 = vdwg.mxu0
    %579 = vmatprep.subr.mxu0 %v92
    %580 = vmatpush1.msra.mxu0 %v91
    %581 = vmatprep.subr.mxu0 %v94
    %582 = vmatpush1.msra.mxu0 %v93
    %583 = vmatprep.subr.mxu0 %v96
    %584 = vmatpush1.msra.mxu0 %v95
    %585 = vmatprep.subr.mxu0 %v98
    %586 = vmatpush1.msra.mxu0 %v97
    %587 = vmatprep.subr.mxu0 %v100
    %588 = vmatpush1.msra.mxu0 %v99
    %589 = vmatprep.subr.mxu0 %v102
    %590 = vmatpush1.msra.mxu0 %v101
    %591 = vmatprep.subr.mxu0 %v104
    %592 = vmatpush1.msra.mxu0 %v103
    %593 = vmatprep.subr.mxu0 %v106
    %594 = vmatpush1.msra.mxu0 %v105
    %595 = vmatprep.subr.mxu0 %v108
    %596 = vmatpush1.msra.mxu0 %v107
    %597 = vmatprep.subr.mxu0 %v110
    %598 = vmatpush1.msra.mxu0 %v109
    %599 = vmatprep.subr.mxu0 %v112
    %600 = vmatpush1.msra.mxu0 %v111
    %601 = vmatprep.subr.mxu0 %v114
    %602 = vmatpush1.msra.mxu0 %v113
    %603 = vmatprep.subr.mxu0 %v116
    %604 = vmatpush1.msra.mxu0 %v115
    %605 = vmatprep.subr.mxu0 %v118
    %606 = vmatpush1.msra.mxu0 %v117
    %607 = vmatprep.subr.mxu0 %v120
    %608 = vmatpush1.msra.mxu0 %v119
    %609 = vmatprep.subr.mxu0 %v122
    %610 = vmatpush1.msra.mxu0 %v121
    %611 = vmatprep.subr.mxu0 %v124
    %612 = vmatpush1.msra.mxu0 %v123
    %613 = vmatprep.subr.mxu0 %v126
    %614 = vmatpush1.msra.mxu0 %v125
    %615 = vmatprep.subr.mxu0 %v128
    %616 = vmatpush1.msra.mxu0 %v127
    %617 = vmatprep.subr.mxu0 %v130
    %618 = vmatpush1.msra.mxu0 %v129
    %619 = vmatprep.subr.mxu0 %v132
    %620 = vmatpush1.msra.mxu0 %v131
    %621 = vmatprep.subr.mxu0 %v134
    %622 = vmatpush1.msra.mxu0 %v133
    %623 = vmatprep.subr.mxu0 %v136
    %624 = vmatpush1.msra.mxu0 %v135
    %625 = vmatprep.subr.mxu0 %v138
    %626 = vmatpush1.msra.mxu0 %v137
    %627 = vmatprep.subr.mxu0 %v140
    %628 = vmatpush1.msra.mxu0 %v139
    %629 = vmatprep.subr.mxu0 %v142
    %630 = vmatpush1.msra.mxu0 %v141
    %631 = vmatprep.subr.mxu0 %v144
    %632 = vmatpush1.msra.mxu0 %v143
    %633 = vmatprep.subr.mxu0 %v146
    %634 = vmatpush1.msra.mxu0 %v145
    %635 = vmatprep.subr.mxu0 %v148
    %636 = vmatpush1.msra.mxu0 %v147
    %637 = vmatprep.subr.mxu0 %v150
    %638 = vmatpush1.msra.mxu0 %v149
    %639 = vmatprep.subr.mxu0 %v152
    %640 = vmatpush1.msra.mxu0 %v151
    %641 = vmatprep.subr.mxu0 %v154
    %642 = vmatpush1.msra.mxu0 %v153
    %643 = vmatprep.mubr.f32.mxu0 %v451
    %644 = vmatmul.mubr.f32.gmra.mrb[0].mxu0 %v449
    %v645 = vpop.f32.mrb[0].mxu0
    %v646 = vadd.f32 %v575, %v645
    %v647 = vpop.f32.mrb[0].mxu0
    %v648 = vadd.f32 %v577, %v647
    %649 = vdwg.mxu0
    %650 = vmatprep.subr.mxu0 %v156
    %651 = vmatpush1.msra.mxu0 %v155
    %652 = vmatprep.subr.mxu0 %v158
    %653 = vmatpush1.msra.mxu0 %v157
    %654 = vmatprep.subr.mxu0 %v160
    %655 = vmatpush1.msra.mxu0 %v159
    %656 = vmatprep.subr.mxu0 %v162
    %657 = vmatpush1.msra.mxu0 %v161
    %658 = vmatprep.subr.mxu0 %v164
    %659 = vmatpush1.msra.mxu0 %v163
    %660 = vmatprep.subr.mxu0 %v166
    %661 = vmatpush1.msra.mxu0 %v165
    %662 = vmatprep.subr.mxu0 %v168
    %663 = vmatpush1.msra.mxu0 %v167
    %664 = vmatprep.subr.mxu0 %v170
    %665 = vmatpush1.msra.mxu0 %v169
    %666 = vmatprep.subr.mxu0 %v172
    %667 = vmatpush1.msra.mxu0 %v171
    %668 = vmatprep.subr.mxu0 %v174
    %669 = vmatpush1.msra.mxu0 %v173
    %670 = vmatprep.subr.mxu0 %v176
    %671 = vmatpush1.msra.mxu0 %v175
    %672 = vmatprep.subr.mxu0 %v178
    %673 = vmatpush1.msra.mxu0 %v177
    %674 = vmatprep.subr.mxu0 %v180
    %675 = vmatpush1.msra.mxu0 %v179
    %676 = vmatprep.subr.mxu0 %v182
    %677 = vmatpush1.msra.mxu0 %v181
    %678 = vmatprep.subr.mxu0 %v184
    %679 = vmatpush1.msra.mxu0 %v183
    %680 = vmatprep.subr.mxu0 %v186
    %681 = vmatpush1.msra.mxu0 %v185
    %682 = vmatprep.subr.mxu0 %v188
    %683 = vmatpush1.msra.mxu0 %v187
    %684 = vmatprep.subr.mxu0 %v190
    %685 = vmatpush1.msra.mxu0 %v189
    %686 = vmatprep.subr.mxu0 %v192
    %687 = vmatpush1.msra.mxu0 %v191
    %688 = vmatprep.subr.mxu0 %v194
    %689 = vmatpush1.msra.mxu0 %v193
    %690 = vmatprep.subr.mxu0 %v196
    %691 = vmatpush1.msra.mxu0 %v195
    %692 = vmatprep.subr.mxu0 %v198
    %693 = vmatpush1.msra.mxu0 %v197
    %694 = vmatprep.subr.mxu0 %v200
    %695 = vmatpush1.msra.mxu0 %v199
    %696 = vmatprep.subr.mxu0 %v202
    %697 = vmatpush1.msra.mxu0 %v201
    %698 = vmatprep.subr.mxu0 %v204
    %699 = vmatpush1.msra.mxu0 %v203
    %700 = vmatprep.subr.mxu0 %v206
    %701 = vmatpush1.msra.mxu0 %v205
    %702 = vmatprep.subr.mxu0 %v208
    %703 = vmatpush1.msra.mxu0 %v207
    %704 = vmatprep.subr.mxu0 %v210
    %705 = vmatpush1.msra.mxu0 %v209
    %706 = vmatprep.subr.mxu0 %v212
    %707 = vmatpush1.msra.mxu0 %v211
    %708 = vmatprep.subr.mxu0 %v214
    %709 = vmatpush1.msra.mxu0 %v213
    %710 = vmatprep.subr.mxu0 %v216
    %711 = vmatpush1.msra.mxu0 %v215
    %712 = vmatprep.subr.mxu0 %v218
    %713 = vmatpush1.msra.mxu0 %v217
    %714 = vmatprep.mubr.f32.mxu0 %v467
    %715 = vmatmul.mubr.f32.gmra.mrb[0].mxu0 %v459
    %v716 = vpop.f32.mrb[0].mxu0
    %v717 = vadd.f32 %v646, %v716
    %v718 = vpop.f32.mrb[0].mxu0
    %v719 = vadd.f32 %v648, %v718
    %720 = vdwg.mxu0
    %721 = vmatprep.subr.mxu0 %v220
    %722 = vmatpush1.msra.mxu0 %v219
    %723 = vmatprep.subr.mxu0 %v222
    %724 = vmatpush1.msra.mxu0 %v221
    %725 = vmatprep.subr.mxu0 %v224
    %726 = vmatpush1.msra.mxu0 %v223
    %727 = vmatprep.subr.mxu0 %v226
    %728 = vmatpush1.msra.mxu0 %v225
    %729 = vmatprep.subr.mxu0 %v228
    %730 = vmatpush1.msra.mxu0 %v227
    %731 = vmatprep.subr.mxu0 %v230
    %732 = vmatpush1.msra.mxu0 %v229
    %733 = vmatprep.subr.mxu0 %v232
    %734 = vmatpush1.msra.mxu0 %v231
    %735 = vmatprep.subr.mxu0 %v234
    %736 = vmatpush1.msra.mxu0 %v233
    %737 = vmatprep.subr.mxu0 %v236
    %738 = vmatpush1.msra.mxu0 %v235
    %739 = vmatprep.subr.mxu0 %v238
    %740 = vmatpush1.msra.mxu0 %v237
    %741 = vmatprep.subr.mxu0 %v240
    %742 = vmatpush1.msra.mxu0 %v239
    %743 = vmatprep.subr.mxu0 %v242
    %744 = vmatpush1.msra.mxu0 %v241
    %745 = vmatprep.subr.mxu0 %v244
    %746 = vmatpush1.msra.mxu0 %v243
    %747 = vmatprep.subr.mxu0 %v246
    %748 = vmatpush1.msra.mxu0 %v245
    %749 = vmatprep.subr.mxu0 %v248
    %750 = vmatpush1.msra.mxu0 %v247
    %751 = vmatprep.subr.mxu0 %v250
    %752 = vmatpush1.msra.mxu0 %v249
    %753 = vmatprep.subr.mxu0 %v252
    %754 = vmatpush1.msra.mxu0 %v251
    %755 = vmatprep.subr.mxu0 %v254
    %756 = vmatpush1.msra.mxu0 %v253
    %757 = vmatprep.subr.mxu0 %v256
    %758 = vmatpush1.msra.mxu0 %v255
    %759 = vmatprep.subr.mxu0 %v258
    %760 = vmatpush1.msra.mxu0 %v257
    %761 = vmatprep.subr.mxu0 %v260
    %762 = vmatpush1.msra.mxu0 %v259
    %763 = vmatprep.subr.mxu0 %v262
    %764 = vmatpush1.msra.mxu0 %v261
    %765 = vmatprep.subr.mxu0 %v264
    %766 = vmatpush1.msra.mxu0 %v263
    %767 = vmatprep.subr.mxu0 %v266
    %768 = vmatpush1.msra.mxu0 %v265
    %769 = vmatprep.subr.mxu0 %v268
    %770 = vmatpush1.msra.mxu0 %v267
    %771 = vmatprep.subr.mxu0 %v270
    %772 = vmatpush1.msra.mxu0 %v269
    %773 = vmatprep.subr.mxu0 %v272
    %774 = vmatpush1.msra.mxu0 %v271
    %775 = vmatprep.subr.mxu0 %v274
    %776 = vmatpush1.msra.mxu0 %v273
    %777 = vmatprep.subr.mxu0 %v276
    %778 = vmatpush1.msra.mxu0 %v275
    %779 = vmatprep.subr.mxu0 %v278
    %780 = vmatpush1.msra.mxu0 %v277
    %781 = vmatprep.subr.mxu0 %v280
    %782 = vmatpush1.msra.mxu0 %v279
    %783 = vmatprep.subr.mxu0 %v282
    %784 = vmatpush1.msra.mxu0 %v281
    %785 = vmatprep.mubr.f32.mxu0 %v468
    %786 = vmatmul.mubr.f32.gmra.mrb[0].mxu0 %v466
    %v787 = vpop.f32.mrb[0].mxu0
    %v788 = vadd.f32 %v717, %v787
    %v789 = vpop.f32.mrb[0].mxu0
    %v790 = vadd.f32 %v719, %v789
    %791 = vdwg.mxu0
    %792 = vmatprep.subr.mxu0 %v284
    %793 = vmatpush1.msra.mxu0 %v283
    %794 = vmatprep.subr.mxu0 %v286
    %795 = vmatpush1.msra.mxu0 %v285
    %796 = vmatprep.subr.mxu0 %v288
    %797 = vmatpush1.msra.mxu0 %v287
    %798 = vmatprep.subr.mxu0 %v290
    %799 = vmatpush1.msra.mxu0 %v289
    %800 = vmatprep.subr.mxu0 %v292
    %801 = vmatpush1.msra.mxu0 %v291
    %802 = vmatprep.subr.mxu0 %v294
    %803 = vmatpush1.msra.mxu0 %v293
    %804 = vmatprep.subr.mxu0 %v296
    %805 = vmatpush1.msra.mxu0 %v295
    %806 = vmatprep.subr.mxu0 %v298
    %807 = vmatpush1.msra.mxu0 %v297
    %808 = vmatprep.subr.mxu0 %v300
    %809 = vmatpush1.msra.mxu0 %v299
    %810 = vmatprep.subr.mxu0 %v302
    %811 = vmatpush1.msra.mxu0 %v301
    %812 = vmatprep.subr.mxu0 %v304
    %813 = vmatpush1.msra.mxu0 %v303
    %814 = vmatprep.subr.mxu0 %v306
    %815 = vmatpush1.msra.mxu0 %v305
    %816 = vmatprep.subr.mxu0 %v308
    %817 = vmatpush1.msra.mxu0 %v307
    %818 = vmatprep.subr.mxu0 %v310
    %819 = vmatpush1.msra.mxu0 %v309
    %820 = vmatprep.subr.mxu0 %v312
    %821 = vmatpush1.msra.mxu0 %v311
    %822 = vmatprep.subr.mxu0 %v314
    %823 = vmatpush1.msra.mxu0 %v313
    %824 = vmatprep.subr.mxu0 %v316
    %825 = vmatpush1.msra.mxu0 %v315
    %826 = vmatprep.subr.mxu0 %v318
    %827 = vmatpush1.msra.mxu0 %v317
    %828 = vmatprep.subr.mxu0 %v320
    %829 = vmatpush1.msra.mxu0 %v319
    %830 = vmatprep.subr.mxu0 %v322
    %831 = vmatpush1.msra.mxu0 %v321
    %832 = vmatprep.subr.mxu0 %v324
    %833 = vmatpush1.msra.mxu0 %v323
    %834 = vmatprep.subr.mxu0 %v326
    %835 = vmatpush1.msra.mxu0 %v325
    %836 = vmatprep.subr.mxu0 %v328
    %837 = vmatpush1.msra.mxu0 %v327
    %838 = vmatprep.subr.mxu0 %v330
    %839 = vmatpush1.msra.mxu0 %v329
    %840 = vmatprep.subr.mxu0 %v332
    %841 = vmatpush1.msra.mxu0 %v331
    %842 = vmatprep.subr.mxu0 %v334
    %843 = vmatpush1.msra.mxu0 %v333
    %844 = vmatprep.subr.mxu0 %v336
    %845 = vmatpush1.msra.mxu0 %v335
    %846 = vmatprep.subr.mxu0 %v338
    %847 = vmatpush1.msra.mxu0 %v337
    %848 = vmatprep.subr.mxu0 %v340
    %849 = vmatpush1.msra.mxu0 %v339
    %850 = vmatprep.subr.mxu0 %v342
    %851 = vmatpush1.msra.mxu0 %v341
    %852 = vmatprep.subr.mxu0 %v344
    %853 = vmatpush1.msra.mxu0 %v343
    %854 = vmatprep.subr.mxu0 %v346
    %855 = vmatpush1.msra.mxu0 %v345
    %856 = vmatprep.mubr.f32.mxu0 %v484
    %857 = vmatmul.mubr.f32.gmra.mrb[0].mxu0 %v476
    %v858 = vpop.f32.mrb[0].mxu0
    %v859 = vadd.f32 %v788, %v858
    %v860 = vpop.f32.mrb[0].mxu0
    %v861 = vadd.f32 %v790, %v860
    %862 = vdwg.mxu0
    %863 = vmatprep.subr.mxu0 %v348
    %864 = vmatpush1.msra.mxu0 %v347
    %865 = vmatprep.subr.mxu0 %v350
    %866 = vmatpush1.msra.mxu0 %v349
    %867 = vmatprep.subr.mxu0 %v352
    %868 = vmatpush1.msra.mxu0 %v351
    %869 = vmatprep.subr.mxu0 %v354
    %870 = vmatpush1.msra.mxu0 %v353
    %871 = vmatprep.subr.mxu0 %v356
    %872 = vmatpush1.msra.mxu0 %v355
    %873 = vmatprep.subr.mxu0 %v358
    %874 = vmatpush1.msra.mxu0 %v357
    %875 = vmatprep.subr.mxu0 %v360
    %876 = vmatpush1.msra.mxu0 %v359
    %877 = vmatprep.subr.mxu0 %v362
    %878 = vmatpush1.msra.mxu0 %v361
    %879 = vmatprep.subr.mxu0 %v364
    %880 = vmatpush1.msra.mxu0 %v363
    %881 = vmatprep.subr.mxu0 %v366
    %882 = vmatpush1.msra.mxu0 %v365
    %883 = vmatprep.subr.mxu0 %v368
    %884 = vmatpush1.msra.mxu0 %v367
    %885 = vmatprep.subr.mxu0 %v370
    %886 = vmatpush1.msra.mxu0 %v369
    %887 = vmatprep.subr.mxu0 %v372
    %888 = vmatpush1.msra.mxu0 %v371
    %889 = vmatprep.subr.mxu0 %v374
    %890 = vmatpush1.msra.mxu0 %v373
    %891 = vmatprep.subr.mxu0 %v376
    %892 = vmatpush1.msra.mxu0 %v375
    %893 = vmatprep.subr.mxu0 %v378
    %894 = vmatpush1.msra.mxu0 %v377
    %895 = vmatprep.subr.mxu0 %v380
    %896 = vmatpush1.msra.mxu0 %v379
    %897 = vmatprep.subr.mxu0 %v382
    %898 = vmatpush1.msra.mxu0 %v381
    %899 = vmatprep.subr.mxu0 %v384
    %900 = vmatpush1.msra.mxu0 %v383
    %901 = vmatprep.subr.mxu0 %v386
    %902 = vmatpush1.msra.mxu0 %v385
    %903 = vmatprep.subr.mxu0 %v388
    %904 = vmatpush1.msra.mxu0 %v387
    %905 = vmatprep.subr.mxu0 %v390
    %906 = vmatpush1.msra.mxu0 %v389
    %907 = vmatprep.subr.mxu0 %v392
    %908 = vmatpush1.msra.mxu0 %v391
    %909 = vmatprep.subr.mxu0 %v394
    %910 = vmatpush1.msra.mxu0 %v393
    %911 = vmatprep.subr.mxu0 %v396
    %912 = vmatpush1.msra.mxu0 %v395
    %913 = vmatprep.subr.mxu0 %v398
    %914 = vmatpush1.msra.mxu0 %v397
    %915 = vmatprep.subr.mxu0 %v400
    %916 = vmatpush1.msra.mxu0 %v399
    %917 = vmatprep.subr.mxu0 %v402
    %918 = vmatpush1.msra.mxu0 %v401
    %919 = vmatprep.subr.mxu0 %v404
    %920 = vmatpush1.msra.mxu0 %v403
    %921 = vmatprep.subr.mxu0 %v406
    %922 = vmatpush1.msra.mxu0 %v405
    %923 = vmatprep.subr.mxu0 %v408
    %924 = vmatpush1.msra.mxu0 %v407
    %925 = vmatprep.subr.mxu0 %v410
    %926 = vmatpush1.msra.mxu0 %v409
    %927 = vmatprep.mubr.f32.mxu0 %v485
    %928 = vmatmul.mubr.f32.gmra.mrb[0].mxu0 %v483
    %v929 = vpop.f32.mrb[0].mxu0
    %v930 = vadd.f32 %v859, %v929
    %v931 = vpop.f32.mrb[0].mxu0
    %v932 = vadd.f32 %v861, %v931
    %933 = vdwg.mxu0
    %934 = vmatprep.subr.mxu0 %v412
    %935 = vmatpush1.msra.mxu0 %v411
    %936 = vmatprep.subr.mxu0 %v414
    %937 = vmatpush1.msra.mxu0 %v413
    %938 = vmatprep.subr.mxu0 %v416
    %939 = vmatpush1.msra.mxu0 %v415
    %940 = vmatprep.subr.mxu0 %v418
    %941 = vmatpush1.msra.mxu0 %v417
    %942 = vmatprep.subr.mxu0 0.0
    %943 = vmatpush1.msra.mxu0 0.0
    %944 = vmatprep.subr.mxu0 0.0
    %945 = vmatpush1.msra.mxu0 0.0
    %946 = vmatprep.subr.mxu0 0.0
    %947 = vmatpush1.msra.mxu0 0.0
    %948 = vmatprep.subr.mxu0 0.0
    %949 = vmatpush1.msra.mxu0 0.0
    %950 = vmatprep.subr.mxu0 0.0
    %951 = vmatpush1.msra.mxu0 0.0
    %952 = vmatprep.subr.mxu0 0.0
    %953 = vmatpush1.msra.mxu0 0.0
    %954 = vmatprep.subr.mxu0 0.0
    %955 = vmatpush1.msra.mxu0 0.0
    %956 = vmatprep.subr.mxu0 0.0
    %957 = vmatpush1.msra.mxu0 0.0
    %958 = vmatprep.subr.mxu0 0.0
    %959 = vmatpush1.msra.mxu0 0.0
    %960 = vmatprep.subr.mxu0 0.0
    %961 = vmatpush1.msra.mxu0 0.0
    %962 = vmatprep.subr.mxu0 0.0
    %963 = vmatpush1.msra.mxu0 0.0
    %964 = vmatprep.subr.mxu0 0.0
    %965 = vmatpush1.msra.mxu0 0.0
    %966 = vmatprep.subr.mxu0 0.0
    %967 = vmatpush1.msra.mxu0 0.0
    %968 = vmatprep.subr.mxu0 0.0
    %969 = vmatpush1.msra.mxu0 0.0
    %970 = vmatprep.subr.mxu0 0.0
    %971 = vmatpush1.msra.mxu0 0.0
    %972 = vmatprep.subr.mxu0 0.0
    %973 = vmatpush1.msra.mxu0 0.0
    %974 = vmatprep.subr.mxu0 0.0
    %975 = vmatpush1.msra.mxu0 0.0
    %976 = vmatprep.subr.mxu0 0.0
    %977 = vmatpush1.msra.mxu0 0.0
    %978 = vmatprep.subr.mxu0 0.0
    %979 = vmatpush1.msra.mxu0 0.0
    %980 = vmatprep.subr.mxu0 0.0
    %981 = vmatpush1.msra.mxu0 0.0
    %982 = vmatprep.subr.mxu0 0.0
    %983 = vmatpush1.msra.mxu0 0.0
    %984 = vmatprep.subr.mxu0 0.0
    %985 = vmatpush1.msra.mxu0 0.0
    %986 = vmatprep.subr.mxu0 0.0
    %987 = vmatpush1.msra.mxu0 0.0
    %988 = vmatprep.subr.mxu0 0.0
    %989 = vmatpush1.msra.mxu0 0.0
    %990 = vmatprep.subr.mxu0 0.0
    %991 = vmatpush1.msra.mxu0 0.0
    %992 = vmatprep.subr.mxu0 0.0
    %993 = vmatpush1.msra.mxu0 0.0
    %994 = vmatprep.subr.mxu0 0.0
    %995 = vmatpush1.msra.mxu0 0.0
    %996 = vmatprep.subr.mxu0 0.0
    %997 = vmatpush1.msra.mxu0 0.0
    %998 = vmatprep.mubr.f32.mxu0 0.0
    %999 = vmatmul.mubr.f32.gmra.mrb[0].mxu0 %v506
    %v1000 = vpop.f32.mrb[0].mxu0
    %v1001 = vadd.f32 %v930, %v1000
    %v1002 = vpop.f32.mrb[0].mxu0
    %v1003 = vadd.f32 %v932, %v1002
    %1004 = vdwg.mxu0
    %v1005 = vmax.f32 %v1001, 0.0
    %v1006 = vmax.f32 %v1003, 0.0
    %v1009 = vcombine.low %v1005, %v1006
    %v1011 = vunpack.c.l.s4 1983009808
    %v1012 = vunpack.c.0.s8 %v1011
    %v1013 = vlaneseq
    %v1014 = vshrl.u32 %v1013, 7
    %v1015 = vsub.s32 %v1012, %v1014
    %v1016 = vrot.slane %v1009, %v1015
    %1018 = vst [vmem:[#allocation2] sm:$0xf] %v1016
    %v1019 = vld [vmem:[%s3] sm:$0xff]
    %v1020 = vld [vmem:[%s3 + $0x8] sm:$0xff]
    %v1021 = vld [vmem:[%s3 + $0x10] sm:$0xff]
    %v1022 = vld [vmem:[%s3 + $0x18] sm:$0xff]
    %v1023 = vld [vmem:[%s3 + $0x20] sm:$0xff]
    %v1024 = vld [vmem:[%s3 + $0x28] sm:$0xff]
    %v1025 = vld [vmem:[%s3 + $0x30] sm:$0xff]
    %v1026 = vld [vmem:[%s3 + $0x38] sm:$0xff]
    %v1027 = vld [vmem:[%s3 + $0x40] sm:$0xff]
    %v1028 = vld [vmem:[%s3 + $0x48] sm:$0xff]
    %v1029 = vld [vmem:[%s3 + $0x50] sm:$0xff]
    %v1030 = vld [vmem:[%s3 + $0x58] sm:$0xff]
    %v1031 = vld [vmem:[%s3 + $0x60] sm:$0xff]
    %v1032 = vld [vmem:[%s3 + $0x68] sm:$0xff]
    %v1033 = vld [vmem:[%s3 + $0x70] sm:$0xff]
    %v1034 = vld [vmem:[%s3 + $0x78] sm:$0xff]
    %v1035 = vld [vmem:[%s3 + $0x80] sm:$0xff]
    %v1036 = vld [vmem:[%s3 + $0x88] sm:$0xff]
    %v1037 = vld [vmem:[%s3 + $0x90] sm:$0xff]
    %v1038 = vld [vmem:[%s3 + $0x98] sm:$0xff]
    %v1039 = vld [vmem:[%s3 + $0xa0] sm:$0xff]
    %v1040 = vld [vmem:[%s3 + $0xa8] sm:$0xff]
    %v1041 = vld [vmem:[%s3 + $0xb0] sm:$0xff]
    %v1042 = vld [vmem:[%s3 + $0xb8] sm:$0xff]
    %v1043 = vld [vmem:[%s3 + $0xc0] sm:$0xff]
    %v1044 = vld [vmem:[%s3 + $0xc8] sm:$0xff]
    %v1045 = vld [vmem:[%s3 + $0xd0] sm:$0xff]
    %v1046 = vld [vmem:[%s3 + $0xd8] sm:$0xff]
    %v1047 = vld [vmem:[%s3 + $0xe0] sm:$0xff]
    %v1048 = vld [vmem:[%s3 + $0xe8] sm:$0xff]
    %v1049 = vld [vmem:[%s3 + $0xf0] sm:$0xff]
    %v1050 = vld [vmem:[%s3 + $0xf8] sm:$0xff]
    %v1051 = vld [vmem:[%s4] sm:$0x1]
    %v1053 = vlaneseq
    %v1054 = vshrl.u32 %v1053, 7
    %v1055 = vsub.s32 0, %v1054
    %v1056 = vrot.slane %v1051, %v1055
    %1058 = vmatprep.subr.mxu0 0.0
    %1059 = vmatpush1.msra.mxu0 %v1019
    %1060 = vmatprep.subr.mxu0 0.0
    %1061 = vmatpush1.msra.mxu0 %v1020
    %1062 = vmatprep.subr.mxu0 0.0
    %1063 = vmatpush1.msra.mxu0 %v1021
    %1064 = vmatprep.subr.mxu0 0.0
    %1065 = vmatpush1.msra.mxu0 %v1022
    %1066 = vmatprep.subr.mxu0 0.0
    %1067 = vmatpush1.msra.mxu0 %v1023
    %1068 = vmatprep.subr.mxu0 0.0
    %1069 = vmatpush1.msra.mxu0 %v1024
    %1070 = vmatprep.subr.mxu0 0.0
    %1071 = vmatpush1.msra.mxu0 %v1025
    %1072 = vmatprep.subr.mxu0 0.0
    %1073 = vmatpush1.msra.mxu0 %v1026
    %1074 = vmatprep.subr.mxu0 0.0
    %1075 = vmatpush1.msra.mxu0 %v1027
    %1076 = vmatprep.subr.mxu0 0.0
    %1077 = vmatpush1.msra.mxu0 %v1028
    %1078 = vmatprep.subr.mxu0 0.0
    %1079 = vmatpush1.msra.mxu0 %v1029
    %1080 = vmatprep.subr.mxu0 0.0
    %1081 = vmatpush1.msra.mxu0 %v1030
    %1082 = vmatprep.subr.mxu0 0.0
    %1083 = vmatpush1.msra.mxu0 %v1031
    %1084 = vmatprep.subr.mxu0 0.0
    %1085 = vmatpush1.msra.mxu0 %v1032
    %1086 = vmatprep.subr.mxu0 0.0
    %1087 = vmatpush1.msra.mxu0 %v1033
    %1088 = vmatprep.subr.mxu0 0.0
    %1089 = vmatpush1.msra.mxu0 %v1034
    %1090 = vmatprep.subr.mxu0 0.0
    %1091 = vmatpush1.msra.mxu0 %v1035
    %1092 = vmatprep.subr.mxu0 0.0
    %1093 = vmatpush1.msra.mxu0 %v1036
    %1094 = vmatprep.subr.mxu0 0.0
    %1095 = vmatpush1.msra.mxu0 %v1037
    %1096 = vmatprep.subr.mxu0 0.0
    %1097 = vmatpush1.msra.mxu0 %v1038
    %1098 = vmatprep.subr.mxu0 0.0
    %1099 = vmatpush1.msra.mxu0 %v1039
    %1100 = vmatprep.subr.mxu0 0.0
    %1101 = vmatpush1.msra.mxu0 %v1040
    %1102 = vmatprep.subr.mxu0 0.0
    %1103 = vmatpush1.msra.mxu0 %v1041
    %1104 = vmatprep.subr.mxu0 0.0
    %1105 = vmatpush1.msra.mxu0 %v1042
    %1106 = vmatprep.subr.mxu0 0.0
    %1107 = vmatpush1.msra.mxu0 %v1043
    %1108 = vmatprep.subr.mxu0 0.0
    %1109 = vmatpush1.msra.mxu0 %v1044
    %1110 = vmatprep.subr.mxu0 0.0
    %1111 = vmatpush1.msra.mxu0 %v1045
    %1112 = vmatprep.subr.mxu0 0.0
    %1113 = vmatpush1.msra.mxu0 %v1046
    %1114 = vmatprep.subr.mxu0 0.0
    %1115 = vmatpush1.msra.mxu0 %v1047
    %1116 = vmatprep.subr.mxu0 0.0
    %1117 = vmatpush1.msra.mxu0 %v1048
    %1118 = vmatprep.subr.mxu0 0.0
    %1119 = vmatpush1.msra.mxu0 %v1049
    %1120 = vmatprep.subr.mxu0 0.0
    %1121 = vmatpush1.msra.mxu0 %v1050
    %1122 = vmatprep.mubr.f32.mxu0 %v1006
    %1123 = vmatmul.mubr.f32.gmra.mrb[0].mxu0 %v1005
    %v1124 = vpop.f32.mrb[0].mxu0
    %v1125 = vadd.f32 %v1056, %v1124
    %v1126 = vpop.f32.mrb[0].mxu0
    %1127 = vdwg.mxu0
    %1128 = vst [vmem:[%s6] sm:$0x3] %v1125
    // Predicated region
    $region22: #{cnn_base_forward.7} parent=1 // pred_check
      _
    $region23: #{cnn_base_forward.7} parent=1 // pred_check_branch
      %1130 = sbr.rel (0) target = $region25
    $region24: #{cnn_base_forward.7} parent=1 // pred_region
      %s1132 = ssub.s32 64, 64
      %1133 = vsyncadd [#allocation3], %s1132
      %s1135 = sshll.u32 [#allocation2], 4
      %s1136 = int_to_ptr.vmem [resolvable:$true] %s1135
      %1138 = dma.vmem_to_hbm [thread:$0]  %s1136, 64, %s5, [#allocation3]
    $region25: #{cnn_base_forward.7} parent=1 // pred_fallthru
      _
    // Predicated region
    $region26: #{cnn_base_forward.7} parent=1 // pred_check
      _
    $region27: #{cnn_base_forward.7} parent=1 // pred_check_branch
      %1140 = sbr.rel (0) target = $region29
    $region28: #{cnn_base_forward.7} parent=1 // pred_region
      _
    $region29: #{cnn_base_forward.7} parent=1 // pred_fallthru
      _
    // Predicated region
    $region30: #{cnn_base_forward.7} parent=1 // pred_check
      _
    $region31: #{cnn_base_forward.7} parent=1 // pred_check_branch
      %1142 = sbr.rel (0) target = $region33
    $region32: #{cnn_base_forward.7} parent=1 // pred_region
      %1143 = dma.done [#allocation3], 64
    $region33: #{cnn_base_forward.7} parent=1 // pred_fallthru
      _
    // Predicated region
    $region34: #{cnn_base_forward.7} parent=1 // pred_check
      _
    $region35: #{cnn_base_forward.7} parent=1 // pred_check_branch
      %1145 = sbr.rel (0) target = $region37
    $region36: #{cnn_base_forward.7} parent=1 // pred_region
      _
    $region37: #{cnn_base_forward.7} parent=1 // pred_fallthru
      _
    %1146 = vsyncpa [#allocation3], 1

</llo_original>
